<compile_context>
chip_gen: v7x
topology: tpu7x:2x2x1
jax: 0.10.0
libtpu: 0.0.40
codegen_flags: <defaults>
</compile_context>

<pallas_src>
import jax
import jax.numpy as jnp
from jax import lax
from jax.experimental import pallas as pl
from jax.experimental.pallas import tpu as pltpu

# ---- small, self-consistent config (matches module structure, not its size) ----
VOCAB = 100
UNITS = 32            # lstm_units
EMB = 2 * UNITS       # embedding_dim; == 2*UNITS so both LSTM layers share input width
HID = 32              # hidden_dim
NCLS = 3              # num_classes
NPAD = 4 * UNITS      # lane-padded logits width (128)
LAYERS = 2            # lstm_layers
NDIR = 2              # bidirectional
B = 8                 # batch
T = 8                 # max sequence length
PAD = 0               # pad_index


def bilstm_classifier_kernel(x_ref, mask_ref, wih_ref, whh_ref, b_ref,
                             w1_ref, b1_ref, w2_ref, b2_ref,
                             out_ref, gxs0, gxs1, buf0, buf1):
    """x_ref:    (T, B, EMB)            time-major embedded input, f32
       mask_ref: (T, B, 2*UNITS)        f32 validity mask; cols 0:H gate the fwd
                                        update (time t=s), cols H:2H gate the bwd
                                        update (time t=T-1-s) at fused step s
       wih_ref:  (LAYERS, EMB, 8*UNITS) bf16, [Wih_fwd | Wih_bwd] on N, gate order [i,f,g,o]
       whh_ref:  (LAYERS, 2*UNITS, 8*UNITS) bf16, block-diag [[Whh_fwd,0],[0,Whh_bwd]]
       b_ref:    (LAYERS, 1, 8*UNITS)   f32, [b_fwd | b_bwd] (b_ih + b_hh)
       gxs0/1:   (T, B, 8*UNITS)        scratch: per-layer bulk input-gate slabs
       buf0/1:   (T, B, 2*UNITS)        scratch: per-layer [h_fwd | h_bwd] output slabs
    """
    H = UNITS
    G = 4 * H          # 128: per-direction gate width
    G2 = 2 * G         # 256: both directions

    # ---- loop-invariant constants (hoisted; JAX does not CSE broadcast_in_dim) ----
    lane = lax.broadcasted_iota(jnp.int32, (B, G2), 1)
    lane_in_dir = lane % G
    is_g = (lane_in_dir >= 2 * H) & (lane_in_dir < 3 * H)
    # Single-tanh activation trick: sigmoid(x) = 0.5*tanh(0.5x)+0.5, tanh(x) = 1*tanh(1*x)+0
    sc = jnp.where(is_g, 1.0, 0.5).astype(jnp.float32)     # tanh pre-scale per lane
    off = 1.0 - sc                                          # post-offset per lane
    zero_state = jnp.zeros((B, 2 * H), jnp.float32)

    for layer in range(LAYERS):
        x_seq = x_ref if layer == 0 else buf0       # layer input   (T, B, 2H)
        gx_buf = gxs0 if layer == 0 else gxs1       # input gates   (T, B, 2G)
        out_buf = buf0 if layer == 0 else buf1      # layer output  (T, B, 2H)

        # ---- bulk input projection: off the serial chain; one fused bf16 MXU pass
        # covering both directions, plus a single dense slab store (no scatter).
        x2d = x_seq[...].reshape(T * B, EMB).astype(jnp.bfloat16)        # (64, 64)
        gx = jnp.dot(x2d, wih_ref[layer],
                     preferred_element_type=jnp.float32) + b_ref[layer]  # (64, 256)
        gx_buf[...] = gx.reshape(T, B, G2)

        whh_bd = whh_ref[layer]                     # (2H, 2G) bf16, loaded once/layer
        # Note: whh_bd is loop-invariant; explicit MXU RHS latching via
        # pltpu.matmul_push_rhs/acc_lhs/pop could drop the per-step RHS push, but
        # is intentionally not used here for lowering portability across v5e/v6e/v7x.

        h = zero_state
        c = zero_state
        # Fused bidirectional scan: step s processes fwd time t=s and bwd time
        # t=T-1-s.  Static Python unroll -> all scratch indices below are static.
        for s in range(T):
            # Recurrent matmul: bf16 operands, f32 accumulation; block-diagonal
            # Whh emits [gates_fwd | gates_bwd] with no row-select needed.
            gates_hh = jnp.dot(h.astype(jnp.bfloat16), whh_bd,
                               preferred_element_type=jnp.float32)       # (B, 2G)
            # Step-aligned input gates: fwd half from t=s, bwd half from t=T-1-s.
            gx_s = jnp.concatenate(
                [gx_buf[s, :, 0:G], gx_buf[T - 1 - s, :, G:G2]], axis=1)
            gates = gates_hh + gx_s
            # Single EUP pass over the full (B, 2G) gate tile.
            t_act = jnp.tanh(sc * gates)
            act = sc * t_act + off                                       # (B, 2G)
            i = jnp.concatenate([act[:, 0 * H:1 * H], act[:, G + 0 * H:G + 1 * H]], axis=1)
            f = jnp.concatenate([act[:, 1 * H:2 * H], act[:, G + 1 * H:G + 2 * H]], axis=1)
            g = jnp.concatenate([act[:, 2 * H:3 * H], act[:, G + 2 * H:G + 3 * H]], axis=1)
            o = jnp.concatenate([act[:, 3 * H:4 * H], act[:, G + 3 * H:G + 4 * H]], axis=1)
            c_new = f * c + i * g                                        # (B, 2H) f32
            h_new = o * jnp.tanh(c_new)
            m = mask_ref[s] != 0.0                                       # (B, 2H) bool
            h = jnp.where(m, h_new, h)       # packed-seq: state frozen when invalid
            c = jnp.where(m, c_new, c)
            out_h = jnp.where(m, h_new, zero_state)   # pad_packed zero-fills invalid t
            # Write straight into the next layer's input slab (no end-of-layer concat).
            out_buf[s, :, 0:H] = out_h[:, 0:H]
            out_buf[T - 1 - s, :, H:2 * H] = out_h[:, H:2 * H]

    # out = output_unpacked[:, -1, :]  (last padded position; zero for shorter
    # sequences — faithful to the reference module's indexing)
    out_last = buf1[T - 1]                                   # (B, 2H)
    rel = jnp.maximum(out_last, 0.0)                         # ReLU
    dense1 = jnp.dot(rel, w1_ref[...],
                     preferred_element_type=jnp.float32) + b1_ref[...]
    # TODO(synk): nn.Dropout is identity in eval mode; training-mode dropout not modeled.
    logits = jnp.dot(dense1, w2_ref[...],
                     preferred_element_type=jnp.float32) + b2_ref[...]
    out_ref[...] = logits                                    # (B, 128) lane-dense store


@jax.jit
def bilstm_forward(x_tm, mask, wih_cat, whh_bd, b_cat, w1, b1, w2p, b2p):
    out = pl.pallas_call(
        bilstm_classifier_kernel,
        out_shape=jax.ShapeDtypeStruct((B, NPAD), jnp.float32),
        in_specs=[pl.BlockSpec(memory_space=pltpu.MemorySpace.VMEM)] * 9,
        out_specs=pl.BlockSpec(memory_space=pltpu.MemorySpace.VMEM),
        scratch_shapes=[
            pltpu.VMEM((T, B, 8 * UNITS), jnp.float32),   # gxs0 (layer-0 input gates)
            pltpu.VMEM((T, B, 8 * UNITS), jnp.float32),   # gxs1 (layer-1 input gates)
            pltpu.VMEM((T, B, 2 * UNITS), jnp.float32),   # buf0 (layer-0 output)
            pltpu.VMEM((T, B, 2 * UNITS), jnp.float32),   # buf1 (layer-1 output)
        ],
    )(x_tm, mask, wih_cat, whh_bd, b_cat, w1, b1, w2p, b2p)
    return out[:, :NCLS]


def init_params(key):
    ks = jax.random.split(key, 9)
    emb_table = 0.1 * jax.random.normal(ks[0], (VOCAB, EMB), jnp.float32)
    emb_table = emb_table.at[PAD].set(0.0)                    # padding_idx row = 0

    k = 1.0 / jnp.sqrt(jnp.float32(UNITS))
    def u(kk, shape, lim):
        return jax.random.uniform(kk, shape, jnp.float32, -lim, lim)

    # layer-0 input width = EMB, layer-1 input width = 2*UNITS; equal by construction.
    wih = u(ks[1], (LAYERS, NDIR, EMB, 4 * UNITS), k)
    whh = u(ks[2], (LAYERS, NDIR, UNITS, 4 * UNITS), k)
    b_ih = u(ks[3], (LAYERS, NDIR, 4 * UNITS), k)
    b_hh = u(ks[4], (LAYERS, NDIR, 4 * UNITS), k)
    bsum = b_ih + b_hh                                        # PyTorch adds both biases

    k1 = 1.0 / jnp.sqrt(jnp.float32(2 * UNITS))
    w1 = u(ks[5], (2 * UNITS, HID), k1)
    b1 = u(ks[6], (1, HID), k1)
    k2 = 1.0 / jnp.sqrt(jnp.float32(HID))
    w2 = u(ks[7], (HID, NCLS), k2)
    b2 = u(ks[8], (1, NCLS), k2)
    return emb_table, wih, whh, bsum, w1, b1, w2, b2


def pack_kernel_params(wih, whh, bsum, w2, b2):
    """Repack per-direction LSTM weights into the kernel's fused/bf16 layouts."""
    G = 4 * UNITS
    # Fused input projection: [Wih_fwd | Wih_bwd] on N (EMB, 256), bf16 MXU operands.
    wih_cat = jnp.concatenate([wih[:, 0], wih[:, 1]], axis=-1).astype(jnp.bfloat16)
    # Block-diagonal recurrent weights (2H, 256): gates come out as [fwd | bwd].
    whh_bd = jnp.zeros((LAYERS, 2 * UNITS, 2 * G), jnp.float32)
    whh_bd = whh_bd.at[:, :UNITS, :G].set(whh[:, 0])
    whh_bd = whh_bd.at[:, UNITS:, G:].set(whh[:, 1])
    whh_bd = whh_bd.astype(jnp.bfloat16)
    b_cat = jnp.concatenate([bsum[:, 0], bsum[:, 1]], axis=-1)[:, None, :]  # (L,1,256)
    # Pad fc2 to 128 output lanes for a dense final store; wrapper slices to NCLS.
    w2p = jnp.zeros((HID, NPAD), jnp.float32).at[:, :NCLS].set(w2)
    b2p = jnp.zeros((1, NPAD), jnp.float32).at[:, :NCLS].set(b2)
    return wih_cat, whh_bd, b_cat, w2p, b2p


def reference_forward(x_tm, lengths, wih, whh, bsum, w1, b1, w2, b2):
    """Pure-JAX f32 reference of the module forward (packed-seq semantics via masks)."""
    valid = jnp.arange(T)[:, None] < lengths[None, :]          # (T, B)
    x = x_tm                                                   # (T, B, EMB)
    for layer in range(LAYERS):
        outs = []
        for d in range(NDIR):
            h = jnp.zeros((B, UNITS), jnp.float32)
            c = jnp.zeros((B, UNITS), jnp.float32)
            hs = [None] * T
            order = range(T) if d == 0 else range(T - 1, -1, -1)
            for t in order:
                g = x[t] @ wih[layer, d] + h @ whh[layer, d] + bsum[layer, d]
                ig = jax.nn.sigmoid(g[:, 0:UNITS])
                fg = jax.nn.sigmoid(g[:, UNITS:2 * UNITS])
                gg = jnp.tanh(g[:, 2 * UNITS:3 * UNITS])
                og = jax.nn.sigmoid(g[:, 3 * UNITS:4 * UNITS])
                c_new = fg * c + ig * gg
                h_new = og * jnp.tanh(c_new)
                m = valid[t][:, None]
                h = jnp.where(m, h_new, h)
                c = jnp.where(m, c_new, c)
                hs[t] = jnp.where(m, h_new, jnp.zeros_like(h_new))
            outs.append(jnp.stack(hs, axis=0))                 # (T, B, H)
        x = jnp.concatenate(outs, axis=-1)                     # (T, B, 2H)
    out_last = x[T - 1]                                        # (B, 2H)
    rel = jnp.maximum(out_last, 0.0)
    dense1 = rel @ w1 + b1
    return dense1 @ w2 + b2                                    # (B, NCLS)


if __name__ == "__main__":
    key = jax.random.PRNGKey(0)
    emb_table, wih, whh, bsum, w1, b1, w2, b2 = init_params(key)
    wih_cat, whh_bd, b_cat, w2p, b2p = pack_kernel_params(wih, whh, bsum, w2, b2)

    # Synthetic token ids and lengths (sorted descending, as pack_padded_sequence requires).
    ktok = jax.random.PRNGKey(1)
    text = jax.random.randint(ktok, (B, T), 1, VOCAB)          # (B, T) int ids
    text_lengths = jnp.array([T, T, T, T - 1, T - 2, T - 3, T - 4, T - 5], jnp.int32)

    pos = jnp.arange(T)[None, :]                               # (1, T)
    valid = pos < text_lengths[:, None]                        # (B, T) bool
    text = jnp.where(valid, text, PAD)                         # pad invalid positions

    # Glue: embedding gather + layout shuffle to time-major.
    embedded = jnp.take(emb_table, text, axis=0)               # (B, T, EMB)
    x_tm = jnp.transpose(embedded, (1, 0, 2)).astype(jnp.float32)   # (T, B, EMB)

    # Step-aligned packed-sequence mask for the fused bidirectional scan:
    # cols 0:H gate fwd (time t=s), cols H:2H gate bwd (time t=T-1-s).
    m_tb = valid.T.astype(jnp.float32)                         # (T, B)
    mask = jnp.concatenate(
        [jnp.broadcast_to(m_tb[:, :, None], (T, B, UNITS)),
         jnp.broadcast_to(m_tb[::-1][:, :, None], (T, B, UNITS))], axis=2)

    preds = bilstm_forward(x_tm, mask, wih_cat, whh_bd, b_cat, w1, b1, w2p, b2p)
    jax.block_until_ready(preds)
    assert preds.shape == (B, NCLS) and preds.dtype == jnp.float32

    # Validate bf16-operand / single-tanh kernel against the f32 pure-JAX reference.
    ref = reference_forward(x_tm, text_lengths, wih, whh, bsum, w1, b1, w2, b2)
    err = float(jnp.max(jnp.abs(preds - ref)))
    assert err < 5e-2, f"kernel vs reference mismatch: max abs err = {err}"

    print("KERNEL_OK")
</pallas_src>

<mosaic_0001>
module attributes {stable_mosaic.version = 11 : i64} {
  func.func @bilstm_classifier_kernel(%arg0: memref<8x8x64xf32, #tpu.memory_space<vmem>>, %arg1: memref<8x8x64xf32, #tpu.memory_space<vmem>>, %arg2: memref<2x64x256xbf16, #tpu.memory_space<vmem>>, %arg3: memref<2x64x256xbf16, #tpu.memory_space<vmem>>, %arg4: memref<2x1x256xf32, #tpu.memory_space<vmem>>, %arg5: memref<64x32xf32, #tpu.memory_space<vmem>>, %arg6: memref<1x32xf32, #tpu.memory_space<vmem>>, %arg7: memref<32x128xf32, #tpu.memory_space<vmem>>, %arg8: memref<1x128xf32, #tpu.memory_space<vmem>>, %arg9: memref<8x128xf32, #tpu.memory_space<vmem>>, %arg10: memref<8x8x256xf32, #tpu.memory_space<vmem>>, %arg11: memref<8x8x256xf32, #tpu.memory_space<vmem>>, %arg12: memref<8x8x64xf32, #tpu.memory_space<vmem>>, %arg13: memref<8x8x64xf32, #tpu.memory_space<vmem>>) attributes {dimension_semantics = [], scalar_prefetch = 0 : i64, scratch_operands = 4 : i64, tpu.core_type = #tpu.core_type<tc>} {
    %0 = tpu.iota {dimensions = array<i32: 1>} : vector<8x256xi32>
    %c128_i32 = arith.constant 128 : i32
    %c0_i32 = arith.constant 0 : i32
    %1 = arith.cmpi eq, %c128_i32, %c0_i32 : i32
    %c1_i32 = arith.constant 1 : i32
    %2 = arith.select %1, %c1_i32, %c128_i32 : i32
    %3 = vector.broadcast %2 : i32 to vector<8x256xi32>
    %4 = arith.remsi %0, %3 : vector<8x256xi32>
    %c0_i32_0 = arith.constant 0 : i32
    %5 = vector.broadcast %c0_i32_0 : i32 to vector<8x256xi32>
    %6 = arith.cmpi ne, %4, %5 : vector<8x256xi32>
    %c0_i32_1 = arith.constant 0 : i32
    %7 = vector.broadcast %c0_i32_1 : i32 to vector<8x256xi32>
    %8 = arith.cmpi slt, %4, %7 : vector<8x256xi32>
    %c0_i32_2 = arith.constant 0 : i32
    %9 = arith.cmpi slt, %2, %c0_i32_2 : i32
    %10 = vector.broadcast %9 : i1 to vector<8x256xi1>
    %11 = vector.broadcast %10 : vector<8x256xi1> to vector<8x256xi1>
    %12 = arith.xori %8, %11 : vector<8x256xi1>
    %13 = arith.andi %12, %6 : vector<8x256xi1>
    %14 = vector.broadcast %2 : i32 to vector<8x256xi32>
    %15 = arith.addi %4, %14 : vector<8x256xi32>
    %16 = arith.select %13, %15, %4 : vector<8x256xi1>, vector<8x256xi32>
    %c64_i32 = arith.constant 64 : i32
    %17 = vector.broadcast %c64_i32 : i32 to vector<8x256xi32>
    %18 = arith.cmpi sge, %16, %17 : vector<8x256xi32>
    %c96_i32 = arith.constant 96 : i32
    %19 = vector.broadcast %c96_i32 : i32 to vector<8x256xi32>
    %20 = arith.cmpi slt, %16, %19 : vector<8x256xi32>
    %21 = arith.andi %18, %20 : vector<8x256xi1>
    %cst = arith.constant 1.000000e+00 : f32
    %cst_3 = arith.constant 5.000000e-01 : f32
    %22 = vector.broadcast %cst : f32 to vector<8x256xf32>
    %23 = vector.broadcast %cst_3 : f32 to vector<8x256xf32>
    %24 = arith.select %21, %22, %23 : vector<8x256xi1>, vector<8x256xf32>
    %cst_4 = arith.constant 1.000000e+00 : f32
    %25 = vector.broadcast %cst_4 : f32 to vector<8x256xf32>
    %26 = arith.subf %25, %24 : vector<8x256xf32>
    %cst_5 = arith.constant 0.000000e+00 : f32
    %27 = vector.broadcast %cst_5 : f32 to vector<8x64xf32>
    %c0 = arith.constant 0 : index
    %c0_6 = arith.constant 0 : index
    %c0_7 = arith.constant 0 : index
    %28 = vector.load %arg0[%c0, %c0_6, %c0_7] : memref<8x8x64xf32, #tpu.memory_space<vmem>>, vector<8x8x64xf32>
    %29 = vector.shape_cast %28 : vector<8x8x64xf32> to vector<64x64xf32>
    %30 = arith.truncf %29 : vector<64x64xf32> to vector<64x64xbf16>
    %c0_8 = arith.constant 0 : index
    %c0_9 = arith.constant 0 : index
    %c0_10 = arith.constant 0 : index
    %31 = vector.load %arg2[%c0_8, %c0_9, %c0_10] : memref<2x64x256xbf16, #tpu.memory_space<vmem>>, vector<1x64x256xbf16>
    %32 = vector.shape_cast %31 : vector<1x64x256xbf16> to vector<64x256xbf16>
    %cst_11 = arith.constant dense<0.000000e+00> : vector<64x256xf32>
    %33 = tpu.matmul %30, %32, %cst_11 {dimension_numbers = #tpu.dot_dimension_numbers<[1], [0], [0], [1], [0, 0, 1, 1], [], []>} : vector<64x64xbf16>, vector<64x256xbf16>, vector<64x256xf32> -> vector<64x256xf32>
    %c0_12 = arith.constant 0 : index
    %c0_13 = arith.constant 0 : index
    %c0_14 = arith.constant 0 : index
    %34 = vector.load %arg4[%c0_12, %c0_13, %c0_14] : memref<2x1x256xf32, #tpu.memory_space<vmem>>, vector<1x1x256xf32>
    %35 = vector.shape_cast %34 : vector<1x1x256xf32> to vector<1x256xf32>
    %36 = vector.broadcast %35 : vector<1x256xf32> to vector<64x256xf32>
    %37 = arith.addf %33, %36 : vector<64x256xf32>
    %38 = vector.shape_cast %37 : vector<64x256xf32> to vector<8x8x256xf32>
    %c0_15 = arith.constant 0 : index
    %c0_16 = arith.constant 0 : index
    %c0_17 = arith.constant 0 : index
    %39 = vector.load %arg10[%c0_15, %c0_16, %c0_17] : memref<8x8x256xf32, #tpu.memory_space<vmem>>, vector<8x8x256xf32>
    tpu.vector_store %arg10[%c0_15, %c0_16, %c0_17], %38 {strides = array<i32>} : memref<8x8x256xf32, #tpu.memory_space<vmem>>, vector<8x8x256xf32>,
    %c0_18 = arith.constant 0 : index
    %c0_19 = arith.constant 0 : index
    %c0_20 = arith.constant 0 : index
    %40 = vector.load %arg3[%c0_18, %c0_19, %c0_20] : memref<2x64x256xbf16, #tpu.memory_space<vmem>>, vector<1x64x256xbf16>
    %41 = vector.shape_cast %40 : vector<1x64x256xbf16> to vector<64x256xbf16>
    %42 = arith.truncf %27 : vector<8x64xf32> to vector<8x64xbf16>
    %cst_21 = arith.constant dense<0.000000e+00> : vector<8x256xf32>
    %43 = tpu.matmul %42, %41, %cst_21 {dimension_numbers = #tpu.dot_dimension_numbers<[1], [0], [0], [1], [0, 0, 1, 1], [], []>} : vector<8x64xbf16>, vector<64x256xbf16>, vector<8x256xf32> -> vector<8x256xf32>
    %c0_22 = arith.constant 0 : index
    %c0_23 = arith.constant 0 : index
    %c0_24 = arith.constant 0 : index
    %44 = vector.load %arg10[%c0_22, %c0_23, %c0_24] : memref<8x8x256xf32, #tpu.memory_space<vmem>>, vector<1x8x128xf32>
    %45 = vector.shape_cast %44 : vector<1x8x128xf32> to vector<8x128xf32>
    %c7 = arith.constant 7 : index
    %c0_25 = arith.constant 0 : index
    %c128 = arith.constant 128 : index
    %46 = vector.load %arg10[%c7, %c0_25, %c128] : memref<8x8x256xf32, #tpu.memory_space<vmem>>, vector<1x8x128xf32>
    %47 = vector.shape_cast %46 : vector<1x8x128xf32> to vector<8x128xf32>
    %48 = tpu.concatenate %45, %47 in 1 : vector<8x128xf32>, vector<8x128xf32> -> vector<8x256xf32>
    %49 = arith.addf %43, %48 : vector<8x256xf32>
    %50 = arith.mulf %24, %49 : vector<8x256xf32>
    %51 = math.tanh %50 : vector<8x256xf32>
    %52 = arith.mulf %24, %51 : vector<8x256xf32>
    %53 = arith.addf %52, %26 : vector<8x256xf32>
    %54 = vector.extract_strided_slice %53 {offsets = [0, 0], sizes = [8, 32], strides = [1, 1]} : vector<8x256xf32> to vector<8x32xf32>
    %55 = vector.extract_strided_slice %53 {offsets = [0, 128], sizes = [8, 32], strides = [1, 1]} : vector<8x256xf32> to vector<8x32xf32>
    %56 = tpu.concatenate %54, %55 in 1 : vector<8x32xf32>, vector<8x32xf32> -> vector<8x64xf32>
    %57 = vector.extract_strided_slice %53 {offsets = [0, 32], sizes = [8, 32], strides = [1, 1]} : vector<8x256xf32> to vector<8x32xf32>
    %58 = vector.extract_strided_slice %53 {offsets = [0, 160], sizes = [8, 32], strides = [1, 1]} : vector<8x256xf32> to vector<8x32xf32>
    %59 = tpu.concatenate %57, %58 in 1 : vector<8x32xf32>, vector<8x32xf32> -> vector<8x64xf32>
    %60 = vector.extract_strided_slice %53 {offsets = [0, 64], sizes = [8, 32], strides = [1, 1]} : vector<8x256xf32> to vector<8x32xf32>
    %61 = vector.extract_strided_slice %53 {offsets = [0, 192], sizes = [8, 32], strides = [1, 1]} : vector<8x256xf32> to vector<8x32xf32>
    %62 = tpu.concatenate %60, %61 in 1 : vector<8x32xf32>, vector<8x32xf32> -> vector<8x64xf32>
    %63 = vector.extract_strided_slice %53 {offsets = [0, 96], sizes = [8, 32], strides = [1, 1]} : vector<8x256xf32> to vector<8x32xf32>
    %64 = vector.extract_strided_slice %53 {offsets = [0, 224], sizes = [8, 32], strides = [1, 1]} : vector<8x256xf32> to vector<8x32xf32>
    %65 = tpu.concatenate %63, %64 in 1 : vector<8x32xf32>, vector<8x32xf32> -> vector<8x64xf32>
    %66 = arith.mulf %59, %27 : vector<8x64xf32>
    %67 = arith.mulf %56, %62 : vector<8x64xf32>
    %68 = arith.addf %66, %67 : vector<8x64xf32>
    %69 = math.tanh %68 : vector<8x64xf32>
    %70 = arith.mulf %65, %69 : vector<8x64xf32>
    %c0_26 = arith.constant 0 : index
    %c0_27 = arith.constant 0 : index
    %c0_28 = arith.constant 0 : index
    %71 = vector.load %arg1[%c0_26, %c0_27, %c0_28] : memref<8x8x64xf32, #tpu.memory_space<vmem>>, vector<1x8x64xf32>
    %72 = vector.shape_cast %71 : vector<1x8x64xf32> to vector<8x64xf32>
    %cst_29 = arith.constant 0.000000e+00 : f32
    %73 = vector.broadcast %cst_29 : f32 to vector<8x64xf32>
    %74 = arith.cmpf one, %72, %73 : vector<8x64xf32>
    %75 = arith.select %74, %70, %27 : vector<8x64xi1>, vector<8x64xf32>
    %76 = arith.select %74, %68, %27 : vector<8x64xi1>, vector<8x64xf32>
    %77 = arith.select %74, %70, %27 : vector<8x64xi1>, vector<8x64xf32>
    %78 = vector.extract_strided_slice %77 {offsets = [0, 0], sizes = [8, 32], strides = [1, 1]} : vector<8x64xf32> to vector<8x32xf32>
    %c0_30 = arith.constant 0 : index
    %c0_31 = arith.constant 0 : index
    %c0_32 = arith.constant 0 : index
    %79 = vector.load %arg12[%c0_30, %c0_31, %c0_32] : memref<8x8x64xf32, #tpu.memory_space<vmem>>, vector<1x8x32xf32>
    %80 = vector.shape_cast %79 : vector<1x8x32xf32> to vector<8x32xf32>
    %81 = vector.shape_cast %78 : vector<8x32xf32> to vector<1x8x32xf32>
    tpu.vector_store %arg12[%c0_30, %c0_31, %c0_32], %81 {strides = array<i32>} : memref<8x8x64xf32, #tpu.memory_space<vmem>>, vector<1x8x32xf32>,
    %82 = vector.extract_strided_slice %77 {offsets = [0, 32], sizes = [8, 32], strides = [1, 1]} : vector<8x64xf32> to vector<8x32xf32>
    %c7_33 = arith.constant 7 : index
    %c0_34 = arith.constant 0 : index
    %c32 = arith.constant 32 : index
    %83 = vector.load %arg12[%c7_33, %c0_34, %c32] : memref<8x8x64xf32, #tpu.memory_space<vmem>>, vector<1x8x32xf32>
    %84 = vector.shape_cast %83 : vector<1x8x32xf32> to vector<8x32xf32>
    %85 = vector.shape_cast %82 : vector<8x32xf32> to vector<1x8x32xf32>
    tpu.vector_store %arg12[%c7_33, %c0_34, %c32], %85 {strides = array<i32>} : memref<8x8x64xf32, #tpu.memory_space<vmem>>, vector<1x8x32xf32>,
    %86 = arith.truncf %75 : vector<8x64xf32> to vector<8x64xbf16>
    %cst_35 = arith.constant dense<0.000000e+00> : vector<8x256xf32>
    %87 = tpu.matmul %86, %41, %cst_35 {dimension_numbers = #tpu.dot_dimension_numbers<[1], [0], [0], [1], [0, 0, 1, 1], [], []>} : vector<8x64xbf16>, vector<64x256xbf16>, vector<8x256xf32> -> vector<8x256xf32>
    %c1 = arith.constant 1 : index
    %c0_36 = arith.constant 0 : index
    %c0_37 = arith.constant 0 : index
    %88 = vector.load %arg10[%c1, %c0_36, %c0_37] : memref<8x8x256xf32, #tpu.memory_space<vmem>>, vector<1x8x128xf32>
    %89 = vector.shape_cast %88 : vector<1x8x128xf32> to vector<8x128xf32>
    %c6 = arith.constant 6 : index
    %c0_38 = arith.constant 0 : index
    %c128_39 = arith.constant 128 : index
    %90 = vector.load %arg10[%c6, %c0_38, %c128_39] : memref<8x8x256xf32, #tpu.memory_space<vmem>>, vector<1x8x128xf32>
    %91 = vector.shape_cast %90 : vector<1x8x128xf32> to vector<8x128xf32>
    %92 = tpu.concatenate %89, %91 in 1 : vector<8x128xf32>, vector<8x128xf32> -> vector<8x256xf32>
    %93 = arith.addf %87, %92 : vector<8x256xf32>
    %94 = arith.mulf %24, %93 : vector<8x256xf32>
    %95 = math.tanh %94 : vector<8x256xf32>
    %96 = arith.mulf %24, %95 : vector<8x256xf32>
    %97 = arith.addf %96, %26 : vector<8x256xf32>
    %98 = vector.extract_strided_slice %97 {offsets = [0, 0], sizes = [8, 32], strides = [1, 1]} : vector<8x256xf32> to vector<8x32xf32>
    %99 = vector.extract_strided_slice %97 {offsets = [0, 128], sizes = [8, 32], strides = [1, 1]} : vector<8x256xf32> to vector<8x32xf32>
    %100 = tpu.concatenate %98, %99 in 1 : vector<8x32xf32>, vector<8x32xf32> -> vector<8x64xf32>
    %101 = vector.extract_strided_slice %97 {offsets = [0, 32], sizes = [8, 32], strides = [1, 1]} : vector<8x256xf32> to vector<8x32xf32>
    %102 = vector.extract_strided_slice %97 {offsets = [0, 160], sizes = [8, 32], strides = [1, 1]} : vector<8x256xf32> to vector<8x32xf32>
    %103 = tpu.concatenate %101, %102 in 1 : vector<8x32xf32>, vector<8x32xf32> -> vector<8x64xf32>
    %104 = vector.extract_strided_slice %97 {offsets = [0, 64], sizes = [8, 32], strides = [1, 1]} : vector<8x256xf32> to vector<8x32xf32>
    %105 = vector.extract_strided_slice %97 {offsets = [0, 192], sizes = [8, 32], strides = [1, 1]} : vector<8x256xf32> to vector<8x32xf32>
    %106 = tpu.concatenate %104, %105 in 1 : vector<8x32xf32>, vector<8x32xf32> -> vector<8x64xf32>
    %107 = vector.extract_strided_slice %97 {offsets = [0, 96], sizes = [8, 32], strides = [1, 1]} : vector<8x256xf32> to vector<8x32xf32>
    %108 = vector.extract_strided_slice %97 {offsets = [0, 224], sizes = [8, 32], strides = [1, 1]} : vector<8x256xf32> to vector<8x32xf32>
    %109 = tpu.concatenate %107, %108 in 1 : vector<8x32xf32>, vector<8x32xf32> -> vector<8x64xf32>
    %110 = arith.mulf %103, %76 : vector<8x64xf32>
    %111 = arith.mulf %100, %106 : vector<8x64xf32>
    %112 = arith.addf %110, %111 : vector<8x64xf32>
    %113 = math.tanh %112 : vector<8x64xf32>
    %114 = arith.mulf %109, %113 : vector<8x64xf32>
    %c1_40 = arith.constant 1 : index
    %c0_41 = arith.constant 0 : index
    %c0_42 = arith.constant 0 : index
    %115 = vector.load %arg1[%c1_40, %c0_41, %c0_42] : memref<8x8x64xf32, #tpu.memory_space<vmem>>, vector<1x8x64xf32>
    %116 = vector.shape_cast %115 : vector<1x8x64xf32> to vector<8x64xf32>
    %cst_43 = arith.constant 0.000000e+00 : f32
    %117 = vector.broadcast %cst_43 : f32 to vector<8x64xf32>
    %118 = arith.cmpf one, %116, %117 : vector<8x64xf32>
    %119 = arith.select %118, %114, %75 : vector<8x64xi1>, vector<8x64xf32>
    %120 = arith.select %118, %112, %76 : vector<8x64xi1>, vector<8x64xf32>
    %121 = arith.select %118, %114, %27 : vector<8x64xi1>, vector<8x64xf32>
    %122 = vector.extract_strided_slice %121 {offsets = [0, 0], sizes = [8, 32], strides = [1, 1]} : vector<8x64xf32> to vector<8x32xf32>
    %c1_44 = arith.constant 1 : index
    %c0_45 = arith.constant 0 : index
    %c0_46 = arith.constant 0 : index
    %123 = vector.load %arg12[%c1_44, %c0_45, %c0_46] : memref<8x8x64xf32, #tpu.memory_space<vmem>>, vector<1x8x32xf32>
    %124 = vector.shape_cast %123 : vector<1x8x32xf32> to vector<8x32xf32>
    %125 = vector.shape_cast %122 : vector<8x32xf32> to vector<1x8x32xf32>
    tpu.vector_store %arg12[%c1_44, %c0_45, %c0_46], %125 {strides = array<i32>} : memref<8x8x64xf32, #tpu.memory_space<vmem>>, vector<1x8x32xf32>,
    %126 = vector.extract_strided_slice %121 {offsets = [0, 32], sizes = [8, 32], strides = [1, 1]} : vector<8x64xf32> to vector<8x32xf32>
    %c6_47 = arith.constant 6 : index
    %c0_48 = arith.constant 0 : index
    %c32_49 = arith.constant 32 : index
    %127 = vector.load %arg12[%c6_47, %c0_48, %c32_49] : memref<8x8x64xf32, #tpu.memory_space<vmem>>, vector<1x8x32xf32>
    %128 = vector.shape_cast %127 : vector<1x8x32xf32> to vector<8x32xf32>
    %129 = vector.shape_cast %126 : vector<8x32xf32> to vector<1x8x32xf32>
    tpu.vector_store %arg12[%c6_47, %c0_48, %c32_49], %129 {strides = array<i32>} : memref<8x8x64xf32, #tpu.memory_space<vmem>>, vector<1x8x32xf32>,
    %130 = arith.truncf %119 : vector<8x64xf32> to vector<8x64xbf16>
    %cst_50 = arith.constant dense<0.000000e+00> : vector<8x256xf32>
    %131 = tpu.matmul %130, %41, %cst_50 {dimension_numbers = #tpu.dot_dimension_numbers<[1], [0], [0], [1], [0, 0, 1, 1], [], []>} : vector<8x64xbf16>, vector<64x256xbf16>, vector<8x256xf32> -> vector<8x256xf32>
    %c2 = arith.constant 2 : index
    %c0_51 = arith.constant 0 : index
    %c0_52 = arith.constant 0 : index
    %132 = vector.load %arg10[%c2, %c0_51, %c0_52] : memref<8x8x256xf32, #tpu.memory_space<vmem>>, vector<1x8x128xf32>
    %133 = vector.shape_cast %132 : vector<1x8x128xf32> to vector<8x128xf32>
    %c5 = arith.constant 5 : index
    %c0_53 = arith.constant 0 : index
    %c128_54 = arith.constant 128 : index
    %134 = vector.load %arg10[%c5, %c0_53, %c128_54] : memref<8x8x256xf32, #tpu.memory_space<vmem>>, vector<1x8x128xf32>
    %135 = vector.shape_cast %134 : vector<1x8x128xf32> to vector<8x128xf32>
    %136 = tpu.concatenate %133, %135 in 1 : vector<8x128xf32>, vector<8x128xf32> -> vector<8x256xf32>
    %137 = arith.addf %131, %136 : vector<8x256xf32>
    %138 = arith.mulf %24, %137 : vector<8x256xf32>
    %139 = math.tanh %138 : vector<8x256xf32>
    %140 = arith.mulf %24, %139 : vector<8x256xf32>
    %141 = arith.addf %140, %26 : vector<8x256xf32>
    %142 = vector.extract_strided_slice %141 {offsets = [0, 0], sizes = [8, 32], strides = [1, 1]} : vector<8x256xf32> to vector<8x32xf32>
    %143 = vector.extract_strided_slice %141 {offsets = [0, 128], sizes = [8, 32], strides = [1, 1]} : vector<8x256xf32> to vector<8x32xf32>
    %144 = tpu.concatenate %142, %143 in 1 : vector<8x32xf32>, vector<8x32xf32> -> vector<8x64xf32>
    %145 = vector.extract_strided_slice %141 {offsets = [0, 32], sizes = [8, 32], strides = [1, 1]} : vector<8x256xf32> to vector<8x32xf32>
    %146 = vector.extract_strided_slice %141 {offsets = [0, 160], sizes = [8, 32], strides = [1, 1]} : vector<8x256xf32> to vector<8x32xf32>
    %147 = tpu.concatenate %145, %146 in 1 : vector<8x32xf32>, vector<8x32xf32> -> vector<8x64xf32>
    %148 = vector.extract_strided_slice %141 {offsets = [0, 64], sizes = [8, 32], strides = [1, 1]} : vector<8x256xf32> to vector<8x32xf32>
    %149 = vector.extract_strided_slice %141 {offsets = [0, 192], sizes = [8, 32], strides = [1, 1]} : vector<8x256xf32> to vector<8x32xf32>
    %150 = tpu.concatenate %148, %149 in 1 : vector<8x32xf32>, vector<8x32xf32> -> vector<8x64xf32>
    %151 = vector.extract_strided_slice %141 {offsets = [0, 96], sizes = [8, 32], strides = [1, 1]} : vector<8x256xf32> to vector<8x32xf32>
    %152 = vector.extract_strided_slice %141 {offsets = [0, 224], sizes = [8, 32], strides = [1, 1]} : vector<8x256xf32> to vector<8x32xf32>
    %153 = tpu.concatenate %151, %152 in 1 : vector<8x32xf32>, vector<8x32xf32> -> vector<8x64xf32>
    %154 = arith.mulf %147, %120 : vector<8x64xf32>
    %155 = arith.mulf %144, %150 : vector<8x64xf32>
    %156 = arith.addf %154, %155 : vector<8x64xf32>
    %157 = math.tanh %156 : vector<8x64xf32>
    %158 = arith.mulf %153, %157 : vector<8x64xf32>
    %c2_55 = arith.constant 2 : index
    %c0_56 = arith.constant 0 : index
    %c0_57 = arith.constant 0 : index
    %159 = vector.load %arg1[%c2_55, %c0_56, %c0_57] : memref<8x8x64xf32, #tpu.memory_space<vmem>>, vector<1x8x64xf32>
    %160 = vector.shape_cast %159 : vector<1x8x64xf32> to vector<8x64xf32>
    %cst_58 = arith.constant 0.000000e+00 : f32
    %161 = vector.broadcast %cst_58 : f32 to vector<8x64xf32>
    %162 = arith.cmpf one, %160, %161 : vector<8x64xf32>
    %163 = arith.select %162, %158, %119 : vector<8x64xi1>, vector<8x64xf32>
    %164 = arith.select %162, %156, %120 : vector<8x64xi1>, vector<8x64xf32>
    %165 = arith.select %162, %158, %27 : vector<8x64xi1>, vector<8x64xf32>
    %166 = vector.extract_strided_slice %165 {offsets = [0, 0], sizes = [8, 32], strides = [1, 1]} : vector<8x64xf32> to vector<8x32xf32>
    %c2_59 = arith.constant 2 : index
    %c0_60 = arith.constant 0 : index
    %c0_61 = arith.constant 0 : index
    %167 = vector.load %arg12[%c2_59, %c0_60, %c0_61] : memref<8x8x64xf32, #tpu.memory_space<vmem>>, vector<1x8x32xf32>
    %168 = vector.shape_cast %167 : vector<1x8x32xf32> to vector<8x32xf32>
    %169 = vector.shape_cast %166 : vector<8x32xf32> to vector<1x8x32xf32>
    tpu.vector_store %arg12[%c2_59, %c0_60, %c0_61], %169 {strides = array<i32>} : memref<8x8x64xf32, #tpu.memory_space<vmem>>, vector<1x8x32xf32>,
    %170 = vector.extract_strided_slice %165 {offsets = [0, 32], sizes = [8, 32], strides = [1, 1]} : vector<8x64xf32> to vector<8x32xf32>
    %c5_62 = arith.constant 5 : index
    %c0_63 = arith.constant 0 : index
    %c32_64 = arith.constant 32 : index
    %171 = vector.load %arg12[%c5_62, %c0_63, %c32_64] : memref<8x8x64xf32, #tpu.memory_space<vmem>>, vector<1x8x32xf32>
    %172 = vector.shape_cast %171 : vector<1x8x32xf32> to vector<8x32xf32>
    %173 = vector.shape_cast %170 : vector<8x32xf32> to vector<1x8x32xf32>
    tpu.vector_store %arg12[%c5_62, %c0_63, %c32_64], %173 {strides = array<i32>} : memref<8x8x64xf32, #tpu.memory_space<vmem>>, vector<1x8x32xf32>,
    %174 = arith.truncf %163 : vector<8x64xf32> to vector<8x64xbf16>
    %cst_65 = arith.constant dense<0.000000e+00> : vector<8x256xf32>
    %175 = tpu.matmul %174, %41, %cst_65 {dimension_numbers = #tpu.dot_dimension_numbers<[1], [0], [0], [1], [0, 0, 1, 1], [], []>} : vector<8x64xbf16>, vector<64x256xbf16>, vector<8x256xf32> -> vector<8x256xf32>
    %c3 = arith.constant 3 : index
    %c0_66 = arith.constant 0 : index
    %c0_67 = arith.constant 0 : index
    %176 = vector.load %arg10[%c3, %c0_66, %c0_67] : memref<8x8x256xf32, #tpu.memory_space<vmem>>, vector<1x8x128xf32>
    %177 = vector.shape_cast %176 : vector<1x8x128xf32> to vector<8x128xf32>
    %c4 = arith.constant 4 : index
    %c0_68 = arith.constant 0 : index
    %c128_69 = arith.constant 128 : index
    %178 = vector.load %arg10[%c4, %c0_68, %c128_69] : memref<8x8x256xf32, #tpu.memory_space<vmem>>, vector<1x8x128xf32>
    %179 = vector.shape_cast %178 : vector<1x8x128xf32> to vector<8x128xf32>
    %180 = tpu.concatenate %177, %179 in 1 : vector<8x128xf32>, vector<8x128xf32> -> vector<8x256xf32>
    %181 = arith.addf %175, %180 : vector<8x256xf32>
    %182 = arith.mulf %24, %181 : vector<8x256xf32>
    %183 = math.tanh %182 : vector<8x256xf32>
    %184 = arith.mulf %24, %183 : vector<8x256xf32>
    %185 = arith.addf %184, %26 : vector<8x256xf32>
    %186 = vector.extract_strided_slice %185 {offsets = [0, 0], sizes = [8, 32], strides = [1, 1]} : vector<8x256xf32> to vector<8x32xf32>
    %187 = vector.extract_strided_slice %185 {offsets = [0, 128], sizes = [8, 32], strides = [1, 1]} : vector<8x256xf32> to vector<8x32xf32>
    %188 = tpu.concatenate %186, %187 in 1 : vector<8x32xf32>, vector<8x32xf32> -> vector<8x64xf32>
    %189 = vector.extract_strided_slice %185 {offsets = [0, 32], sizes = [8, 32], strides = [1, 1]} : vector<8x256xf32> to vector<8x32xf32>
    %190 = vector.extract_strided_slice %185 {offsets = [0, 160], sizes = [8, 32], strides = [1, 1]} : vector<8x256xf32> to vector<8x32xf32>
    %191 = tpu.concatenate %189, %190 in 1 : vector<8x32xf32>, vector<8x32xf32> -> vector<8x64xf32>
    %192 = vector.extract_strided_slice %185 {offsets = [0, 64], sizes = [8, 32], strides = [1, 1]} : vector<8x256xf32> to vector<8x32xf32>
    %193 = vector.extract_strided_slice %185 {offsets = [0, 192], sizes = [8, 32], strides = [1, 1]} : vector<8x256xf32> to vector<8x32xf32>
    %194 = tpu.concatenate %192, %193 in 1 : vector<8x32xf32>, vector<8x32xf32> -> vector<8x64xf32>
    %195 = vector.extract_strided_slice %185 {offsets = [0, 96], sizes = [8, 32], strides = [1, 1]} : vector<8x256xf32> to vector<8x32xf32>
    %196 = vector.extract_strided_slice %185 {offsets = [0, 224], sizes = [8, 32], strides = [1, 1]} : vector<8x256xf32> to vector<8x32xf32>
    %197 = tpu.concatenate %195, %196 in 1 : vector<8x32xf32>, vector<8x32xf32> -> vector<8x64xf32>
    %198 = arith.mulf %191, %164 : vector<8x64xf32>
    %199 = arith.mulf %188, %194 : vector<8x64xf32>
    %200 = arith.addf %198, %199 : vector<8x64xf32>
    %201 = math.tanh %200 : vector<8x64xf32>
    %202 = arith.mulf %197, %201 : vector<8x64xf32>
    %c3_70 = arith.constant 3 : index
    %c0_71 = arith.constant 0 : index
    %c0_72 = arith.constant 0 : index
    %203 = vector.load %arg1[%c3_70, %c0_71, %c0_72] : memref<8x8x64xf32, #tpu.memory_space<vmem>>, vector<1x8x64xf32>
    %204 = vector.shape_cast %203 : vector<1x8x64xf32> to vector<8x64xf32>
    %cst_73 = arith.constant 0.000000e+00 : f32
    %205 = vector.broadcast %cst_73 : f32 to vector<8x64xf32>
    %206 = arith.cmpf one, %204, %205 : vector<8x64xf32>
    %207 = arith.select %206, %202, %163 : vector<8x64xi1>, vector<8x64xf32>
    %208 = arith.select %206, %200, %164 : vector<8x64xi1>, vector<8x64xf32>
    %209 = arith.select %206, %202, %27 : vector<8x64xi1>, vector<8x64xf32>
    %210 = vector.extract_strided_slice %209 {offsets = [0, 0], sizes = [8, 32], strides = [1, 1]} : vector<8x64xf32> to vector<8x32xf32>
    %c3_74 = arith.constant 3 : index
    %c0_75 = arith.constant 0 : index
    %c0_76 = arith.constant 0 : index
    %211 = vector.load %arg12[%c3_74, %c0_75, %c0_76] : memref<8x8x64xf32, #tpu.memory_space<vmem>>, vector<1x8x32xf32>
    %212 = vector.shape_cast %211 : vector<1x8x32xf32> to vector<8x32xf32>
    %213 = vector.shape_cast %210 : vector<8x32xf32> to vector<1x8x32xf32>
    tpu.vector_store %arg12[%c3_74, %c0_75, %c0_76], %213 {strides = array<i32>} : memref<8x8x64xf32, #tpu.memory_space<vmem>>, vector<1x8x32xf32>,
    %214 = vector.extract_strided_slice %209 {offsets = [0, 32], sizes = [8, 32], strides = [1, 1]} : vector<8x64xf32> to vector<8x32xf32>
    %c4_77 = arith.constant 4 : index
    %c0_78 = arith.constant 0 : index
    %c32_79 = arith.constant 32 : index
    %215 = vector.load %arg12[%c4_77, %c0_78, %c32_79] : memref<8x8x64xf32, #tpu.memory_space<vmem>>, vector<1x8x32xf32>
    %216 = vector.shape_cast %215 : vector<1x8x32xf32> to vector<8x32xf32>
    %217 = vector.shape_cast %214 : vector<8x32xf32> to vector<1x8x32xf32>
    tpu.vector_store %arg12[%c4_77, %c0_78, %c32_79], %217 {strides = array<i32>} : memref<8x8x64xf32, #tpu.memory_space<vmem>>, vector<1x8x32xf32>,
    %218 = arith.truncf %207 : vector<8x64xf32> to vector<8x64xbf16>
    %cst_80 = arith.constant dense<0.000000e+00> : vector<8x256xf32>
    %219 = tpu.matmul %218, %41, %cst_80 {dimension_numbers = #tpu.dot_dimension_numbers<[1], [0], [0], [1], [0, 0, 1, 1], [], []>} : vector<8x64xbf16>, vector<64x256xbf16>, vector<8x256xf32> -> vector<8x256xf32>
    %c4_81 = arith.constant 4 : index
    %c0_82 = arith.constant 0 : index
    %c0_83 = arith.constant 0 : index
    %220 = vector.load %arg10[%c4_81, %c0_82, %c0_83] : memref<8x8x256xf32, #tpu.memory_space<vmem>>, vector<1x8x128xf32>
    %221 = vector.shape_cast %220 : vector<1x8x128xf32> to vector<8x128xf32>
    %c3_84 = arith.constant 3 : index
    %c0_85 = arith.constant 0 : index
    %c128_86 = arith.constant 128 : index
    %222 = vector.load %arg10[%c3_84, %c0_85, %c128_86] : memref<8x8x256xf32, #tpu.memory_space<vmem>>, vector<1x8x128xf32>
    %223 = vector.shape_cast %222 : vector<1x8x128xf32> to vector<8x128xf32>
    %224 = tpu.concatenate %221, %223 in 1 : vector<8x128xf32>, vector<8x128xf32> -> vector<8x256xf32>
    %225 = arith.addf %219, %224 : vector<8x256xf32>
    %226 = arith.mulf %24, %225 : vector<8x256xf32>
    %227 = math.tanh %226 : vector<8x256xf32>
    %228 = arith.mulf %24, %227 : vector<8x256xf32>
    %229 = arith.addf %228, %26 : vector<8x256xf32>
    %230 = vector.extract_strided_slice %229 {offsets = [0, 0], sizes = [8, 32], strides = [1, 1]} : vector<8x256xf32> to vector<8x32xf32>
    %231 = vector.extract_strided_slice %229 {offsets = [0, 128], sizes = [8, 32], strides = [1, 1]} : vector<8x256xf32> to vector<8x32xf32>
    %232 = tpu.concatenate %230, %231 in 1 : vector<8x32xf32>, vector<8x32xf32> -> vector<8x64xf32>
    %233 = vector.extract_strided_slice %229 {offsets = [0, 32], sizes = [8, 32], strides = [1, 1]} : vector<8x256xf32> to vector<8x32xf32>
    %234 = vector.extract_strided_slice %229 {offsets = [0, 160], sizes = [8, 32], strides = [1, 1]} : vector<8x256xf32> to vector<8x32xf32>
    %235 = tpu.concatenate %233, %234 in 1 : vector<8x32xf32>, vector<8x32xf32> -> vector<8x64xf32>
    %236 = vector.extract_strided_slice %229 {offsets = [0, 64], sizes = [8, 32], strides = [1, 1]} : vector<8x256xf32> to vector<8x32xf32>
    %237 = vector.extract_strided_slice %229 {offsets = [0, 192], sizes = [8, 32], strides = [1, 1]} : vector<8x256xf32> to vector<8x32xf32>
    %238 = tpu.concatenate %236, %237 in 1 : vector<8x32xf32>, vector<8x32xf32> -> vector<8x64xf32>
    %239 = vector.extract_strided_slice %229 {offsets = [0, 96], sizes = [8, 32], strides = [1, 1]} : vector<8x256xf32> to vector<8x32xf32>
    %240 = vector.extract_strided_slice %229 {offsets = [0, 224], sizes = [8, 32], strides = [1, 1]} : vector<8x256xf32> to vector<8x32xf32>
    %241 = tpu.concatenate %239, %240 in 1 : vector<8x32xf32>, vector<8x32xf32> -> vector<8x64xf32>
    %242 = arith.mulf %235, %208 : vector<8x64xf32>
    %243 = arith.mulf %232, %238 : vector<8x64xf32>
    %244 = arith.addf %242, %243 : vector<8x64xf32>
    %245 = math.tanh %244 : vector<8x64xf32>
    %246 = arith.mulf %241, %245 : vector<8x64xf32>
    %c4_87 = arith.constant 4 : index
    %c0_88 = arith.constant 0 : index
    %c0_89 = arith.constant 0 : index
    %247 = vector.load %arg1[%c4_87, %c0_88, %c0_89] : memref<8x8x64xf32, #tpu.memory_space<vmem>>, vector<1x8x64xf32>
    %248 = vector.shape_cast %247 : vector<1x8x64xf32> to vector<8x64xf32>
    %cst_90 = arith.constant 0.000000e+00 : f32
    %249 = vector.broadcast %cst_90 : f32 to vector<8x64xf32>
    %250 = arith.cmpf one, %248, %249 : vector<8x64xf32>
    %251 = arith.select %250, %246, %207 : vector<8x64xi1>, vector<8x64xf32>
    %252 = arith.select %250, %244, %208 : vector<8x64xi1>, vector<8x64xf32>
    %253 = arith.select %250, %246, %27 : vector<8x64xi1>, vector<8x64xf32>
    %254 = vector.extract_strided_slice %253 {offsets = [0, 0], sizes = [8, 32], strides = [1, 1]} : vector<8x64xf32> to vector<8x32xf32>
    %c4_91 = arith.constant 4 : index
    %c0_92 = arith.constant 0 : index
    %c0_93 = arith.constant 0 : index
    %255 = vector.load %arg12[%c4_91, %c0_92, %c0_93] : memref<8x8x64xf32, #tpu.memory_space<vmem>>, vector<1x8x32xf32>
    %256 = vector.shape_cast %255 : vector<1x8x32xf32> to vector<8x32xf32>
    %257 = vector.shape_cast %254 : vector<8x32xf32> to vector<1x8x32xf32>
    tpu.vector_store %arg12[%c4_91, %c0_92, %c0_93], %257 {strides = array<i32>} : memref<8x8x64xf32, #tpu.memory_space<vmem>>, vector<1x8x32xf32>,
    %258 = vector.extract_strided_slice %253 {offsets = [0, 32], sizes = [8, 32], strides = [1, 1]} : vector<8x64xf32> to vector<8x32xf32>
    %c3_94 = arith.constant 3 : index
    %c0_95 = arith.constant 0 : index
    %c32_96 = arith.constant 32 : index
    %259 = vector.load %arg12[%c3_94, %c0_95, %c32_96] : memref<8x8x64xf32, #tpu.memory_space<vmem>>, vector<1x8x32xf32>
    %260 = vector.shape_cast %259 : vector<1x8x32xf32> to vector<8x32xf32>
    %261 = vector.shape_cast %258 : vector<8x32xf32> to vector<1x8x32xf32>
    tpu.vector_store %arg12[%c3_94, %c0_95, %c32_96], %261 {strides = array<i32>} : memref<8x8x64xf32, #tpu.memory_space<vmem>>, vector<1x8x32xf32>,
    %262 = arith.truncf %251 : vector<8x64xf32> to vector<8x64xbf16>
    %cst_97 = arith.constant dense<0.000000e+00> : vector<8x256xf32>
    %263 = tpu.matmul %262, %41, %cst_97 {dimension_numbers = #tpu.dot_dimension_numbers<[1], [0], [0], [1], [0, 0, 1, 1], [], []>} : vector<8x64xbf16>, vector<64x256xbf16>, vector<8x256xf32> -> vector<8x256xf32>
    %c5_98 = arith.constant 5 : index
    %c0_99 = arith.constant 0 : index
    %c0_100 = arith.constant 0 : index
    %264 = vector.load %arg10[%c5_98, %c0_99, %c0_100] : memref<8x8x256xf32, #tpu.memory_space<vmem>>, vector<1x8x128xf32>
    %265 = vector.shape_cast %264 : vector<1x8x128xf32> to vector<8x128xf32>
    %c2_101 = arith.constant 2 : index
    %c0_102 = arith.constant 0 : index
    %c128_103 = arith.constant 128 : index
    %266 = vector.load %arg10[%c2_101, %c0_102, %c128_103] : memref<8x8x256xf32, #tpu.memory_space<vmem>>, vector<1x8x128xf32>
    %267 = vector.shape_cast %266 : vector<1x8x128xf32> to vector<8x128xf32>
    %268 = tpu.concatenate %265, %267 in 1 : vector<8x128xf32>, vector<8x128xf32> -> vector<8x256xf32>
    %269 = arith.addf %263, %268 : vector<8x256xf32>
    %270 = arith.mulf %24, %269 : vector<8x256xf32>
    %271 = math.tanh %270 : vector<8x256xf32>
    %272 = arith.mulf %24, %271 : vector<8x256xf32>
    %273 = arith.addf %272, %26 : vector<8x256xf32>
    %274 = vector.extract_strided_slice %273 {offsets = [0, 0], sizes = [8, 32], strides = [1, 1]} : vector<8x256xf32> to vector<8x32xf32>
    %275 = vector.extract_strided_slice %273 {offsets = [0, 128], sizes = [8, 32], strides = [1, 1]} : vector<8x256xf32> to vector<8x32xf32>
    %276 = tpu.concatenate %274, %275 in 1 : vector<8x32xf32>, vector<8x32xf32> -> vector<8x64xf32>
    %277 = vector.extract_strided_slice %273 {offsets = [0, 32], sizes = [8, 32], strides = [1, 1]} : vector<8x256xf32> to vector<8x32xf32>
    %278 = vector.extract_strided_slice %273 {offsets = [0, 160], sizes = [8, 32], strides = [1, 1]} : vector<8x256xf32> to vector<8x32xf32>
    %279 = tpu.concatenate %277, %278 in 1 : vector<8x32xf32>, vector<8x32xf32> -> vector<8x64xf32>
    %280 = vector.extract_strided_slice %273 {offsets = [0, 64], sizes = [8, 32], strides = [1, 1]} : vector<8x256xf32> to vector<8x32xf32>
    %281 = vector.extract_strided_slice %273 {offsets = [0, 192], sizes = [8, 32], strides = [1, 1]} : vector<8x256xf32> to vector<8x32xf32>
    %282 = tpu.concatenate %280, %281 in 1 : vector<8x32xf32>, vector<8x32xf32> -> vector<8x64xf32>
    %283 = vector.extract_strided_slice %273 {offsets = [0, 96], sizes = [8, 32], strides = [1, 1]} : vector<8x256xf32> to vector<8x32xf32>
    %284 = vector.extract_strided_slice %273 {offsets = [0, 224], sizes = [8, 32], strides = [1, 1]} : vector<8x256xf32> to vector<8x32xf32>
    %285 = tpu.concatenate %283, %284 in 1 : vector<8x32xf32>, vector<8x32xf32> -> vector<8x64xf32>
    %286 = arith.mulf %279, %252 : vector<8x64xf32>
    %287 = arith.mulf %276, %282 : vector<8x64xf32>
    %288 = arith.addf %286, %287 : vector<8x64xf32>
    %289 = math.tanh %288 : vector<8x64xf32>
    %290 = arith.mulf %285, %289 : vector<8x64xf32>
    %c5_104 = arith.constant 5 : index
    %c0_105 = arith.constant 0 : index
    %c0_106 = arith.constant 0 : index
    %291 = vector.load %arg1[%c5_104, %c0_105, %c0_106] : memref<8x8x64xf32, #tpu.memory_space<vmem>>, vector<1x8x64xf32>
    %292 = vector.shape_cast %291 : vector<1x8x64xf32> to vector<8x64xf32>
    %cst_107 = arith.constant 0.000000e+00 : f32
    %293 = vector.broadcast %cst_107 : f32 to vector<8x64xf32>
    %294 = arith.cmpf one, %292, %293 : vector<8x64xf32>
    %295 = arith.select %294, %290, %251 : vector<8x64xi1>, vector<8x64xf32>
    %296 = arith.select %294, %288, %252 : vector<8x64xi1>, vector<8x64xf32>
    %297 = arith.select %294, %290, %27 : vector<8x64xi1>, vector<8x64xf32>
    %298 = vector.extract_strided_slice %297 {offsets = [0, 0], sizes = [8, 32], strides = [1, 1]} : vector<8x64xf32> to vector<8x32xf32>
    %c5_108 = arith.constant 5 : index
    %c0_109 = arith.constant 0 : index
    %c0_110 = arith.constant 0 : index
    %299 = vector.load %arg12[%c5_108, %c0_109, %c0_110] : memref<8x8x64xf32, #tpu.memory_space<vmem>>, vector<1x8x32xf32>
    %300 = vector.shape_cast %299 : vector<1x8x32xf32> to vector<8x32xf32>
    %301 = vector.shape_cast %298 : vector<8x32xf32> to vector<1x8x32xf32>
    tpu.vector_store %arg12[%c5_108, %c0_109, %c0_110], %301 {strides = array<i32>} : memref<8x8x64xf32, #tpu.memory_space<vmem>>, vector<1x8x32xf32>,
    %302 = vector.extract_strided_slice %297 {offsets = [0, 32], sizes = [8, 32], strides = [1, 1]} : vector<8x64xf32> to vector<8x32xf32>
    %c2_111 = arith.constant 2 : index
    %c0_112 = arith.constant 0 : index
    %c32_113 = arith.constant 32 : index
    %303 = vector.load %arg12[%c2_111, %c0_112, %c32_113] : memref<8x8x64xf32, #tpu.memory_space<vmem>>, vector<1x8x32xf32>
    %304 = vector.shape_cast %303 : vector<1x8x32xf32> to vector<8x32xf32>
    %305 = vector.shape_cast %302 : vector<8x32xf32> to vector<1x8x32xf32>
    tpu.vector_store %arg12[%c2_111, %c0_112, %c32_113], %305 {strides = array<i32>} : memref<8x8x64xf32, #tpu.memory_space<vmem>>, vector<1x8x32xf32>,
    %306 = arith.truncf %295 : vector<8x64xf32> to vector<8x64xbf16>
    %cst_114 = arith.constant dense<0.000000e+00> : vector<8x256xf32>
    %307 = tpu.matmul %306, %41, %cst_114 {dimension_numbers = #tpu.dot_dimension_numbers<[1], [0], [0], [1], [0, 0, 1, 1], [], []>} : vector<8x64xbf16>, vector<64x256xbf16>, vector<8x256xf32> -> vector<8x256xf32>
    %c6_115 = arith.constant 6 : index
    %c0_116 = arith.constant 0 : index
    %c0_117 = arith.constant 0 : index
    %308 = vector.load %arg10[%c6_115, %c0_116, %c0_117] : memref<8x8x256xf32, #tpu.memory_space<vmem>>, vector<1x8x128xf32>
    %309 = vector.shape_cast %308 : vector<1x8x128xf32> to vector<8x128xf32>
    %c1_118 = arith.constant 1 : index
    %c0_119 = arith.constant 0 : index
    %c128_120 = arith.constant 128 : index
    %310 = vector.load %arg10[%c1_118, %c0_119, %c128_120] : memref<8x8x256xf32, #tpu.memory_space<vmem>>, vector<1x8x128xf32>
    %311 = vector.shape_cast %310 : vector<1x8x128xf32> to vector<8x128xf32>
    %312 = tpu.concatenate %309, %311 in 1 : vector<8x128xf32>, vector<8x128xf32> -> vector<8x256xf32>
    %313 = arith.addf %307, %312 : vector<8x256xf32>
    %314 = arith.mulf %24, %313 : vector<8x256xf32>
    %315 = math.tanh %314 : vector<8x256xf32>
    %316 = arith.mulf %24, %315 : vector<8x256xf32>
    %317 = arith.addf %316, %26 : vector<8x256xf32>
    %318 = vector.extract_strided_slice %317 {offsets = [0, 0], sizes = [8, 32], strides = [1, 1]} : vector<8x256xf32> to vector<8x32xf32>
    %319 = vector.extract_strided_slice %317 {offsets = [0, 128], sizes = [8, 32], strides = [1, 1]} : vector<8x256xf32> to vector<8x32xf32>
    %320 = tpu.concatenate %318, %319 in 1 : vector<8x32xf32>, vector<8x32xf32> -> vector<8x64xf32>
    %321 = vector.extract_strided_slice %317 {offsets = [0, 32], sizes = [8, 32], strides = [1, 1]} : vector<8x256xf32> to vector<8x32xf32>
    %322 = vector.extract_strided_slice %317 {offsets = [0, 160], sizes = [8, 32], strides = [1, 1]} : vector<8x256xf32> to vector<8x32xf32>
    %323 = tpu.concatenate %321, %322 in 1 : vector<8x32xf32>, vector<8x32xf32> -> vector<8x64xf32>
    %324 = vector.extract_strided_slice %317 {offsets = [0, 64], sizes = [8, 32], strides = [1, 1]} : vector<8x256xf32> to vector<8x32xf32>
    %325 = vector.extract_strided_slice %317 {offsets = [0, 192], sizes = [8, 32], strides = [1, 1]} : vector<8x256xf32> to vector<8x32xf32>
    %326 = tpu.concatenate %324, %325 in 1 : vector<8x32xf32>, vector<8x32xf32> -> vector<8x64xf32>
    %327 = vector.extract_strided_slice %317 {offsets = [0, 96], sizes = [8, 32], strides = [1, 1]} : vector<8x256xf32> to vector<8x32xf32>
    %328 = vector.extract_strided_slice %317 {offsets = [0, 224], sizes = [8, 32], strides = [1, 1]} : vector<8x256xf32> to vector<8x32xf32>
    %329 = tpu.concatenate %327, %328 in 1 : vector<8x32xf32>, vector<8x32xf32> -> vector<8x64xf32>
    %330 = arith.mulf %323, %296 : vector<8x64xf32>
    %331 = arith.mulf %320, %326 : vector<8x64xf32>
    %332 = arith.addf %330, %331 : vector<8x64xf32>
    %333 = math.tanh %332 : vector<8x64xf32>
    %334 = arith.mulf %329, %333 : vector<8x64xf32>
    %c6_121 = arith.constant 6 : index
    %c0_122 = arith.constant 0 : index
    %c0_123 = arith.constant 0 : index
    %335 = vector.load %arg1[%c6_121, %c0_122, %c0_123] : memref<8x8x64xf32, #tpu.memory_space<vmem>>, vector<1x8x64xf32>
    %336 = vector.shape_cast %335 : vector<1x8x64xf32> to vector<8x64xf32>
    %cst_124 = arith.constant 0.000000e+00 : f32
    %337 = vector.broadcast %cst_124 : f32 to vector<8x64xf32>
    %338 = arith.cmpf one, %336, %337 : vector<8x64xf32>
    %339 = arith.select %338, %334, %295 : vector<8x64xi1>, vector<8x64xf32>
    %340 = arith.select %338, %332, %296 : vector<8x64xi1>, vector<8x64xf32>
    %341 = arith.select %338, %334, %27 : vector<8x64xi1>, vector<8x64xf32>
    %342 = vector.extract_strided_slice %341 {offsets = [0, 0], sizes = [8, 32], strides = [1, 1]} : vector<8x64xf32> to vector<8x32xf32>
    %c6_125 = arith.constant 6 : index
    %c0_126 = arith.constant 0 : index
    %c0_127 = arith.constant 0 : index
    %343 = vector.load %arg12[%c6_125, %c0_126, %c0_127] : memref<8x8x64xf32, #tpu.memory_space<vmem>>, vector<1x8x32xf32>
    %344 = vector.shape_cast %343 : vector<1x8x32xf32> to vector<8x32xf32>
    %345 = vector.shape_cast %342 : vector<8x32xf32> to vector<1x8x32xf32>
    tpu.vector_store %arg12[%c6_125, %c0_126, %c0_127], %345 {strides = array<i32>} : memref<8x8x64xf32, #tpu.memory_space<vmem>>, vector<1x8x32xf32>,
    %346 = vector.extract_strided_slice %341 {offsets = [0, 32], sizes = [8, 32], strides = [1, 1]} : vector<8x64xf32> to vector<8x32xf32>
    %c1_128 = arith.constant 1 : index
    %c0_129 = arith.constant 0 : index
    %c32_130 = arith.constant 32 : index
    %347 = vector.load %arg12[%c1_128, %c0_129, %c32_130] : memref<8x8x64xf32, #tpu.memory_space<vmem>>, vector<1x8x32xf32>
    %348 = vector.shape_cast %347 : vector<1x8x32xf32> to vector<8x32xf32>
    %349 = vector.shape_cast %346 : vector<8x32xf32> to vector<1x8x32xf32>
    tpu.vector_store %arg12[%c1_128, %c0_129, %c32_130], %349 {strides = array<i32>} : memref<8x8x64xf32, #tpu.memory_space<vmem>>, vector<1x8x32xf32>,
    %350 = arith.truncf %339 : vector<8x64xf32> to vector<8x64xbf16>
    %cst_131 = arith.constant dense<0.000000e+00> : vector<8x256xf32>
    %351 = tpu.matmul %350, %41, %cst_131 {dimension_numbers = #tpu.dot_dimension_numbers<[1], [0], [0], [1], [0, 0, 1, 1], [], []>} : vector<8x64xbf16>, vector<64x256xbf16>, vector<8x256xf32> -> vector<8x256xf32>
    %c7_132 = arith.constant 7 : index
    %c0_133 = arith.constant 0 : index
    %c0_134 = arith.constant 0 : index
    %352 = vector.load %arg10[%c7_132, %c0_133, %c0_134] : memref<8x8x256xf32, #tpu.memory_space<vmem>>, vector<1x8x128xf32>
    %353 = vector.shape_cast %352 : vector<1x8x128xf32> to vector<8x128xf32>
    %c0_135 = arith.constant 0 : index
    %c0_136 = arith.constant 0 : index
    %c128_137 = arith.constant 128 : index
    %354 = vector.load %arg10[%c0_135, %c0_136, %c128_137] : memref<8x8x256xf32, #tpu.memory_space<vmem>>, vector<1x8x128xf32>
    %355 = vector.shape_cast %354 : vector<1x8x128xf32> to vector<8x128xf32>
    %356 = tpu.concatenate %353, %355 in 1 : vector<8x128xf32>, vector<8x128xf32> -> vector<8x256xf32>
    %357 = arith.addf %351, %356 : vector<8x256xf32>
    %358 = arith.mulf %24, %357 : vector<8x256xf32>
    %359 = math.tanh %358 : vector<8x256xf32>
    %360 = arith.mulf %24, %359 : vector<8x256xf32>
    %361 = arith.addf %360, %26 : vector<8x256xf32>
    %362 = vector.extract_strided_slice %361 {offsets = [0, 0], sizes = [8, 32], strides = [1, 1]} : vector<8x256xf32> to vector<8x32xf32>
    %363 = vector.extract_strided_slice %361 {offsets = [0, 128], sizes = [8, 32], strides = [1, 1]} : vector<8x256xf32> to vector<8x32xf32>
    %364 = tpu.concatenate %362, %363 in 1 : vector<8x32xf32>, vector<8x32xf32> -> vector<8x64xf32>
    %365 = vector.extract_strided_slice %361 {offsets = [0, 32], sizes = [8, 32], strides = [1, 1]} : vector<8x256xf32> to vector<8x32xf32>
    %366 = vector.extract_strided_slice %361 {offsets = [0, 160], sizes = [8, 32], strides = [1, 1]} : vector<8x256xf32> to vector<8x32xf32>
    %367 = tpu.concatenate %365, %366 in 1 : vector<8x32xf32>, vector<8x32xf32> -> vector<8x64xf32>
    %368 = vector.extract_strided_slice %361 {offsets = [0, 64], sizes = [8, 32], strides = [1, 1]} : vector<8x256xf32> to vector<8x32xf32>
    %369 = vector.extract_strided_slice %361 {offsets = [0, 192], sizes = [8, 32], strides = [1, 1]} : vector<8x256xf32> to vector<8x32xf32>
    %370 = tpu.concatenate %368, %369 in 1 : vector<8x32xf32>, vector<8x32xf32> -> vector<8x64xf32>
    %371 = vector.extract_strided_slice %361 {offsets = [0, 96], sizes = [8, 32], strides = [1, 1]} : vector<8x256xf32> to vector<8x32xf32>
    %372 = vector.extract_strided_slice %361 {offsets = [0, 224], sizes = [8, 32], strides = [1, 1]} : vector<8x256xf32> to vector<8x32xf32>
    %373 = tpu.concatenate %371, %372 in 1 : vector<8x32xf32>, vector<8x32xf32> -> vector<8x64xf32>
    %374 = arith.mulf %367, %340 : vector<8x64xf32>
    %375 = arith.mulf %364, %370 : vector<8x64xf32>
    %376 = arith.addf %374, %375 : vector<8x64xf32>
    %377 = math.tanh %376 : vector<8x64xf32>
    %378 = arith.mulf %373, %377 : vector<8x64xf32>
    %c7_138 = arith.constant 7 : index
    %c0_139 = arith.constant 0 : index
    %c0_140 = arith.constant 0 : index
    %379 = vector.load %arg1[%c7_138, %c0_139, %c0_140] : memref<8x8x64xf32, #tpu.memory_space<vmem>>, vector<1x8x64xf32>
    %380 = vector.shape_cast %379 : vector<1x8x64xf32> to vector<8x64xf32>
    %cst_141 = arith.constant 0.000000e+00 : f32
    %381 = vector.broadcast %cst_141 : f32 to vector<8x64xf32>
    %382 = arith.cmpf one, %380, %381 : vector<8x64xf32>
    %383 = arith.select %382, %378, %27 : vector<8x64xi1>, vector<8x64xf32>
    %384 = vector.extract_strided_slice %383 {offsets = [0, 0], sizes = [8, 32], strides = [1, 1]} : vector<8x64xf32> to vector<8x32xf32>
    %c7_142 = arith.constant 7 : index
    %c0_143 = arith.constant 0 : index
    %c0_144 = arith.constant 0 : index
    %385 = vector.load %arg12[%c7_142, %c0_143, %c0_144] : memref<8x8x64xf32, #tpu.memory_space<vmem>>, vector<1x8x32xf32>
    %386 = vector.shape_cast %385 : vector<1x8x32xf32> to vector<8x32xf32>
    %387 = vector.shape_cast %384 : vector<8x32xf32> to vector<1x8x32xf32>
    tpu.vector_store %arg12[%c7_142, %c0_143, %c0_144], %387 {strides = array<i32>} : memref<8x8x64xf32, #tpu.memory_space<vmem>>, vector<1x8x32xf32>,
    %388 = vector.extract_strided_slice %383 {offsets = [0, 32], sizes = [8, 32], strides = [1, 1]} : vector<8x64xf32> to vector<8x32xf32>
    %c0_145 = arith.constant 0 : index
    %c0_146 = arith.constant 0 : index
    %c32_147 = arith.constant 32 : index
    %389 = vector.load %arg12[%c0_145, %c0_146, %c32_147] : memref<8x8x64xf32, #tpu.memory_space<vmem>>, vector<1x8x32xf32>
    %390 = vector.shape_cast %389 : vector<1x8x32xf32> to vector<8x32xf32>
    %391 = vector.shape_cast %388 : vector<8x32xf32> to vector<1x8x32xf32>
    tpu.vector_store %arg12[%c0_145, %c0_146, %c32_147], %391 {strides = array<i32>} : memref<8x8x64xf32, #tpu.memory_space<vmem>>, vector<1x8x32xf32>,
    %c0_148 = arith.constant 0 : index
    %c0_149 = arith.constant 0 : index
    %c0_150 = arith.constant 0 : index
    %392 = vector.load %arg12[%c0_148, %c0_149, %c0_150] : memref<8x8x64xf32, #tpu.memory_space<vmem>>, vector<8x8x64xf32>
    %393 = vector.shape_cast %392 : vector<8x8x64xf32> to vector<64x64xf32>
    %394 = arith.truncf %393 : vector<64x64xf32> to vector<64x64xbf16>
    %c1_151 = arith.constant 1 : index
    %c0_152 = arith.constant 0 : index
    %c0_153 = arith.constant 0 : index
    %395 = vector.load %arg2[%c1_151, %c0_152, %c0_153] : memref<2x64x256xbf16, #tpu.memory_space<vmem>>, vector<1x64x256xbf16>
    %396 = vector.shape_cast %395 : vector<1x64x256xbf16> to vector<64x256xbf16>
    %cst_154 = arith.constant dense<0.000000e+00> : vector<64x256xf32>
    %397 = tpu.matmul %394, %396, %cst_154 {dimension_numbers = #tpu.dot_dimension_numbers<[1], [0], [0], [1], [0, 0, 1, 1], [], []>} : vector<64x64xbf16>, vector<64x256xbf16>, vector<64x256xf32> -> vector<64x256xf32>
    %c1_155 = arith.constant 1 : index
    %c0_156 = arith.constant 0 : index
    %c0_157 = arith.constant 0 : index
    %398 = vector.load %arg4[%c1_155, %c0_156, %c0_157] : memref<2x1x256xf32, #tpu.memory_space<vmem>>, vector<1x1x256xf32>
    %399 = vector.shape_cast %398 : vector<1x1x256xf32> to vector<1x256xf32>
    %400 = vector.broadcast %399 : vector<1x256xf32> to vector<64x256xf32>
    %401 = arith.addf %397, %400 : vector<64x256xf32>
    %402 = vector.shape_cast %401 : vector<64x256xf32> to vector<8x8x256xf32>
    %c0_158 = arith.constant 0 : index
    %c0_159 = arith.constant 0 : index
    %c0_160 = arith.constant 0 : index
    %403 = vector.load %arg11[%c0_158, %c0_159, %c0_160] : memref<8x8x256xf32, #tpu.memory_space<vmem>>, vector<8x8x256xf32>
    tpu.vector_store %arg11[%c0_158, %c0_159, %c0_160], %402 {strides = array<i32>} : memref<8x8x256xf32, #tpu.memory_space<vmem>>, vector<8x8x256xf32>,
    %c1_161 = arith.constant 1 : index
    %c0_162 = arith.constant 0 : index
    %c0_163 = arith.constant 0 : index
    %404 = vector.load %arg3[%c1_161, %c0_162, %c0_163] : memref<2x64x256xbf16, #tpu.memory_space<vmem>>, vector<1x64x256xbf16>
    %405 = vector.shape_cast %404 : vector<1x64x256xbf16> to vector<64x256xbf16>
    %406 = arith.truncf %27 : vector<8x64xf32> to vector<8x64xbf16>
    %cst_164 = arith.constant dense<0.000000e+00> : vector<8x256xf32>
    %407 = tpu.matmul %406, %405, %cst_164 {dimension_numbers = #tpu.dot_dimension_numbers<[1], [0], [0], [1], [0, 0, 1, 1], [], []>} : vector<8x64xbf16>, vector<64x256xbf16>, vector<8x256xf32> -> vector<8x256xf32>
    %c0_165 = arith.constant 0 : index
    %c0_166 = arith.constant 0 : index
    %c0_167 = arith.constant 0 : index
    %408 = vector.load %arg11[%c0_165, %c0_166, %c0_167] : memref<8x8x256xf32, #tpu.memory_space<vmem>>, vector<1x8x128xf32>
    %409 = vector.shape_cast %408 : vector<1x8x128xf32> to vector<8x128xf32>
    %c7_168 = arith.constant 7 : index
    %c0_169 = arith.constant 0 : index
    %c128_170 = arith.constant 128 : index
    %410 = vector.load %arg11[%c7_168, %c0_169, %c128_170] : memref<8x8x256xf32, #tpu.memory_space<vmem>>, vector<1x8x128xf32>
    %411 = vector.shape_cast %410 : vector<1x8x128xf32> to vector<8x128xf32>
    %412 = tpu.concatenate %409, %411 in 1 : vector<8x128xf32>, vector<8x128xf32> -> vector<8x256xf32>
    %413 = arith.addf %407, %412 : vector<8x256xf32>
    %414 = arith.mulf %24, %413 : vector<8x256xf32>
    %415 = math.tanh %414 : vector<8x256xf32>
    %416 = arith.mulf %24, %415 : vector<8x256xf32>
    %417 = arith.addf %416, %26 : vector<8x256xf32>
    %418 = vector.extract_strided_slice %417 {offsets = [0, 0], sizes = [8, 32], strides = [1, 1]} : vector<8x256xf32> to vector<8x32xf32>
    %419 = vector.extract_strided_slice %417 {offsets = [0, 128], sizes = [8, 32], strides = [1, 1]} : vector<8x256xf32> to vector<8x32xf32>
    %420 = tpu.concatenate %418, %419 in 1 : vector<8x32xf32>, vector<8x32xf32> -> vector<8x64xf32>
    %421 = vector.extract_strided_slice %417 {offsets = [0, 32], sizes = [8, 32], strides = [1, 1]} : vector<8x256xf32> to vector<8x32xf32>
    %422 = vector.extract_strided_slice %417 {offsets = [0, 160], sizes = [8, 32], strides = [1, 1]} : vector<8x256xf32> to vector<8x32xf32>
    %423 = tpu.concatenate %421, %422 in 1 : vector<8x32xf32>, vector<8x32xf32> -> vector<8x64xf32>
    %424 = vector.extract_strided_slice %417 {offsets = [0, 64], sizes = [8, 32], strides = [1, 1]} : vector<8x256xf32> to vector<8x32xf32>
    %425 = vector.extract_strided_slice %417 {offsets = [0, 192], sizes = [8, 32], strides = [1, 1]} : vector<8x256xf32> to vector<8x32xf32>
    %426 = tpu.concatenate %424, %425 in 1 : vector<8x32xf32>, vector<8x32xf32> -> vector<8x64xf32>
    %427 = vector.extract_strided_slice %417 {offsets = [0, 96], sizes = [8, 32], strides = [1, 1]} : vector<8x256xf32> to vector<8x32xf32>
    %428 = vector.extract_strided_slice %417 {offsets = [0, 224], sizes = [8, 32], strides = [1, 1]} : vector<8x256xf32> to vector<8x32xf32>
    %429 = tpu.concatenate %427, %428 in 1 : vector<8x32xf32>, vector<8x32xf32> -> vector<8x64xf32>
    %430 = arith.mulf %423, %27 : vector<8x64xf32>
    %431 = arith.mulf %420, %426 : vector<8x64xf32>
    %432 = arith.addf %430, %431 : vector<8x64xf32>
    %433 = math.tanh %432 : vector<8x64xf32>
    %434 = arith.mulf %429, %433 : vector<8x64xf32>
    %c0_171 = arith.constant 0 : index
    %c0_172 = arith.constant 0 : index
    %c0_173 = arith.constant 0 : index
    %435 = vector.load %arg1[%c0_171, %c0_172, %c0_173] : memref<8x8x64xf32, #tpu.memory_space<vmem>>, vector<1x8x64xf32>
    %436 = vector.shape_cast %435 : vector<1x8x64xf32> to vector<8x64xf32>
    %cst_174 = arith.constant 0.000000e+00 : f32
    %437 = vector.broadcast %cst_174 : f32 to vector<8x64xf32>
    %438 = arith.cmpf one, %436, %437 : vector<8x64xf32>
    %439 = arith.select %438, %434, %27 : vector<8x64xi1>, vector<8x64xf32>
    %440 = arith.select %438, %432, %27 : vector<8x64xi1>, vector<8x64xf32>
    %441 = arith.select %438, %434, %27 : vector<8x64xi1>, vector<8x64xf32>
    %442 = vector.extract_strided_slice %441 {offsets = [0, 0], sizes = [8, 32], strides = [1, 1]} : vector<8x64xf32> to vector<8x32xf32>
    %c0_175 = arith.constant 0 : index
    %c0_176 = arith.constant 0 : index
    %c0_177 = arith.constant 0 : index
    %443 = vector.load %arg13[%c0_175, %c0_176, %c0_177] : memref<8x8x64xf32, #tpu.memory_space<vmem>>, vector<1x8x32xf32>
    %444 = vector.shape_cast %443 : vector<1x8x32xf32> to vector<8x32xf32>
    %445 = vector.shape_cast %442 : vector<8x32xf32> to vector<1x8x32xf32>
    tpu.vector_store %arg13[%c0_175, %c0_176, %c0_177], %445 {strides = array<i32>} : memref<8x8x64xf32, #tpu.memory_space<vmem>>, vector<1x8x32xf32>,
    %446 = vector.extract_strided_slice %441 {offsets = [0, 32], sizes = [8, 32], strides = [1, 1]} : vector<8x64xf32> to vector<8x32xf32>
    %c7_178 = arith.constant 7 : index
    %c0_179 = arith.constant 0 : index
    %c32_180 = arith.constant 32 : index
    %447 = vector.load %arg13[%c7_178, %c0_179, %c32_180] : memref<8x8x64xf32, #tpu.memory_space<vmem>>, vector<1x8x32xf32>
    %448 = vector.shape_cast %447 : vector<1x8x32xf32> to vector<8x32xf32>
    %449 = vector.shape_cast %446 : vector<8x32xf32> to vector<1x8x32xf32>
    tpu.vector_store %arg13[%c7_178, %c0_179, %c32_180], %449 {strides = array<i32>} : memref<8x8x64xf32, #tpu.memory_space<vmem>>, vector<1x8x32xf32>,
    %450 = arith.truncf %439 : vector<8x64xf32> to vector<8x64xbf16>
    %cst_181 = arith.constant dense<0.000000e+00> : vector<8x256xf32>
    %451 = tpu.matmul %450, %405, %cst_181 {dimension_numbers = #tpu.dot_dimension_numbers<[1], [0], [0], [1], [0, 0, 1, 1], [], []>} : vector<8x64xbf16>, vector<64x256xbf16>, vector<8x256xf32> -> vector<8x256xf32>
    %c1_182 = arith.constant 1 : index
    %c0_183 = arith.constant 0 : index
    %c0_184 = arith.constant 0 : index
    %452 = vector.load %arg11[%c1_182, %c0_183, %c0_184] : memref<8x8x256xf32, #tpu.memory_space<vmem>>, vector<1x8x128xf32>
    %453 = vector.shape_cast %452 : vector<1x8x128xf32> to vector<8x128xf32>
    %c6_185 = arith.constant 6 : index
    %c0_186 = arith.constant 0 : index
    %c128_187 = arith.constant 128 : index
    %454 = vector.load %arg11[%c6_185, %c0_186, %c128_187] : memref<8x8x256xf32, #tpu.memory_space<vmem>>, vector<1x8x128xf32>
    %455 = vector.shape_cast %454 : vector<1x8x128xf32> to vector<8x128xf32>
    %456 = tpu.concatenate %453, %455 in 1 : vector<8x128xf32>, vector<8x128xf32> -> vector<8x256xf32>
    %457 = arith.addf %451, %456 : vector<8x256xf32>
    %458 = arith.mulf %24, %457 : vector<8x256xf32>
    %459 = math.tanh %458 : vector<8x256xf32>
    %460 = arith.mulf %24, %459 : vector<8x256xf32>
    %461 = arith.addf %460, %26 : vector<8x256xf32>
    %462 = vector.extract_strided_slice %461 {offsets = [0, 0], sizes = [8, 32], strides = [1, 1]} : vector<8x256xf32> to vector<8x32xf32>
    %463 = vector.extract_strided_slice %461 {offsets = [0, 128], sizes = [8, 32], strides = [1, 1]} : vector<8x256xf32> to vector<8x32xf32>
    %464 = tpu.concatenate %462, %463 in 1 : vector<8x32xf32>, vector<8x32xf32> -> vector<8x64xf32>
    %465 = vector.extract_strided_slice %461 {offsets = [0, 32], sizes = [8, 32], strides = [1, 1]} : vector<8x256xf32> to vector<8x32xf32>
    %466 = vector.extract_strided_slice %461 {offsets = [0, 160], sizes = [8, 32], strides = [1, 1]} : vector<8x256xf32> to vector<8x32xf32>
    %467 = tpu.concatenate %465, %466 in 1 : vector<8x32xf32>, vector<8x32xf32> -> vector<8x64xf32>
    %468 = vector.extract_strided_slice %461 {offsets = [0, 64], sizes = [8, 32], strides = [1, 1]} : vector<8x256xf32> to vector<8x32xf32>
    %469 = vector.extract_strided_slice %461 {offsets = [0, 192], sizes = [8, 32], strides = [1, 1]} : vector<8x256xf32> to vector<8x32xf32>
    %470 = tpu.concatenate %468, %469 in 1 : vector<8x32xf32>, vector<8x32xf32> -> vector<8x64xf32>
    %471 = vector.extract_strided_slice %461 {offsets = [0, 96], sizes = [8, 32], strides = [1, 1]} : vector<8x256xf32> to vector<8x32xf32>
    %472 = vector.extract_strided_slice %461 {offsets = [0, 224], sizes = [8, 32], strides = [1, 1]} : vector<8x256xf32> to vector<8x32xf32>
    %473 = tpu.concatenate %471, %472 in 1 : vector<8x32xf32>, vector<8x32xf32> -> vector<8x64xf32>
    %474 = arith.mulf %467, %440 : vector<8x64xf32>
    %475 = arith.mulf %464, %470 : vector<8x64xf32>
    %476 = arith.addf %474, %475 : vector<8x64xf32>
    %477 = math.tanh %476 : vector<8x64xf32>
    %478 = arith.mulf %473, %477 : vector<8x64xf32>
    %c1_188 = arith.constant 1 : index
    %c0_189 = arith.constant 0 : index
    %c0_190 = arith.constant 0 : index
    %479 = vector.load %arg1[%c1_188, %c0_189, %c0_190] : memref<8x8x64xf32, #tpu.memory_space<vmem>>, vector<1x8x64xf32>
    %480 = vector.shape_cast %479 : vector<1x8x64xf32> to vector<8x64xf32>
    %cst_191 = arith.constant 0.000000e+00 : f32
    %481 = vector.broadcast %cst_191 : f32 to vector<8x64xf32>
    %482 = arith.cmpf one, %480, %481 : vector<8x64xf32>
    %483 = arith.select %482, %478, %439 : vector<8x64xi1>, vector<8x64xf32>
    %484 = arith.select %482, %476, %440 : vector<8x64xi1>, vector<8x64xf32>
    %485 = arith.select %482, %478, %27 : vector<8x64xi1>, vector<8x64xf32>
    %486 = vector.extract_strided_slice %485 {offsets = [0, 0], sizes = [8, 32], strides = [1, 1]} : vector<8x64xf32> to vector<8x32xf32>
    %c1_192 = arith.constant 1 : index
    %c0_193 = arith.constant 0 : index
    %c0_194 = arith.constant 0 : index
    %487 = vector.load %arg13[%c1_192, %c0_193, %c0_194] : memref<8x8x64xf32, #tpu.memory_space<vmem>>, vector<1x8x32xf32>
    %488 = vector.shape_cast %487 : vector<1x8x32xf32> to vector<8x32xf32>
    %489 = vector.shape_cast %486 : vector<8x32xf32> to vector<1x8x32xf32>
    tpu.vector_store %arg13[%c1_192, %c0_193, %c0_194], %489 {strides = array<i32>} : memref<8x8x64xf32, #tpu.memory_space<vmem>>, vector<1x8x32xf32>,
    %490 = vector.extract_strided_slice %485 {offsets = [0, 32], sizes = [8, 32], strides = [1, 1]} : vector<8x64xf32> to vector<8x32xf32>
    %c6_195 = arith.constant 6 : index
    %c0_196 = arith.constant 0 : index
    %c32_197 = arith.constant 32 : index
    %491 = vector.load %arg13[%c6_195, %c0_196, %c32_197] : memref<8x8x64xf32, #tpu.memory_space<vmem>>, vector<1x8x32xf32>
    %492 = vector.shape_cast %491 : vector<1x8x32xf32> to vector<8x32xf32>
    %493 = vector.shape_cast %490 : vector<8x32xf32> to vector<1x8x32xf32>
    tpu.vector_store %arg13[%c6_195, %c0_196, %c32_197], %493 {strides = array<i32>} : memref<8x8x64xf32, #tpu.memory_space<vmem>>, vector<1x8x32xf32>,
    %494 = arith.truncf %483 : vector<8x64xf32> to vector<8x64xbf16>
    %cst_198 = arith.constant dense<0.000000e+00> : vector<8x256xf32>
    %495 = tpu.matmul %494, %405, %cst_198 {dimension_numbers = #tpu.dot_dimension_numbers<[1], [0], [0], [1], [0, 0, 1, 1], [], []>} : vector<8x64xbf16>, vector<64x256xbf16>, vector<8x256xf32> -> vector<8x256xf32>
    %c2_199 = arith.constant 2 : index
    %c0_200 = arith.constant 0 : index
    %c0_201 = arith.constant 0 : index
    %496 = vector.load %arg11[%c2_199, %c0_200, %c0_201] : memref<8x8x256xf32, #tpu.memory_space<vmem>>, vector<1x8x128xf32>
    %497 = vector.shape_cast %496 : vector<1x8x128xf32> to vector<8x128xf32>
    %c5_202 = arith.constant 5 : index
    %c0_203 = arith.constant 0 : index
    %c128_204 = arith.constant 128 : index
    %498 = vector.load %arg11[%c5_202, %c0_203, %c128_204] : memref<8x8x256xf32, #tpu.memory_space<vmem>>, vector<1x8x128xf32>
    %499 = vector.shape_cast %498 : vector<1x8x128xf32> to vector<8x128xf32>
    %500 = tpu.concatenate %497, %499 in 1 : vector<8x128xf32>, vector<8x128xf32> -> vector<8x256xf32>
    %501 = arith.addf %495, %500 : vector<8x256xf32>
    %502 = arith.mulf %24, %501 : vector<8x256xf32>
    %503 = math.tanh %502 : vector<8x256xf32>
    %504 = arith.mulf %24, %503 : vector<8x256xf32>
    %505 = arith.addf %504, %26 : vector<8x256xf32>
    %506 = vector.extract_strided_slice %505 {offsets = [0, 0], sizes = [8, 32], strides = [1, 1]} : vector<8x256xf32> to vector<8x32xf32>
    %507 = vector.extract_strided_slice %505 {offsets = [0, 128], sizes = [8, 32], strides = [1, 1]} : vector<8x256xf32> to vector<8x32xf32>
    %508 = tpu.concatenate %506, %507 in 1 : vector<8x32xf32>, vector<8x32xf32> -> vector<8x64xf32>
    %509 = vector.extract_strided_slice %505 {offsets = [0, 32], sizes = [8, 32], strides = [1, 1]} : vector<8x256xf32> to vector<8x32xf32>
    %510 = vector.extract_strided_slice %505 {offsets = [0, 160], sizes = [8, 32], strides = [1, 1]} : vector<8x256xf32> to vector<8x32xf32>
    %511 = tpu.concatenate %509, %510 in 1 : vector<8x32xf32>, vector<8x32xf32> -> vector<8x64xf32>
    %512 = vector.extract_strided_slice %505 {offsets = [0, 64], sizes = [8, 32], strides = [1, 1]} : vector<8x256xf32> to vector<8x32xf32>
    %513 = vector.extract_strided_slice %505 {offsets = [0, 192], sizes = [8, 32], strides = [1, 1]} : vector<8x256xf32> to vector<8x32xf32>
    %514 = tpu.concatenate %512, %513 in 1 : vector<8x32xf32>, vector<8x32xf32> -> vector<8x64xf32>
    %515 = vector.extract_strided_slice %505 {offsets = [0, 96], sizes = [8, 32], strides = [1, 1]} : vector<8x256xf32> to vector<8x32xf32>
    %516 = vector.extract_strided_slice %505 {offsets = [0, 224], sizes = [8, 32], strides = [1, 1]} : vector<8x256xf32> to vector<8x32xf32>
    %517 = tpu.concatenate %515, %516 in 1 : vector<8x32xf32>, vector<8x32xf32> -> vector<8x64xf32>
    %518 = arith.mulf %511, %484 : vector<8x64xf32>
    %519 = arith.mulf %508, %514 : vector<8x64xf32>
    %520 = arith.addf %518, %519 : vector<8x64xf32>
    %521 = math.tanh %520 : vector<8x64xf32>
    %522 = arith.mulf %517, %521 : vector<8x64xf32>
    %c2_205 = arith.constant 2 : index
    %c0_206 = arith.constant 0 : index
    %c0_207 = arith.constant 0 : index
    %523 = vector.load %arg1[%c2_205, %c0_206, %c0_207] : memref<8x8x64xf32, #tpu.memory_space<vmem>>, vector<1x8x64xf32>
    %524 = vector.shape_cast %523 : vector<1x8x64xf32> to vector<8x64xf32>
    %cst_208 = arith.constant 0.000000e+00 : f32
    %525 = vector.broadcast %cst_208 : f32 to vector<8x64xf32>
    %526 = arith.cmpf one, %524, %525 : vector<8x64xf32>
    %527 = arith.select %526, %522, %483 : vector<8x64xi1>, vector<8x64xf32>
    %528 = arith.select %526, %520, %484 : vector<8x64xi1>, vector<8x64xf32>
    %529 = arith.select %526, %522, %27 : vector<8x64xi1>, vector<8x64xf32>
    %530 = vector.extract_strided_slice %529 {offsets = [0, 0], sizes = [8, 32], strides = [1, 1]} : vector<8x64xf32> to vector<8x32xf32>
    %c2_209 = arith.constant 2 : index
    %c0_210 = arith.constant 0 : index
    %c0_211 = arith.constant 0 : index
    %531 = vector.load %arg13[%c2_209, %c0_210, %c0_211] : memref<8x8x64xf32, #tpu.memory_space<vmem>>, vector<1x8x32xf32>
    %532 = vector.shape_cast %531 : vector<1x8x32xf32> to vector<8x32xf32>
    %533 = vector.shape_cast %530 : vector<8x32xf32> to vector<1x8x32xf32>
    tpu.vector_store %arg13[%c2_209, %c0_210, %c0_211], %533 {strides = array<i32>} : memref<8x8x64xf32, #tpu.memory_space<vmem>>, vector<1x8x32xf32>,
    %534 = vector.extract_strided_slice %529 {offsets = [0, 32], sizes = [8, 32], strides = [1, 1]} : vector<8x64xf32> to vector<8x32xf32>
    %c5_212 = arith.constant 5 : index
    %c0_213 = arith.constant 0 : index
    %c32_214 = arith.constant 32 : index
    %535 = vector.load %arg13[%c5_212, %c0_213, %c32_214] : memref<8x8x64xf32, #tpu.memory_space<vmem>>, vector<1x8x32xf32>
    %536 = vector.shape_cast %535 : vector<1x8x32xf32> to vector<8x32xf32>
    %537 = vector.shape_cast %534 : vector<8x32xf32> to vector<1x8x32xf32>
    tpu.vector_store %arg13[%c5_212, %c0_213, %c32_214], %537 {strides = array<i32>} : memref<8x8x64xf32, #tpu.memory_space<vmem>>, vector<1x8x32xf32>,
    %538 = arith.truncf %527 : vector<8x64xf32> to vector<8x64xbf16>
    %cst_215 = arith.constant dense<0.000000e+00> : vector<8x256xf32>
    %539 = tpu.matmul %538, %405, %cst_215 {dimension_numbers = #tpu.dot_dimension_numbers<[1], [0], [0], [1], [0, 0, 1, 1], [], []>} : vector<8x64xbf16>, vector<64x256xbf16>, vector<8x256xf32> -> vector<8x256xf32>
    %c3_216 = arith.constant 3 : index
    %c0_217 = arith.constant 0 : index
    %c0_218 = arith.constant 0 : index
    %540 = vector.load %arg11[%c3_216, %c0_217, %c0_218] : memref<8x8x256xf32, #tpu.memory_space<vmem>>, vector<1x8x128xf32>
    %541 = vector.shape_cast %540 : vector<1x8x128xf32> to vector<8x128xf32>
    %c4_219 = arith.constant 4 : index
    %c0_220 = arith.constant 0 : index
    %c128_221 = arith.constant 128 : index
    %542 = vector.load %arg11[%c4_219, %c0_220, %c128_221] : memref<8x8x256xf32, #tpu.memory_space<vmem>>, vector<1x8x128xf32>
    %543 = vector.shape_cast %542 : vector<1x8x128xf32> to vector<8x128xf32>
    %544 = tpu.concatenate %541, %543 in 1 : vector<8x128xf32>, vector<8x128xf32> -> vector<8x256xf32>
    %545 = arith.addf %539, %544 : vector<8x256xf32>
    %546 = arith.mulf %24, %545 : vector<8x256xf32>
    %547 = math.tanh %546 : vector<8x256xf32>
    %548 = arith.mulf %24, %547 : vector<8x256xf32>
    %549 = arith.addf %548, %26 : vector<8x256xf32>
    %550 = vector.extract_strided_slice %549 {offsets = [0, 0], sizes = [8, 32], strides = [1, 1]} : vector<8x256xf32> to vector<8x32xf32>
    %551 = vector.extract_strided_slice %549 {offsets = [0, 128], sizes = [8, 32], strides = [1, 1]} : vector<8x256xf32> to vector<8x32xf32>
    %552 = tpu.concatenate %550, %551 in 1 : vector<8x32xf32>, vector<8x32xf32> -> vector<8x64xf32>
    %553 = vector.extract_strided_slice %549 {offsets = [0, 32], sizes = [8, 32], strides = [1, 1]} : vector<8x256xf32> to vector<8x32xf32>
    %554 = vector.extract_strided_slice %549 {offsets = [0, 160], sizes = [8, 32], strides = [1, 1]} : vector<8x256xf32> to vector<8x32xf32>
    %555 = tpu.concatenate %553, %554 in 1 : vector<8x32xf32>, vector<8x32xf32> -> vector<8x64xf32>
    %556 = vector.extract_strided_slice %549 {offsets = [0, 64], sizes = [8, 32], strides = [1, 1]} : vector<8x256xf32> to vector<8x32xf32>
    %557 = vector.extract_strided_slice %549 {offsets = [0, 192], sizes = [8, 32], strides = [1, 1]} : vector<8x256xf32> to vector<8x32xf32>
    %558 = tpu.concatenate %556, %557 in 1 : vector<8x32xf32>, vector<8x32xf32> -> vector<8x64xf32>
    %559 = vector.extract_strided_slice %549 {offsets = [0, 96], sizes = [8, 32], strides = [1, 1]} : vector<8x256xf32> to vector<8x32xf32>
    %560 = vector.extract_strided_slice %549 {offsets = [0, 224], sizes = [8, 32], strides = [1, 1]} : vector<8x256xf32> to vector<8x32xf32>
    %561 = tpu.concatenate %559, %560 in 1 : vector<8x32xf32>, vector<8x32xf32> -> vector<8x64xf32>
    %562 = arith.mulf %555, %528 : vector<8x64xf32>
    %563 = arith.mulf %552, %558 : vector<8x64xf32>
    %564 = arith.addf %562, %563 : vector<8x64xf32>
    %565 = math.tanh %564 : vector<8x64xf32>
    %566 = arith.mulf %561, %565 : vector<8x64xf32>
    %c3_222 = arith.constant 3 : index
    %c0_223 = arith.constant 0 : index
    %c0_224 = arith.constant 0 : index
    %567 = vector.load %arg1[%c3_222, %c0_223, %c0_224] : memref<8x8x64xf32, #tpu.memory_space<vmem>>, vector<1x8x64xf32>
    %568 = vector.shape_cast %567 : vector<1x8x64xf32> to vector<8x64xf32>
    %cst_225 = arith.constant 0.000000e+00 : f32
    %569 = vector.broadcast %cst_225 : f32 to vector<8x64xf32>
    %570 = arith.cmpf one, %568, %569 : vector<8x64xf32>
    %571 = arith.select %570, %566, %527 : vector<8x64xi1>, vector<8x64xf32>
    %572 = arith.select %570, %564, %528 : vector<8x64xi1>, vector<8x64xf32>
    %573 = arith.select %570, %566, %27 : vector<8x64xi1>, vector<8x64xf32>
    %574 = vector.extract_strided_slice %573 {offsets = [0, 0], sizes = [8, 32], strides = [1, 1]} : vector<8x64xf32> to vector<8x32xf32>
    %c3_226 = arith.constant 3 : index
    %c0_227 = arith.constant 0 : index
    %c0_228 = arith.constant 0 : index
    %575 = vector.load %arg13[%c3_226, %c0_227, %c0_228] : memref<8x8x64xf32, #tpu.memory_space<vmem>>, vector<1x8x32xf32>
    %576 = vector.shape_cast %575 : vector<1x8x32xf32> to vector<8x32xf32>
    %577 = vector.shape_cast %574 : vector<8x32xf32> to vector<1x8x32xf32>
    tpu.vector_store %arg13[%c3_226, %c0_227, %c0_228], %577 {strides = array<i32>} : memref<8x8x64xf32, #tpu.memory_space<vmem>>, vector<1x8x32xf32>,
    %578 = vector.extract_strided_slice %573 {offsets = [0, 32], sizes = [8, 32], strides = [1, 1]} : vector<8x64xf32> to vector<8x32xf32>
    %c4_229 = arith.constant 4 : index
    %c0_230 = arith.constant 0 : index
    %c32_231 = arith.constant 32 : index
    %579 = vector.load %arg13[%c4_229, %c0_230, %c32_231] : memref<8x8x64xf32, #tpu.memory_space<vmem>>, vector<1x8x32xf32>
    %580 = vector.shape_cast %579 : vector<1x8x32xf32> to vector<8x32xf32>
    %581 = vector.shape_cast %578 : vector<8x32xf32> to vector<1x8x32xf32>
    tpu.vector_store %arg13[%c4_229, %c0_230, %c32_231], %581 {strides = array<i32>} : memref<8x8x64xf32, #tpu.memory_space<vmem>>, vector<1x8x32xf32>,
    %582 = arith.truncf %571 : vector<8x64xf32> to vector<8x64xbf16>
    %cst_232 = arith.constant dense<0.000000e+00> : vector<8x256xf32>
    %583 = tpu.matmul %582, %405, %cst_232 {dimension_numbers = #tpu.dot_dimension_numbers<[1], [0], [0], [1], [0, 0, 1, 1], [], []>} : vector<8x64xbf16>, vector<64x256xbf16>, vector<8x256xf32> -> vector<8x256xf32>
    %c4_233 = arith.constant 4 : index
    %c0_234 = arith.constant 0 : index
    %c0_235 = arith.constant 0 : index
    %584 = vector.load %arg11[%c4_233, %c0_234, %c0_235] : memref<8x8x256xf32, #tpu.memory_space<vmem>>, vector<1x8x128xf32>
    %585 = vector.shape_cast %584 : vector<1x8x128xf32> to vector<8x128xf32>
    %c3_236 = arith.constant 3 : index
    %c0_237 = arith.constant 0 : index
    %c128_238 = arith.constant 128 : index
    %586 = vector.load %arg11[%c3_236, %c0_237, %c128_238] : memref<8x8x256xf32, #tpu.memory_space<vmem>>, vector<1x8x128xf32>
    %587 = vector.shape_cast %586 : vector<1x8x128xf32> to vector<8x128xf32>
    %588 = tpu.concatenate %585, %587 in 1 : vector<8x128xf32>, vector<8x128xf32> -> vector<8x256xf32>
    %589 = arith.addf %583, %588 : vector<8x256xf32>
    %590 = arith.mulf %24, %589 : vector<8x256xf32>
    %591 = math.tanh %590 : vector<8x256xf32>
    %592 = arith.mulf %24, %591 : vector<8x256xf32>
    %593 = arith.addf %592, %26 : vector<8x256xf32>
    %594 = vector.extract_strided_slice %593 {offsets = [0, 0], sizes = [8, 32], strides = [1, 1]} : vector<8x256xf32> to vector<8x32xf32>
    %595 = vector.extract_strided_slice %593 {offsets = [0, 128], sizes = [8, 32], strides = [1, 1]} : vector<8x256xf32> to vector<8x32xf32>
    %596 = tpu.concatenate %594, %595 in 1 : vector<8x32xf32>, vector<8x32xf32> -> vector<8x64xf32>
    %597 = vector.extract_strided_slice %593 {offsets = [0, 32], sizes = [8, 32], strides = [1, 1]} : vector<8x256xf32> to vector<8x32xf32>
    %598 = vector.extract_strided_slice %593 {offsets = [0, 160], sizes = [8, 32], strides = [1, 1]} : vector<8x256xf32> to vector<8x32xf32>
    %599 = tpu.concatenate %597, %598 in 1 : vector<8x32xf32>, vector<8x32xf32> -> vector<8x64xf32>
    %600 = vector.extract_strided_slice %593 {offsets = [0, 64], sizes = [8, 32], strides = [1, 1]} : vector<8x256xf32> to vector<8x32xf32>
    %601 = vector.extract_strided_slice %593 {offsets = [0, 192], sizes = [8, 32], strides = [1, 1]} : vector<8x256xf32> to vector<8x32xf32>
    %602 = tpu.concatenate %600, %601 in 1 : vector<8x32xf32>, vector<8x32xf32> -> vector<8x64xf32>
    %603 = vector.extract_strided_slice %593 {offsets = [0, 96], sizes = [8, 32], strides = [1, 1]} : vector<8x256xf32> to vector<8x32xf32>
    %604 = vector.extract_strided_slice %593 {offsets = [0, 224], sizes = [8, 32], strides = [1, 1]} : vector<8x256xf32> to vector<8x32xf32>
    %605 = tpu.concatenate %603, %604 in 1 : vector<8x32xf32>, vector<8x32xf32> -> vector<8x64xf32>
    %606 = arith.mulf %599, %572 : vector<8x64xf32>
    %607 = arith.mulf %596, %602 : vector<8x64xf32>
    %608 = arith.addf %606, %607 : vector<8x64xf32>
    %609 = math.tanh %608 : vector<8x64xf32>
    %610 = arith.mulf %605, %609 : vector<8x64xf32>
    %c4_239 = arith.constant 4 : index
    %c0_240 = arith.constant 0 : index
    %c0_241 = arith.constant 0 : index
    %611 = vector.load %arg1[%c4_239, %c0_240, %c0_241] : memref<8x8x64xf32, #tpu.memory_space<vmem>>, vector<1x8x64xf32>
    %612 = vector.shape_cast %611 : vector<1x8x64xf32> to vector<8x64xf32>
    %cst_242 = arith.constant 0.000000e+00 : f32
    %613 = vector.broadcast %cst_242 : f32 to vector<8x64xf32>
    %614 = arith.cmpf one, %612, %613 : vector<8x64xf32>
    %615 = arith.select %614, %610, %571 : vector<8x64xi1>, vector<8x64xf32>
    %616 = arith.select %614, %608, %572 : vector<8x64xi1>, vector<8x64xf32>
    %617 = arith.select %614, %610, %27 : vector<8x64xi1>, vector<8x64xf32>
    %618 = vector.extract_strided_slice %617 {offsets = [0, 0], sizes = [8, 32], strides = [1, 1]} : vector<8x64xf32> to vector<8x32xf32>
    %c4_243 = arith.constant 4 : index
    %c0_244 = arith.constant 0 : index
    %c0_245 = arith.constant 0 : index
    %619 = vector.load %arg13[%c4_243, %c0_244, %c0_245] : memref<8x8x64xf32, #tpu.memory_space<vmem>>, vector<1x8x32xf32>
    %620 = vector.shape_cast %619 : vector<1x8x32xf32> to vector<8x32xf32>
    %621 = vector.shape_cast %618 : vector<8x32xf32> to vector<1x8x32xf32>
    tpu.vector_store %arg13[%c4_243, %c0_244, %c0_245], %621 {strides = array<i32>} : memref<8x8x64xf32, #tpu.memory_space<vmem>>, vector<1x8x32xf32>,
    %622 = vector.extract_strided_slice %617 {offsets = [0, 32], sizes = [8, 32], strides = [1, 1]} : vector<8x64xf32> to vector<8x32xf32>
    %c3_246 = arith.constant 3 : index
    %c0_247 = arith.constant 0 : index
    %c32_248 = arith.constant 32 : index
    %623 = vector.load %arg13[%c3_246, %c0_247, %c32_248] : memref<8x8x64xf32, #tpu.memory_space<vmem>>, vector<1x8x32xf32>
    %624 = vector.shape_cast %623 : vector<1x8x32xf32> to vector<8x32xf32>
    %625 = vector.shape_cast %622 : vector<8x32xf32> to vector<1x8x32xf32>
    tpu.vector_store %arg13[%c3_246, %c0_247, %c32_248], %625 {strides = array<i32>} : memref<8x8x64xf32, #tpu.memory_space<vmem>>, vector<1x8x32xf32>,
    %626 = arith.truncf %615 : vector<8x64xf32> to vector<8x64xbf16>
    %cst_249 = arith.constant dense<0.000000e+00> : vector<8x256xf32>
    %627 = tpu.matmul %626, %405, %cst_249 {dimension_numbers = #tpu.dot_dimension_numbers<[1], [0], [0], [1], [0, 0, 1, 1], [], []>} : vector<8x64xbf16>, vector<64x256xbf16>, vector<8x256xf32> -> vector<8x256xf32>
    %c5_250 = arith.constant 5 : index
    %c0_251 = arith.constant 0 : index
    %c0_252 = arith.constant 0 : index
    %628 = vector.load %arg11[%c5_250, %c0_251, %c0_252] : memref<8x8x256xf32, #tpu.memory_space<vmem>>, vector<1x8x128xf32>
    %629 = vector.shape_cast %628 : vector<1x8x128xf32> to vector<8x128xf32>
    %c2_253 = arith.constant 2 : index
    %c0_254 = arith.constant 0 : index
    %c128_255 = arith.constant 128 : index
    %630 = vector.load %arg11[%c2_253, %c0_254, %c128_255] : memref<8x8x256xf32, #tpu.memory_space<vmem>>, vector<1x8x128xf32>
    %631 = vector.shape_cast %630 : vector<1x8x128xf32> to vector<8x128xf32>
    %632 = tpu.concatenate %629, %631 in 1 : vector<8x128xf32>, vector<8x128xf32> -> vector<8x256xf32>
    %633 = arith.addf %627, %632 : vector<8x256xf32>
    %634 = arith.mulf %24, %633 : vector<8x256xf32>
    %635 = math.tanh %634 : vector<8x256xf32>
    %636 = arith.mulf %24, %635 : vector<8x256xf32>
    %637 = arith.addf %636, %26 : vector<8x256xf32>
    %638 = vector.extract_strided_slice %637 {offsets = [0, 0], sizes = [8, 32], strides = [1, 1]} : vector<8x256xf32> to vector<8x32xf32>
    %639 = vector.extract_strided_slice %637 {offsets = [0, 128], sizes = [8, 32], strides = [1, 1]} : vector<8x256xf32> to vector<8x32xf32>
    %640 = tpu.concatenate %638, %639 in 1 : vector<8x32xf32>, vector<8x32xf32> -> vector<8x64xf32>
    %641 = vector.extract_strided_slice %637 {offsets = [0, 32], sizes = [8, 32], strides = [1, 1]} : vector<8x256xf32> to vector<8x32xf32>
    %642 = vector.extract_strided_slice %637 {offsets = [0, 160], sizes = [8, 32], strides = [1, 1]} : vector<8x256xf32> to vector<8x32xf32>
    %643 = tpu.concatenate %641, %642 in 1 : vector<8x32xf32>, vector<8x32xf32> -> vector<8x64xf32>
    %644 = vector.extract_strided_slice %637 {offsets = [0, 64], sizes = [8, 32], strides = [1, 1]} : vector<8x256xf32> to vector<8x32xf32>
    %645 = vector.extract_strided_slice %637 {offsets = [0, 192], sizes = [8, 32], strides = [1, 1]} : vector<8x256xf32> to vector<8x32xf32>
    %646 = tpu.concatenate %644, %645 in 1 : vector<8x32xf32>, vector<8x32xf32> -> vector<8x64xf32>
    %647 = vector.extract_strided_slice %637 {offsets = [0, 96], sizes = [8, 32], strides = [1, 1]} : vector<8x256xf32> to vector<8x32xf32>
    %648 = vector.extract_strided_slice %637 {offsets = [0, 224], sizes = [8, 32], strides = [1, 1]} : vector<8x256xf32> to vector<8x32xf32>
    %649 = tpu.concatenate %647, %648 in 1 : vector<8x32xf32>, vector<8x32xf32> -> vector<8x64xf32>
    %650 = arith.mulf %643, %616 : vector<8x64xf32>
    %651 = arith.mulf %640, %646 : vector<8x64xf32>
    %652 = arith.addf %650, %651 : vector<8x64xf32>
    %653 = math.tanh %652 : vector<8x64xf32>
    %654 = arith.mulf %649, %653 : vector<8x64xf32>
    %c5_256 = arith.constant 5 : index
    %c0_257 = arith.constant 0 : index
    %c0_258 = arith.constant 0 : index
    %655 = vector.load %arg1[%c5_256, %c0_257, %c0_258] : memref<8x8x64xf32, #tpu.memory_space<vmem>>, vector<1x8x64xf32>
    %656 = vector.shape_cast %655 : vector<1x8x64xf32> to vector<8x64xf32>
    %cst_259 = arith.constant 0.000000e+00 : f32
    %657 = vector.broadcast %cst_259 : f32 to vector<8x64xf32>
    %658 = arith.cmpf one, %656, %657 : vector<8x64xf32>
    %659 = arith.select %658, %654, %615 : vector<8x64xi1>, vector<8x64xf32>
    %660 = arith.select %658, %652, %616 : vector<8x64xi1>, vector<8x64xf32>
    %661 = arith.select %658, %654, %27 : vector<8x64xi1>, vector<8x64xf32>
    %662 = vector.extract_strided_slice %661 {offsets = [0, 0], sizes = [8, 32], strides = [1, 1]} : vector<8x64xf32> to vector<8x32xf32>
    %c5_260 = arith.constant 5 : index
    %c0_261 = arith.constant 0 : index
    %c0_262 = arith.constant 0 : index
    %663 = vector.load %arg13[%c5_260, %c0_261, %c0_262] : memref<8x8x64xf32, #tpu.memory_space<vmem>>, vector<1x8x32xf32>
    %664 = vector.shape_cast %663 : vector<1x8x32xf32> to vector<8x32xf32>
    %665 = vector.shape_cast %662 : vector<8x32xf32> to vector<1x8x32xf32>
    tpu.vector_store %arg13[%c5_260, %c0_261, %c0_262], %665 {strides = array<i32>} : memref<8x8x64xf32, #tpu.memory_space<vmem>>, vector<1x8x32xf32>,
    %666 = vector.extract_strided_slice %661 {offsets = [0, 32], sizes = [8, 32], strides = [1, 1]} : vector<8x64xf32> to vector<8x32xf32>
    %c2_263 = arith.constant 2 : index
    %c0_264 = arith.constant 0 : index
    %c32_265 = arith.constant 32 : index
    %667 = vector.load %arg13[%c2_263, %c0_264, %c32_265] : memref<8x8x64xf32, #tpu.memory_space<vmem>>, vector<1x8x32xf32>
    %668 = vector.shape_cast %667 : vector<1x8x32xf32> to vector<8x32xf32>
    %669 = vector.shape_cast %666 : vector<8x32xf32> to vector<1x8x32xf32>
    tpu.vector_store %arg13[%c2_263, %c0_264, %c32_265], %669 {strides = array<i32>} : memref<8x8x64xf32, #tpu.memory_space<vmem>>, vector<1x8x32xf32>,
    %670 = arith.truncf %659 : vector<8x64xf32> to vector<8x64xbf16>
    %cst_266 = arith.constant dense<0.000000e+00> : vector<8x256xf32>
    %671 = tpu.matmul %670, %405, %cst_266 {dimension_numbers = #tpu.dot_dimension_numbers<[1], [0], [0], [1], [0, 0, 1, 1], [], []>} : vector<8x64xbf16>, vector<64x256xbf16>, vector<8x256xf32> -> vector<8x256xf32>
    %c6_267 = arith.constant 6 : index
    %c0_268 = arith.constant 0 : index
    %c0_269 = arith.constant 0 : index
    %672 = vector.load %arg11[%c6_267, %c0_268, %c0_269] : memref<8x8x256xf32, #tpu.memory_space<vmem>>, vector<1x8x128xf32>
    %673 = vector.shape_cast %672 : vector<1x8x128xf32> to vector<8x128xf32>
    %c1_270 = arith.constant 1 : index
    %c0_271 = arith.constant 0 : index
    %c128_272 = arith.constant 128 : index
    %674 = vector.load %arg11[%c1_270, %c0_271, %c128_272] : memref<8x8x256xf32, #tpu.memory_space<vmem>>, vector<1x8x128xf32>
    %675 = vector.shape_cast %674 : vector<1x8x128xf32> to vector<8x128xf32>
    %676 = tpu.concatenate %673, %675 in 1 : vector<8x128xf32>, vector<8x128xf32> -> vector<8x256xf32>
    %677 = arith.addf %671, %676 : vector<8x256xf32>
    %678 = arith.mulf %24, %677 : vector<8x256xf32>
    %679 = math.tanh %678 : vector<8x256xf32>
    %680 = arith.mulf %24, %679 : vector<8x256xf32>
    %681 = arith.addf %680, %26 : vector<8x256xf32>
    %682 = vector.extract_strided_slice %681 {offsets = [0, 0], sizes = [8, 32], strides = [1, 1]} : vector<8x256xf32> to vector<8x32xf32>
    %683 = vector.extract_strided_slice %681 {offsets = [0, 128], sizes = [8, 32], strides = [1, 1]} : vector<8x256xf32> to vector<8x32xf32>
    %684 = tpu.concatenate %682, %683 in 1 : vector<8x32xf32>, vector<8x32xf32> -> vector<8x64xf32>
    %685 = vector.extract_strided_slice %681 {offsets = [0, 32], sizes = [8, 32], strides = [1, 1]} : vector<8x256xf32> to vector<8x32xf32>
    %686 = vector.extract_strided_slice %681 {offsets = [0, 160], sizes = [8, 32], strides = [1, 1]} : vector<8x256xf32> to vector<8x32xf32>
    %687 = tpu.concatenate %685, %686 in 1 : vector<8x32xf32>, vector<8x32xf32> -> vector<8x64xf32>
    %688 = vector.extract_strided_slice %681 {offsets = [0, 64], sizes = [8, 32], strides = [1, 1]} : vector<8x256xf32> to vector<8x32xf32>
    %689 = vector.extract_strided_slice %681 {offsets = [0, 192], sizes = [8, 32], strides = [1, 1]} : vector<8x256xf32> to vector<8x32xf32>
    %690 = tpu.concatenate %688, %689 in 1 : vector<8x32xf32>, vector<8x32xf32> -> vector<8x64xf32>
    %691 = vector.extract_strided_slice %681 {offsets = [0, 96], sizes = [8, 32], strides = [1, 1]} : vector<8x256xf32> to vector<8x32xf32>
    %692 = vector.extract_strided_slice %681 {offsets = [0, 224], sizes = [8, 32], strides = [1, 1]} : vector<8x256xf32> to vector<8x32xf32>
    %693 = tpu.concatenate %691, %692 in 1 : vector<8x32xf32>, vector<8x32xf32> -> vector<8x64xf32>
    %694 = arith.mulf %687, %660 : vector<8x64xf32>
    %695 = arith.mulf %684, %690 : vector<8x64xf32>
    %696 = arith.addf %694, %695 : vector<8x64xf32>
    %697 = math.tanh %696 : vector<8x64xf32>
    %698 = arith.mulf %693, %697 : vector<8x64xf32>
    %c6_273 = arith.constant 6 : index
    %c0_274 = arith.constant 0 : index
    %c0_275 = arith.constant 0 : index
    %699 = vector.load %arg1[%c6_273, %c0_274, %c0_275] : memref<8x8x64xf32, #tpu.memory_space<vmem>>, vector<1x8x64xf32>
    %700 = vector.shape_cast %699 : vector<1x8x64xf32> to vector<8x64xf32>
    %cst_276 = arith.constant 0.000000e+00 : f32
    %701 = vector.broadcast %cst_276 : f32 to vector<8x64xf32>
    %702 = arith.cmpf one, %700, %701 : vector<8x64xf32>
    %703 = arith.select %702, %698, %659 : vector<8x64xi1>, vector<8x64xf32>
    %704 = arith.select %702, %696, %660 : vector<8x64xi1>, vector<8x64xf32>
    %705 = arith.select %702, %698, %27 : vector<8x64xi1>, vector<8x64xf32>
    %706 = vector.extract_strided_slice %705 {offsets = [0, 0], sizes = [8, 32], strides = [1, 1]} : vector<8x64xf32> to vector<8x32xf32>
    %c6_277 = arith.constant 6 : index
    %c0_278 = arith.constant 0 : index
    %c0_279 = arith.constant 0 : index
    %707 = vector.load %arg13[%c6_277, %c0_278, %c0_279] : memref<8x8x64xf32, #tpu.memory_space<vmem>>, vector<1x8x32xf32>
    %708 = vector.shape_cast %707 : vector<1x8x32xf32> to vector<8x32xf32>
    %709 = vector.shape_cast %706 : vector<8x32xf32> to vector<1x8x32xf32>
    tpu.vector_store %arg13[%c6_277, %c0_278, %c0_279], %709 {strides = array<i32>} : memref<8x8x64xf32, #tpu.memory_space<vmem>>, vector<1x8x32xf32>,
    %710 = vector.extract_strided_slice %705 {offsets = [0, 32], sizes = [8, 32], strides = [1, 1]} : vector<8x64xf32> to vector<8x32xf32>
    %c1_280 = arith.constant 1 : index
    %c0_281 = arith.constant 0 : index
    %c32_282 = arith.constant 32 : index
    %711 = vector.load %arg13[%c1_280, %c0_281, %c32_282] : memref<8x8x64xf32, #tpu.memory_space<vmem>>, vector<1x8x32xf32>
    %712 = vector.shape_cast %711 : vector<1x8x32xf32> to vector<8x32xf32>
    %713 = vector.shape_cast %710 : vector<8x32xf32> to vector<1x8x32xf32>
    tpu.vector_store %arg13[%c1_280, %c0_281, %c32_282], %713 {strides = array<i32>} : memref<8x8x64xf32, #tpu.memory_space<vmem>>, vector<1x8x32xf32>,
    %714 = arith.truncf %703 : vector<8x64xf32> to vector<8x64xbf16>
    %cst_283 = arith.constant dense<0.000000e+00> : vector<8x256xf32>
    %715 = tpu.matmul %714, %405, %cst_283 {dimension_numbers = #tpu.dot_dimension_numbers<[1], [0], [0], [1], [0, 0, 1, 1], [], []>} : vector<8x64xbf16>, vector<64x256xbf16>, vector<8x256xf32> -> vector<8x256xf32>
    %c7_284 = arith.constant 7 : index
    %c0_285 = arith.constant 0 : index
    %c0_286 = arith.constant 0 : index
    %716 = vector.load %arg11[%c7_284, %c0_285, %c0_286] : memref<8x8x256xf32, #tpu.memory_space<vmem>>, vector<1x8x128xf32>
    %717 = vector.shape_cast %716 : vector<1x8x128xf32> to vector<8x128xf32>
    %c0_287 = arith.constant 0 : index
    %c0_288 = arith.constant 0 : index
    %c128_289 = arith.constant 128 : index
    %718 = vector.load %arg11[%c0_287, %c0_288, %c128_289] : memref<8x8x256xf32, #tpu.memory_space<vmem>>, vector<1x8x128xf32>
    %719 = vector.shape_cast %718 : vector<1x8x128xf32> to vector<8x128xf32>
    %720 = tpu.concatenate %717, %719 in 1 : vector<8x128xf32>, vector<8x128xf32> -> vector<8x256xf32>
    %721 = arith.addf %715, %720 : vector<8x256xf32>
    %722 = arith.mulf %24, %721 : vector<8x256xf32>
    %723 = math.tanh %722 : vector<8x256xf32>
    %724 = arith.mulf %24, %723 : vector<8x256xf32>
    %725 = arith.addf %724, %26 : vector<8x256xf32>
    %726 = vector.extract_strided_slice %725 {offsets = [0, 0], sizes = [8, 32], strides = [1, 1]} : vector<8x256xf32> to vector<8x32xf32>
    %727 = vector.extract_strided_slice %725 {offsets = [0, 128], sizes = [8, 32], strides = [1, 1]} : vector<8x256xf32> to vector<8x32xf32>
    %728 = tpu.concatenate %726, %727 in 1 : vector<8x32xf32>, vector<8x32xf32> -> vector<8x64xf32>
    %729 = vector.extract_strided_slice %725 {offsets = [0, 32], sizes = [8, 32], strides = [1, 1]} : vector<8x256xf32> to vector<8x32xf32>
    %730 = vector.extract_strided_slice %725 {offsets = [0, 160], sizes = [8, 32], strides = [1, 1]} : vector<8x256xf32> to vector<8x32xf32>
    %731 = tpu.concatenate %729, %730 in 1 : vector<8x32xf32>, vector<8x32xf32> -> vector<8x64xf32>
    %732 = vector.extract_strided_slice %725 {offsets = [0, 64], sizes = [8, 32], strides = [1, 1]} : vector<8x256xf32> to vector<8x32xf32>
    %733 = vector.extract_strided_slice %725 {offsets = [0, 192], sizes = [8, 32], strides = [1, 1]} : vector<8x256xf32> to vector<8x32xf32>
    %734 = tpu.concatenate %732, %733 in 1 : vector<8x32xf32>, vector<8x32xf32> -> vector<8x64xf32>
    %735 = vector.extract_strided_slice %725 {offsets = [0, 96], sizes = [8, 32], strides = [1, 1]} : vector<8x256xf32> to vector<8x32xf32>
    %736 = vector.extract_strided_slice %725 {offsets = [0, 224], sizes = [8, 32], strides = [1, 1]} : vector<8x256xf32> to vector<8x32xf32>
    %737 = tpu.concatenate %735, %736 in 1 : vector<8x32xf32>, vector<8x32xf32> -> vector<8x64xf32>
    %738 = arith.mulf %731, %704 : vector<8x64xf32>
    %739 = arith.mulf %728, %734 : vector<8x64xf32>
    %740 = arith.addf %738, %739 : vector<8x64xf32>
    %741 = math.tanh %740 : vector<8x64xf32>
    %742 = arith.mulf %737, %741 : vector<8x64xf32>
    %c7_290 = arith.constant 7 : index
    %c0_291 = arith.constant 0 : index
    %c0_292 = arith.constant 0 : index
    %743 = vector.load %arg1[%c7_290, %c0_291, %c0_292] : memref<8x8x64xf32, #tpu.memory_space<vmem>>, vector<1x8x64xf32>
    %744 = vector.shape_cast %743 : vector<1x8x64xf32> to vector<8x64xf32>
    %cst_293 = arith.constant 0.000000e+00 : f32
    %745 = vector.broadcast %cst_293 : f32 to vector<8x64xf32>
    %746 = arith.cmpf one, %744, %745 : vector<8x64xf32>
    %747 = arith.select %746, %742, %27 : vector<8x64xi1>, vector<8x64xf32>
    %748 = vector.extract_strided_slice %747 {offsets = [0, 0], sizes = [8, 32], strides = [1, 1]} : vector<8x64xf32> to vector<8x32xf32>
    %c7_294 = arith.constant 7 : index
    %c0_295 = arith.constant 0 : index
    %c0_296 = arith.constant 0 : index
    %749 = vector.load %arg13[%c7_294, %c0_295, %c0_296] : memref<8x8x64xf32, #tpu.memory_space<vmem>>, vector<1x8x32xf32>
    %750 = vector.shape_cast %749 : vector<1x8x32xf32> to vector<8x32xf32>
    %751 = vector.shape_cast %748 : vector<8x32xf32> to vector<1x8x32xf32>
    tpu.vector_store %arg13[%c7_294, %c0_295, %c0_296], %751 {strides = array<i32>} : memref<8x8x64xf32, #tpu.memory_space<vmem>>, vector<1x8x32xf32>,
    %752 = vector.extract_strided_slice %747 {offsets = [0, 32], sizes = [8, 32], strides = [1, 1]} : vector<8x64xf32> to vector<8x32xf32>
    %c0_297 = arith.constant 0 : index
    %c0_298 = arith.constant 0 : index
    %c32_299 = arith.constant 32 : index
    %753 = vector.load %arg13[%c0_297, %c0_298, %c32_299] : memref<8x8x64xf32, #tpu.memory_space<vmem>>, vector<1x8x32xf32>
    %754 = vector.shape_cast %753 : vector<1x8x32xf32> to vector<8x32xf32>
    %755 = vector.shape_cast %752 : vector<8x32xf32> to vector<1x8x32xf32>
    tpu.vector_store %arg13[%c0_297, %c0_298, %c32_299], %755 {strides = array<i32>} : memref<8x8x64xf32, #tpu.memory_space<vmem>>, vector<1x8x32xf32>,
    %c7_300 = arith.constant 7 : index
    %c0_301 = arith.constant 0 : index
    %c0_302 = arith.constant 0 : index
    %756 = vector.load %arg13[%c7_300, %c0_301, %c0_302] : memref<8x8x64xf32, #tpu.memory_space<vmem>>, vector<1x8x64xf32>
    %757 = vector.shape_cast %756 : vector<1x8x64xf32> to vector<8x64xf32>
    %cst_303 = arith.constant 0.000000e+00 : f32
    %758 = vector.broadcast %cst_303 : f32 to vector<8x64xf32>
    %759 = arith.maximumf %757, %758 : vector<8x64xf32>
    %c0_304 = arith.constant 0 : index
    %c0_305 = arith.constant 0 : index
    %760 = vector.load %arg5[%c0_304, %c0_305] : memref<64x32xf32, #tpu.memory_space<vmem>>, vector<64x32xf32>
    %cst_306 = arith.constant dense<0.000000e+00> : vector<8x32xf32>
    %761 = tpu.matmul %759, %760, %cst_306 {dimension_numbers = #tpu.dot_dimension_numbers<[1], [0], [0], [1], [0, 0, 1, 1], [], []>} : vector<8x64xf32>, vector<64x32xf32>, vector<8x32xf32> -> vector<8x32xf32>
    %c0_307 = arith.constant 0 : index
    %c0_308 = arith.constant 0 : index
    %762 = vector.load %arg6[%c0_307, %c0_308] : memref<1x32xf32, #tpu.memory_space<vmem>>, vector<1x32xf32>
    %763 = vector.broadcast %762 : vector<1x32xf32> to vector<8x32xf32>
    %764 = arith.addf %761, %763 : vector<8x32xf32>
    %c0_309 = arith.constant 0 : index
    %c0_310 = arith.constant 0 : index
    %765 = vector.load %arg7[%c0_309, %c0_310] : memref<32x128xf32, #tpu.memory_space<vmem>>, vector<32x128xf32>
    %cst_311 = arith.constant dense<0.000000e+00> : vector<8x128xf32>
    %766 = tpu.matmul %764, %765, %cst_311 {dimension_numbers = #tpu.dot_dimension_numbers<[1], [0], [0], [1], [0, 0, 1, 1], [], []>} : vector<8x32xf32>, vector<32x128xf32>, vector<8x128xf32> -> vector<8x128xf32>
    %c0_312 = arith.constant 0 : index
    %c0_313 = arith.constant 0 : index
    %767 = vector.load %arg8[%c0_312, %c0_313] : memref<1x128xf32, #tpu.memory_space<vmem>>, vector<1x128xf32>
    %768 = vector.broadcast %767 : vector<1x128xf32> to vector<8x128xf32>
    %769 = arith.addf %766, %768 : vector<8x128xf32>
    %c0_314 = arith.constant 0 : index
    %c0_315 = arith.constant 0 : index
    %770 = vector.load %arg9[%c0_314, %c0_315] : memref<8x128xf32, #tpu.memory_space<vmem>>, vector<8x128xf32>
    tpu.vector_store %arg9[%c0_314, %c0_315], %769 {strides = array<i32>} : memref<8x128xf32, #tpu.memory_space<vmem>>, vector<8x128xf32>,
    return
  }
}

</mosaic_0001>

<llo_original>
// kernel: bilstm_forward.1
$region0: #{bilstm_forward.1}
  #allocation0 [shape = 'u32[]', space=smem, size = 0x4, offset = 0x4, fixed_abs, tag = 'smem constant byte address 0x4 - core index']
  #allocation1 [shape = 'u32[144,128]{1,0:T(1,128)}', space=vmem, size = 0x12000, scoped, tag = 'internal scratch']
  #allocation2 [shape = 'f32[8,8,256]{2,1,0:T(8,128)}', space=vmem, size = 0x10000, scoped, tag = 'scratch operand']
  #allocation3 [shape = 'f32[8,8,256]{2,1,0:T(8,128)}', space=vmem, size = 0x10000, scoped, tag = 'scratch operand']
  #allocation4 [shape = 'f32[8,8,64]{2,1,0:T(8,128)}', space=vmem, size = 0x8000, scoped, tag = 'scratch operand']
  #allocation5 [shape = 'f32[8,8,64]{2,1,0:T(8,128)}', space=vmem, size = 0x8000, scoped, tag = 'scratch operand']
  %s0 = inlined_call_operand.vmem [shape: f32[8,8,64], index: 0, kind: input, shape index: {}]
  %s1 = inlined_call_operand.hbm [shape: f32[8,8,64], index: 1, kind: input, shape index: {}]
  %s2 = inlined_call_operand.hbm [shape: bf16[2,64,256], index: 2, kind: input, shape index: {}]
  %s3 = inlined_call_operand.hbm [shape: bf16[2,64,256], index: 3, kind: input, shape index: {}]
  %s4 = inlined_call_operand.vmem [shape: f32[2,1,256], index: 4, kind: input, shape index: {}]
  %s5 = inlined_call_operand.vmem [shape: f32[64,32], index: 5, kind: input, shape index: {}]
  %s6 = inlined_call_operand.vmem [shape: f32[1,32], index: 6, kind: input, shape index: {}]
  %s7 = inlined_call_operand.vmem [shape: f32[32,128], index: 7, kind: input, shape index: {}]
  %s8 = inlined_call_operand.vmem [shape: f32[1,128], index: 8, kind: input, shape index: {}]
  %s9 = inlined_call_operand.vmem [shape: f32[8,128], index: 9, kind: output, shape index: {}]
  %s10 = sld [smem:[#allocation0]]
  $region58: #{bilstm_forward.1} parent=0
    _
  %s12 = ssub.s32 1, %s10
  %s13 = scalar_select 0, %s12, %s10
  $region1: #{bilstm_forward.1} parent=0
    #allocation6 [shape = 'u8[32768]{0}', space=vmem, size = 0x8000, scoped, tag = 'input window, operand 1, single buffered']
    #allocation7 [shape = 's32[1]{0}', space=sflag, size = 0x4, scoped, tag = 'scoped memory for bilstm_forward.1']
    #allocation8 [shape = 'u8[65536]{0}', space=vmem, size = 0x10000, scoped, tag = 'input window, operand 2, single buffered']
    #allocation9 [shape = 's32[1]{0}', space=sflag, size = 0x4, scoped, tag = 'scoped memory for bilstm_forward.1']
    #allocation10 [shape = 'u8[65536]{0}', space=vmem, size = 0x10000, scoped, tag = 'input window, operand 3, single buffered']
    %14 = vsyncpa [#allocation7], 0
    %15 = vsyncpa [#allocation9], 0
    // Predicated region
    $region2: #{bilstm_forward.1} parent=1 // pred_check
      _
    $region3: #{bilstm_forward.1} parent=1 // pred_check_branch
      %17 = sbr.rel (0) target = $region5
    $region4: #{bilstm_forward.1} parent=1 // pred_region
      _
    $region5: #{bilstm_forward.1} parent=1 // pred_fallthru
      _
    // Predicated region
    $region6: #{bilstm_forward.1} parent=1 // pred_check
      _
    $region7: #{bilstm_forward.1} parent=1 // pred_check_branch
      %19 = sbr.rel (0) target = $region9
    $region8: #{bilstm_forward.1} parent=1 // pred_region
      %s21 = ssub.s32 1024, 1024
      %22 = vsyncadd [#allocation7], %s21
      %s23 = sshll.u32 [#allocation6], 4
      %s24 = int_to_ptr.vmem [resolvable:$true] %s23
      %29 = dma.hbm_to_vmem [thread:$0]  %s1, 1024, %s24, [#allocation7], 128, 128, 8
    $region9: #{bilstm_forward.1} parent=1 // pred_fallthru
      _
    // Predicated region
    $region10: #{bilstm_forward.1} parent=1 // pred_check
      _
    $region11: #{bilstm_forward.1} parent=1 // pred_check_branch
      %31 = sbr.rel (0) target = $region13
    $region12: #{bilstm_forward.1} parent=1 // pred_region
      %s33 = ssub.s32 2048, 2048
      %34 = vsyncadd [#allocation9], %s33
      %s35 = sshll.u32 [#allocation8], 4
      %s36 = int_to_ptr.vmem [resolvable:$true] %s35
      %41 = dma.hbm_to_vmem [thread:$0]  %s2, 2048, %s36, [#allocation9], 128, 128, 8
    $region13: #{bilstm_forward.1} parent=1 // pred_fallthru
      _
    // Predicated region
    $region14: #{bilstm_forward.1} parent=1 // pred_check
      _
    $region15: #{bilstm_forward.1} parent=1 // pred_check_branch
      %43 = sbr.rel (0) target = $region17
    $region16: #{bilstm_forward.1} parent=1 // pred_region
      %s45 = ssub.s32 2048, 2048
      %46 = vsyncadd [#allocation9], %s45
      %s47 = sshll.u32 [#allocation10], 4
      %s48 = int_to_ptr.vmem [resolvable:$true] %s47
      %53 = dma.hbm_to_vmem [thread:$0]  %s3, 2048, %s48, [#allocation9], 128, 128, 8
    $region17: #{bilstm_forward.1} parent=1 // pred_fallthru
      _
    // Predicated region
    $region18: #{bilstm_forward.1} parent=1 // pred_check
      _
    $region19: #{bilstm_forward.1} parent=1 // pred_check_branch
      %55 = sbr.rel (0) target = $region21
    $region20: #{bilstm_forward.1} parent=1 // pred_region
      _
    $region21: #{bilstm_forward.1} parent=1 // pred_fallthru
      _
    // Predicated region
    $region22: #{bilstm_forward.1} parent=1 // pred_check
      _
    $region23: #{bilstm_forward.1} parent=1 // pred_check_branch
      %57 = sbr.rel (0) target = $region25
    $region24: #{bilstm_forward.1} parent=1 // pred_region
      _
    $region25: #{bilstm_forward.1} parent=1 // pred_fallthru
      _
    // Predicated region
    $region26: #{bilstm_forward.1} parent=1 // pred_check
      _
    $region27: #{bilstm_forward.1} parent=1 // pred_check_branch
      %59 = sbr.rel (0) target = $region29
    $region28: #{bilstm_forward.1} parent=1 // pred_region
      _
    $region29: #{bilstm_forward.1} parent=1 // pred_fallthru
      _
    // Predicated region
    $region30: #{bilstm_forward.1} parent=1 // pred_check
      _
    $region31: #{bilstm_forward.1} parent=1 // pred_check_branch
      %61 = sbr.rel (0) target = $region33
    $region32: #{bilstm_forward.1} parent=1 // pred_region
      _
    $region33: #{bilstm_forward.1} parent=1 // pred_fallthru
      _
    // Predicated region
    $region34: #{bilstm_forward.1} parent=1 // pred_check
      _
    $region35: #{bilstm_forward.1} parent=1 // pred_check_branch
      %63 = sbr.rel (0) target = $region37
    $region36: #{bilstm_forward.1} parent=1 // pred_region
      _
    $region37: #{bilstm_forward.1} parent=1 // pred_fallthru
      _
    // Predicated region
    $region38: #{bilstm_forward.1} parent=1 // pred_check
      _
    $region39: #{bilstm_forward.1} parent=1 // pred_check_branch
      %65 = sbr.rel (0) target = $region41
    $region40: #{bilstm_forward.1} parent=1 // pred_region
      %66 = dma.done [#allocation7], 1024
    $region41: #{bilstm_forward.1} parent=1 // pred_fallthru
      _
    // Predicated region
    $region42: #{bilstm_forward.1} parent=1 // pred_check
      _
    $region43: #{bilstm_forward.1} parent=1 // pred_check_branch
      %68 = sbr.rel (0) target = $region45
    $region44: #{bilstm_forward.1} parent=1 // pred_region
      %69 = dma.done [#allocation9], 2048
    $region45: #{bilstm_forward.1} parent=1 // pred_fallthru
      _
    // Predicated region
    $region46: #{bilstm_forward.1} parent=1 // pred_check
      _
    $region47: #{bilstm_forward.1} parent=1 // pred_check_branch
      %71 = sbr.rel (0) target = $region49
    $region48: #{bilstm_forward.1} parent=1 // pred_region
      %72 = dma.done [#allocation9], 2048
    $region49: #{bilstm_forward.1} parent=1 // pred_fallthru
      _
    %v74 = vlaneseq
    %v75 = vand.u32 %v74, 127
    %v76 = vadd.s32 %v75, 128
    %vm77 = vcmp.lt.s32.totalorder %v75, 0
    %v78 = vsub.s32 0, %v75
    %v79 = vsel %vm77, %v78, %v75
    %v80 = vshrl.u32 %v79, 7
    %v81 = vand.u32 %v79, 127
    %v82 = vsub.s32 0, %v81
    %v83 = vsel %vm77, %v82, %v81
    %vm84 = vcmp.lt.s32.totalorder %v76, 0
    %v85 = vsub.s32 0, %v76
    %v86 = vsel %vm84, %v85, %v76
    %v87 = vshrl.u32 %v86, 7
    %v88 = vand.u32 %v86, 127
    %v89 = vsub.s32 0, %v88
    %v90 = vsel %vm84, %v89, %v88
    %vm91 = vcmp.ne.s32.totalorder %v83, 0
    %vm92 = vcmp.ne.s32.totalorder %v90, 0
    %vm93 = vcmp.lt.s32.totalorder %v83, 0
    %vm94 = vcmp.lt.s32.totalorder %v90, 0
    %vm95 = vmand %vm93, %vm91
    %vm96 = vmand %vm94, %vm92
    %v97 = vadd.s32 %v83, 128
    %v98 = vadd.s32 %v90, 128
    %v99 = vsel %vm95, %v97, %v83
    %v100 = vsel %vm96, %v98, %v90
    %vm101 = vcmp.ge.s32.totalorder %v99, 64
    %vm102 = vcmp.ge.s32.totalorder %v100, 64
    %vm103 = vcmp.lt.s32.totalorder %v99, 96
    %vm104 = vcmp.lt.s32.totalorder %v100, 96
    %vm105 = vmand %vm101, %vm103
    %vm106 = vmand %vm102, %vm104
    %v107 = vsel %vm105, 1.0, 0.5
    %v108 = vsel %vm106, 1.0, 0.5
    %v109 = vsub.f32 1.0, %v107
    %v110 = vsub.f32 1.0, %v108
    %v111 = vld [vmem:[%s0] sm:$0xff]
    %v112 = vld [vmem:[%s0 + $0x8] sm:$0xff]
    %v113 = vld [vmem:[%s0 + $0x10] sm:$0xff]
    %v114 = vld [vmem:[%s0 + $0x18] sm:$0xff]
    %v115 = vld [vmem:[%s0 + $0x20] sm:$0xff]
    %v116 = vld [vmem:[%s0 + $0x28] sm:$0xff]
    %v117 = vld [vmem:[%s0 + $0x30] sm:$0xff]
    %v118 = vld [vmem:[%s0 + $0x38] sm:$0xff]
    %v119 = vpack.c.bf16 %v112, %v111
    %v120 = vpack.c.bf16 %v114, %v113
    %v121 = vpack.c.bf16 %v116, %v115
    %v122 = vpack.c.bf16 %v118, %v117
    %v123 = vld [vmem:[#allocation8] sm:$0xff]
    %v124 = vld [vmem:[#allocation8 + $0x8] sm:$0xff]
    %v125 = vld [vmem:[#allocation8 + $0x10] sm:$0xff]
    %v126 = vld [vmem:[#allocation8 + $0x18] sm:$0xff]
    %v127 = vld [vmem:[#allocation8 + $0x20] sm:$0xff]
    %v128 = vld [vmem:[#allocation8 + $0x28] sm:$0xff]
    %v129 = vld [vmem:[#allocation8 + $0x30] sm:$0xff]
    %v130 = vld [vmem:[#allocation8 + $0x38] sm:$0xff]
    %v131 = vld [vmem:[%s4] sm:$0x3]
    %v133 = vlaneseq
    %v134 = vshrl.u32 %v133, 7
    %v135 = vsub.s32 0, %v134
    %v136 = vrot.slane %v131, %v135
    %v137 = vlaneseq
    %v138 = vshrl.u32 %v137, 7
    %v139 = vsub.s32 1, %v138
    %v140 = vrot.slane %v131, %v139
    %v151 = vunpack.c.l.b16 %v123
    %v152 = vunpack.c.h.b16 %v123
    %v153 = vunpack.c.l.b16 %v124
    %v154 = vunpack.c.h.b16 %v124
    %v155 = vunpack.c.l.b16 %v125
    %v156 = vunpack.c.h.b16 %v125
    %v157 = vunpack.c.l.b16 %v126
    %v158 = vunpack.c.h.b16 %v126
    %v159 = vunpack.c.l.b16 %v127
    %v160 = vunpack.c.h.b16 %v127
    %v161 = vunpack.c.l.b16 %v128
    %v162 = vunpack.c.h.b16 %v128
    %v163 = vunpack.c.l.b16 %v129
    %v164 = vunpack.c.h.b16 %v129
    %v165 = vunpack.c.l.b16 %v130
    %v166 = vunpack.c.h.b16 %v130
    %v167 = vpack.c.b16 %v153, %v151
    %v168 = vpack.c.b16 %v154, %v152
    %v169 = vpack.c.b16 %v157, %v155
    %v170 = vpack.c.b16 %v158, %v156
    %v171 = vpack.c.b16 %v161, %v159
    %v172 = vpack.c.b16 %v162, %v160
    %v173 = vpack.c.b16 %v165, %v163
    %v174 = vpack.c.b16 %v166, %v164
    %vm183 = vcmask 523264
    %v185 = vsel %vm183, %v119, 0
    %v188 = vsel %vm183, %v120, 0
    %v191 = vsel %vm183, %v121, 0
    %v194 = vsel %vm183, %v122, 0
    %196 = vmatprep.subr.bf16.mxu0 %v168
    %197 = vmatpush1.bf16.msra.mxu0 %v167
    %198 = vmatprep.subr.bf16.mxu0 %v170
    %199 = vmatpush1.bf16.msra.mxu0 %v169
    %200 = vmatprep.subr.bf16.mxu0 %v172
    %201 = vmatpush1.bf16.msra.mxu0 %v171
    %202 = vmatprep.subr.bf16.mxu0 %v174
    %203 = vmatpush1.bf16.msra.mxu0 %v173
    %204 = vmatprep.subr.bf16.mxu0 0
    %205 = vmatpush1.bf16.msra.mxu0 0
    %206 = vmatprep.subr.bf16.mxu0 0
    %207 = vmatpush1.bf16.msra.mxu0 0
    %208 = vmatprep.subr.bf16.mxu0 0
    %209 = vmatpush1.bf16.msra.mxu0 0
    %210 = vmatprep.subr.bf16.mxu0 0
    %211 = vmatpush1.bf16.msra.mxu0 0
    %212 = vmatprep.subr.bf16.mxu0 0
    %213 = vmatpush1.bf16.msra.mxu0 0
    %214 = vmatprep.subr.bf16.mxu0 0
    %215 = vmatpush1.bf16.msra.mxu0 0
    %216 = vmatprep.subr.bf16.mxu0 0
    %217 = vmatpush1.bf16.msra.mxu0 0
    %218 = vmatprep.subr.bf16.mxu0 0
    %219 = vmatpush1.bf16.msra.mxu0 0
    %220 = vmatprep.subr.bf16.mxu0 0
    %221 = vmatpush1.bf16.msra.mxu0 0
    %222 = vmatprep.subr.bf16.mxu0 0
    %223 = vmatpush1.bf16.msra.mxu0 0
    %224 = vmatprep.subr.bf16.mxu0 0
    %225 = vmatpush1.bf16.msra.mxu0 0
    %226 = vmatprep.subr.bf16.mxu0 0
    %227 = vmatpush1.bf16.msra.mxu0 0
    %228 = vmatprep.mubr.bf16.mxu0 0
    %229 = vmatmul.mubr.bf16.gmra.mrb[0].mxu0 %v185
    %v230 = vpop.f32.mrb[0].mxu0
    %v231 = vadd.f32 %v136, %v230
    %v232 = vpop.f32.mrb[0].mxu0
    %v233 = vadd.f32 %v140, %v232
    %v234 = vpop.f32.mrb[0].mxu0
    %v235 = vadd.f32 %v136, %v234
    %v236 = vpop.f32.mrb[0].mxu0
    %v237 = vadd.f32 %v140, %v236
    %238 = vmatprep.mubr.bf16.mxu0 0
    %239 = vmatmul.mubr.bf16.gmra.mrb[0].mxu0 %v188
    %v240 = vpop.f32.mrb[0].mxu0
    %v241 = vadd.f32 %v136, %v240
    %v242 = vpop.f32.mrb[0].mxu0
    %v243 = vadd.f32 %v140, %v242
    %v244 = vpop.f32.mrb[0].mxu0
    %v245 = vadd.f32 %v136, %v244
    %v246 = vpop.f32.mrb[0].mxu0
    %v247 = vadd.f32 %v140, %v246
    %248 = vmatprep.mubr.bf16.mxu0 0
    %249 = vmatmul.mubr.bf16.gmra.mrb[0].mxu0 %v191
    %v250 = vpop.f32.mrb[0].mxu0
    %v251 = vadd.f32 %v136, %v250
    %v252 = vpop.f32.mrb[0].mxu0
    %v253 = vadd.f32 %v140, %v252
    %v254 = vpop.f32.mrb[0].mxu0
    %v255 = vadd.f32 %v136, %v254
    %v256 = vpop.f32.mrb[0].mxu0
    %v257 = vadd.f32 %v140, %v256
    %258 = vmatprep.mubr.bf16.mxu0 0
    %259 = vmatmul.mubr.bf16.gmra.mrb[0].mxu0 %v194
    %v260 = vpop.f32.mrb[0].mxu0
    %v261 = vadd.f32 %v136, %v260
    %v262 = vpop.f32.mrb[0].mxu0
    %v263 = vadd.f32 %v140, %v262
    %v264 = vpop.f32.mrb[0].mxu0
    %v265 = vadd.f32 %v136, %v264
    %v266 = vpop.f32.mrb[0].mxu0
    %v267 = vadd.f32 %v140, %v266
    %268 = vdwg.mxu0
    %269 = vst [vmem:[#allocation2] sm:$0xff] %v231
    %270 = vst [vmem:[#allocation2 + $0x8] sm:$0xff] %v233
    %271 = vst [vmem:[#allocation2 + $0x10] sm:$0xff] %v235
    %272 = vst [vmem:[#allocation2 + $0x18] sm:$0xff] %v237
    %273 = vst [vmem:[#allocation2 + $0x20] sm:$0xff] %v241
    %274 = vst [vmem:[#allocation2 + $0x28] sm:$0xff] %v243
    %275 = vst [vmem:[#allocation2 + $0x30] sm:$0xff] %v245
    %276 = vst [vmem:[#allocation2 + $0x38] sm:$0xff] %v247
    %277 = vst [vmem:[#allocation2 + $0x40] sm:$0xff] %v251
    %278 = vst [vmem:[#allocation2 + $0x48] sm:$0xff] %v253
    %279 = vst [vmem:[#allocation2 + $0x50] sm:$0xff] %v255
    %280 = vst [vmem:[#allocation2 + $0x58] sm:$0xff] %v257
    %281 = vst [vmem:[#allocation2 + $0x60] sm:$0xff] %v261
    %282 = vst [vmem:[#allocation2 + $0x68] sm:$0xff] %v263
    %283 = vst [vmem:[#allocation2 + $0x70] sm:$0xff] %v265
    %284 = vst [vmem:[#allocation2 + $0x78] sm:$0xff] %v267
    %v285 = vld [vmem:[#allocation10] sm:$0xff]
    %v286 = vld [vmem:[#allocation10 + $0x8] sm:$0xff]
    %v287 = vld [vmem:[#allocation10 + $0x10] sm:$0xff]
    %v288 = vld [vmem:[#allocation10 + $0x18] sm:$0xff]
    %v289 = vld [vmem:[#allocation10 + $0x20] sm:$0xff]
    %v290 = vld [vmem:[#allocation10 + $0x28] sm:$0xff]
    %v291 = vld [vmem:[#allocation10 + $0x30] sm:$0xff]
    %v292 = vld [vmem:[#allocation10 + $0x38] sm:$0xff]
    %v293 = vld [vmem:[#allocation2] sm:$0xff]
    %s294 = scalar_lea.vmem [#allocation2], 112
    %v295 = vld [vmem:[%s294 + $0x8] sm:$0xff]
    %v304 = vunpack.c.l.b16 %v285
    %v305 = vunpack.c.h.b16 %v285
    %v306 = vunpack.c.l.b16 %v286
    %v307 = vunpack.c.h.b16 %v286
    %v308 = vunpack.c.l.b16 %v287
    %v309 = vunpack.c.h.b16 %v287
    %v310 = vunpack.c.l.b16 %v288
    %v311 = vunpack.c.h.b16 %v288
    %v312 = vunpack.c.l.b16 %v289
    %v313 = vunpack.c.h.b16 %v289
    %v314 = vunpack.c.l.b16 %v290
    %v315 = vunpack.c.h.b16 %v290
    %v316 = vunpack.c.l.b16 %v291
    %v317 = vunpack.c.h.b16 %v291
    %v318 = vunpack.c.l.b16 %v292
    %v319 = vunpack.c.h.b16 %v292
    %v320 = vpack.c.b16 %v306, %v304
    %v321 = vpack.c.b16 %v307, %v305
    %v322 = vpack.c.b16 %v310, %v308
    %v323 = vpack.c.b16 %v311, %v309
    %v324 = vpack.c.b16 %v314, %v312
    %v325 = vpack.c.b16 %v315, %v313
    %v326 = vpack.c.b16 %v318, %v316
    %v327 = vpack.c.b16 %v319, %v317
    %v337 = vsel %vm183, 0, 0
    %339 = vmatprep.subr.bf16.mxu0 %v321
    %340 = vmatpush1.bf16.msra.mxu0 %v320
    %341 = vmatprep.subr.bf16.mxu0 %v323
    %342 = vmatpush1.bf16.msra.mxu0 %v322
    %343 = vmatprep.subr.bf16.mxu0 %v325
    %344 = vmatpush1.bf16.msra.mxu0 %v324
    %345 = vmatprep.subr.bf16.mxu0 %v327
    %346 = vmatpush1.bf16.msra.mxu0 %v326
    %347 = vmatprep.subr.bf16.mxu0 0
    %348 = vmatpush1.bf16.msra.mxu0 0
    %349 = vmatprep.subr.bf16.mxu0 0
    %350 = vmatpush1.bf16.msra.mxu0 0
    %351 = vmatprep.subr.bf16.mxu0 0
    %352 = vmatpush1.bf16.msra.mxu0 0
    %353 = vmatprep.subr.bf16.mxu0 0
    %354 = vmatpush1.bf16.msra.mxu0 0
    %355 = vmatprep.subr.bf16.mxu0 0
    %356 = vmatpush1.bf16.msra.mxu0 0
    %357 = vmatprep.subr.bf16.mxu0 0
    %358 = vmatpush1.bf16.msra.mxu0 0
    %359 = vmatprep.subr.bf16.mxu0 0
    %360 = vmatpush1.bf16.msra.mxu0 0
    %361 = vmatprep.subr.bf16.mxu0 0
    %362 = vmatpush1.bf16.msra.mxu0 0
    %363 = vmatprep.subr.bf16.mxu0 0
    %364 = vmatpush1.bf16.msra.mxu0 0
    %365 = vmatprep.subr.bf16.mxu0 0
    %366 = vmatpush1.bf16.msra.mxu0 0
    %367 = vmatprep.subr.bf16.mxu0 0
    %368 = vmatpush1.bf16.msra.mxu0 0
    %369 = vmatprep.subr.bf16.mxu0 0
    %370 = vmatpush1.bf16.msra.mxu0 0
    %371 = vmatprep.mubr.bf16.mxu0 0
    %372 = vmatmul.mubr.bf16.gmra.mrb[0].mxu0 %v337
    %v373 = vpop.f32.mrb[0].mxu0
    %v374 = vadd.f32 %v293, %v373
    %v375 = vpop.f32.mrb[0].mxu0
    %v376 = vadd.f32 %v295, %v375
    %v377 = vpop.f32.mrb[0].mxu0
    %v378 = vpop.f32.mrb[0].mxu0
    %379 = vdwg.mxu0
    %v380 = vmul.f32 %v107, %v374
    %v381 = vmul.f32 %v108, %v376
    %v382 = vtanh.pop %v380
    %v383 = vtanh.pop %v381
    %v384 = vmul.f32 %v107, %v382
    %v385 = vmul.f32 %v108, %v383
    %v386 = vadd.f32 %v384, %v109
    %v387 = vadd.f32 %v385, %v110
    %389 = vrot.lane.b32.xlu0 %v387, 32
    %v390 = vpop.permute.xlu0 %389
    %vm392 = vcmask 261120
    %v393 = vsel %vm392, %v386, %v390
    %395 = vrot.lane.b32.xlu0 %v386, 96
    %v396 = vpop.permute.xlu0 %395
    %v398 = vsel %vm392, %v396, %v387
    %399 = vrot.lane.b32.xlu0 %v386, 64
    %v400 = vpop.permute.xlu0 %399
    %402 = vrot.lane.b32.xlu0 %v387, 96
    %v403 = vpop.permute.xlu0 %402
    %v405 = vsel %vm392, %v400, %v403
    %406 = vrot.lane.b32.xlu0 %v386, 32
    %v407 = vpop.permute.xlu0 %406
    %409 = vrot.lane.b32.xlu0 %v387, 64
    %v410 = vpop.permute.xlu0 %409
    %v412 = vsel %vm392, %v407, %v410
    %v413 = vmul.f32 %v398, 0.0
    %v414 = vmul.f32 %v393, %v405
    %v415 = vadd.f32 %v413, %v414
    %v416 = vtanh.pop %v415
    %v417 = vmul.f32 %v412, %v416
    %v418 = vld [vmem:[#allocation6] sm:$0xff]
    %vm419 = vcmp.ne.f32.partialorder %v418, 0.0
    %v420 = vsel %vm419, %v417, 0.0
    %v421 = vsel %vm419, %v415, 0.0
    %422 = vst.msk [vmem:[#allocation4] sm:$0xff] %vm392, %v420
    %s423 = scalar_lea.vmem [#allocation4], 56
    %vm424 = vcmask 523520
    %425 = vst.msk [vmem:[%s423] sm:$0xff] %vm424, %v420
    %v426 = vpack.c.bf16 %v420, %v420
    %s427 = scalar_lea.vmem [#allocation2], 16
    %v428 = vld [vmem:[%s427] sm:$0xff]
    %s429 = scalar_lea.vmem [#allocation2], 96
    %v430 = vld [vmem:[%s429 + $0x8] sm:$0xff]
    %v432 = vsel %vm183, %v426, 0
    %434 = vmatprep.subr.bf16.mxu0 %v321
    %435 = vmatpush1.bf16.msra.mxu0 %v320
    %436 = vmatprep.subr.bf16.mxu0 %v323
    %437 = vmatpush1.bf16.msra.mxu0 %v322
    %438 = vmatprep.subr.bf16.mxu0 %v325
    %439 = vmatpush1.bf16.msra.mxu0 %v324
    %440 = vmatprep.subr.bf16.mxu0 %v327
    %441 = vmatpush1.bf16.msra.mxu0 %v326
    %442 = vmatprep.subr.bf16.mxu0 0
    %443 = vmatpush1.bf16.msra.mxu0 0
    %444 = vmatprep.subr.bf16.mxu0 0
    %445 = vmatpush1.bf16.msra.mxu0 0
    %446 = vmatprep.subr.bf16.mxu0 0
    %447 = vmatpush1.bf16.msra.mxu0 0
    %448 = vmatprep.subr.bf16.mxu0 0
    %449 = vmatpush1.bf16.msra.mxu0 0
    %450 = vmatprep.subr.bf16.mxu0 0
    %451 = vmatpush1.bf16.msra.mxu0 0
    %452 = vmatprep.subr.bf16.mxu0 0
    %453 = vmatpush1.bf16.msra.mxu0 0
    %454 = vmatprep.subr.bf16.mxu0 0
    %455 = vmatpush1.bf16.msra.mxu0 0
    %456 = vmatprep.subr.bf16.mxu0 0
    %457 = vmatpush1.bf16.msra.mxu0 0
    %458 = vmatprep.subr.bf16.mxu0 0
    %459 = vmatpush1.bf16.msra.mxu0 0
    %460 = vmatprep.subr.bf16.mxu0 0
    %461 = vmatpush1.bf16.msra.mxu0 0
    %462 = vmatprep.subr.bf16.mxu0 0
    %463 = vmatpush1.bf16.msra.mxu0 0
    %464 = vmatprep.subr.bf16.mxu0 0
    %465 = vmatpush1.bf16.msra.mxu0 0
    %466 = vmatprep.mubr.bf16.mxu0 0
    %467 = vmatmul.mubr.bf16.gmra.mrb[0].mxu0 %v432
    %v468 = vpop.f32.mrb[0].mxu0
    %v469 = vadd.f32 %v428, %v468
    %v470 = vpop.f32.mrb[0].mxu0
    %v471 = vadd.f32 %v430, %v470
    %v472 = vpop.f32.mrb[0].mxu0
    %v473 = vpop.f32.mrb[0].mxu0
    %474 = vdwg.mxu0
    %v475 = vmul.f32 %v107, %v469
    %v476 = vmul.f32 %v108, %v471
    %v477 = vtanh.pop %v475
    %v478 = vtanh.pop %v476
    %v479 = vmul.f32 %v107, %v477
    %v480 = vmul.f32 %v108, %v478
    %v481 = vadd.f32 %v479, %v109
    %v482 = vadd.f32 %v480, %v110
    %484 = vrot.lane.b32.xlu0 %v482, 32
    %v485 = vpop.permute.xlu0 %484
    %v487 = vsel %vm392, %v481, %v485
    %489 = vrot.lane.b32.xlu0 %v481, 96
    %v490 = vpop.permute.xlu0 %489
    %v492 = vsel %vm392, %v490, %v482
    %493 = vrot.lane.b32.xlu0 %v481, 64
    %v494 = vpop.permute.xlu0 %493
    %496 = vrot.lane.b32.xlu0 %v482, 96
    %v497 = vpop.permute.xlu0 %496
    %v499 = vsel %vm392, %v494, %v497
    %500 = vrot.lane.b32.xlu0 %v481, 32
    %v501 = vpop.permute.xlu0 %500
    %503 = vrot.lane.b32.xlu0 %v482, 64
    %v504 = vpop.permute.xlu0 %503
    %v506 = vsel %vm392, %v501, %v504
    %v507 = vmul.f32 %v492, %v421
    %v508 = vmul.f32 %v487, %v499
    %v509 = vadd.f32 %v507, %v508
    %v510 = vtanh.pop %v509
    %v511 = vmul.f32 %v506, %v510
    %s512 = scalar_lea.vmem [#allocation6], 8
    %v513 = vld [vmem:[%s512] sm:$0xff]
    %vm514 = vcmp.ne.f32.partialorder %v513, 0.0
    %v515 = vsel %vm514, %v511, %v420
    %v516 = vsel %vm514, %v509, %v421
    %v517 = vsel %vm514, %v511, 0.0
    %s518 = scalar_lea.vmem [#allocation4], 8
    %519 = vst.msk [vmem:[%s518] sm:$0xff] %vm392, %v517
    %s520 = scalar_lea.vmem [#allocation4], 48
    %521 = vst.msk [vmem:[%s520] sm:$0xff] %vm424, %v517
    %v522 = vpack.c.bf16 %v515, %v515
    %s523 = scalar_lea.vmem [#allocation2], 32
    %v524 = vld [vmem:[%s523] sm:$0xff]
    %s525 = scalar_lea.vmem [#allocation2], 80
    %v526 = vld [vmem:[%s525 + $0x8] sm:$0xff]
    %v528 = vsel %vm183, %v522, 0
    %530 = vmatprep.subr.bf16.mxu0 %v321
    %531 = vmatpush1.bf16.msra.mxu0 %v320
    %532 = vmatprep.subr.bf16.mxu0 %v323
    %533 = vmatpush1.bf16.msra.mxu0 %v322
    %534 = vmatprep.subr.bf16.mxu0 %v325
    %535 = vmatpush1.bf16.msra.mxu0 %v324
    %536 = vmatprep.subr.bf16.mxu0 %v327
    %537 = vmatpush1.bf16.msra.mxu0 %v326
    %538 = vmatprep.subr.bf16.mxu0 0
    %539 = vmatpush1.bf16.msra.mxu0 0
    %540 = vmatprep.subr.bf16.mxu0 0
    %541 = vmatpush1.bf16.msra.mxu0 0
    %542 = vmatprep.subr.bf16.mxu0 0
    %543 = vmatpush1.bf16.msra.mxu0 0
    %544 = vmatprep.subr.bf16.mxu0 0
    %545 = vmatpush1.bf16.msra.mxu0 0
    %546 = vmatprep.subr.bf16.mxu0 0
    %547 = vmatpush1.bf16.msra.mxu0 0
    %548 = vmatprep.subr.bf16.mxu0 0
    %549 = vmatpush1.bf16.msra.mxu0 0
    %550 = vmatprep.subr.bf16.mxu0 0
    %551 = vmatpush1.bf16.msra.mxu0 0
    %552 = vmatprep.subr.bf16.mxu0 0
    %553 = vmatpush1.bf16.msra.mxu0 0
    %554 = vmatprep.subr.bf16.mxu0 0
    %555 = vmatpush1.bf16.msra.mxu0 0
    %556 = vmatprep.subr.bf16.mxu0 0
    %557 = vmatpush1.bf16.msra.mxu0 0
    %558 = vmatprep.subr.bf16.mxu0 0
    %559 = vmatpush1.bf16.msra.mxu0 0
    %560 = vmatprep.subr.bf16.mxu0 0
    %561 = vmatpush1.bf16.msra.mxu0 0
    %562 = vmatprep.mubr.bf16.mxu0 0
    %563 = vmatmul.mubr.bf16.gmra.mrb[0].mxu0 %v528
    %v564 = vpop.f32.mrb[0].mxu0
    %v565 = vadd.f32 %v524, %v564
    %v566 = vpop.f32.mrb[0].mxu0
    %v567 = vadd.f32 %v526, %v566
    %v568 = vpop.f32.mrb[0].mxu0
    %v569 = vpop.f32.mrb[0].mxu0
    %570 = vdwg.mxu0
    %v571 = vmul.f32 %v107, %v565
    %v572 = vmul.f32 %v108, %v567
    %v573 = vtanh.pop %v571
    %v574 = vtanh.pop %v572
    %v575 = vmul.f32 %v107, %v573
    %v576 = vmul.f32 %v108, %v574
    %v577 = vadd.f32 %v575, %v109
    %v578 = vadd.f32 %v576, %v110
    %580 = vrot.lane.b32.xlu0 %v578, 32
    %v581 = vpop.permute.xlu0 %580
    %v583 = vsel %vm392, %v577, %v581
    %585 = vrot.lane.b32.xlu0 %v577, 96
    %v586 = vpop.permute.xlu0 %585
    %v588 = vsel %vm392, %v586, %v578
    %589 = vrot.lane.b32.xlu0 %v577, 64
    %v590 = vpop.permute.xlu0 %589
    %592 = vrot.lane.b32.xlu0 %v578, 96
    %v593 = vpop.permute.xlu0 %592
    %v595 = vsel %vm392, %v590, %v593
    %596 = vrot.lane.b32.xlu0 %v577, 32
    %v597 = vpop.permute.xlu0 %596
    %599 = vrot.lane.b32.xlu0 %v578, 64
    %v600 = vpop.permute.xlu0 %599
    %v602 = vsel %vm392, %v597, %v600
    %v603 = vmul.f32 %v588, %v516
    %v604 = vmul.f32 %v583, %v595
    %v605 = vadd.f32 %v603, %v604
    %v606 = vtanh.pop %v605
    %v607 = vmul.f32 %v602, %v606
    %s608 = scalar_lea.vmem [#allocation6], 16
    %v609 = vld [vmem:[%s608] sm:$0xff]
    %vm610 = vcmp.ne.f32.partialorder %v609, 0.0
    %v611 = vsel %vm610, %v607, %v515
    %v612 = vsel %vm610, %v605, %v516
    %v613 = vsel %vm610, %v607, 0.0
    %s614 = scalar_lea.vmem [#allocation4], 16
    %615 = vst.msk [vmem:[%s614] sm:$0xff] %vm392, %v613
    %s616 = scalar_lea.vmem [#allocation4], 40
    %617 = vst.msk [vmem:[%s616] sm:$0xff] %vm424, %v613
    %v618 = vpack.c.bf16 %v611, %v611
    %s619 = scalar_lea.vmem [#allocation2], 48
    %v620 = vld [vmem:[%s619] sm:$0xff]
    %s621 = scalar_lea.vmem [#allocation2], 64
    %v622 = vld [vmem:[%s621 + $0x8] sm:$0xff]
    %v624 = vsel %vm183, %v618, 0
    %626 = vmatprep.subr.bf16.mxu0 %v321
    %627 = vmatpush1.bf16.msra.mxu0 %v320
    %628 = vmatprep.subr.bf16.mxu0 %v323
    %629 = vmatpush1.bf16.msra.mxu0 %v322
    %630 = vmatprep.subr.bf16.mxu0 %v325
    %631 = vmatpush1.bf16.msra.mxu0 %v324
    %632 = vmatprep.subr.bf16.mxu0 %v327
    %633 = vmatpush1.bf16.msra.mxu0 %v326
    %634 = vmatprep.subr.bf16.mxu0 0
    %635 = vmatpush1.bf16.msra.mxu0 0
    %636 = vmatprep.subr.bf16.mxu0 0
    %637 = vmatpush1.bf16.msra.mxu0 0
    %638 = vmatprep.subr.bf16.mxu0 0
    %639 = vmatpush1.bf16.msra.mxu0 0
    %640 = vmatprep.subr.bf16.mxu0 0
    %641 = vmatpush1.bf16.msra.mxu0 0
    %642 = vmatprep.subr.bf16.mxu0 0
    %643 = vmatpush1.bf16.msra.mxu0 0
    %644 = vmatprep.subr.bf16.mxu0 0
    %645 = vmatpush1.bf16.msra.mxu0 0
    %646 = vmatprep.subr.bf16.mxu0 0
    %647 = vmatpush1.bf16.msra.mxu0 0
    %648 = vmatprep.subr.bf16.mxu0 0
    %649 = vmatpush1.bf16.msra.mxu0 0
    %650 = vmatprep.subr.bf16.mxu0 0
    %651 = vmatpush1.bf16.msra.mxu0 0
    %652 = vmatprep.subr.bf16.mxu0 0
    %653 = vmatpush1.bf16.msra.mxu0 0
    %654 = vmatprep.subr.bf16.mxu0 0
    %655 = vmatpush1.bf16.msra.mxu0 0
    %656 = vmatprep.subr.bf16.mxu0 0
    %657 = vmatpush1.bf16.msra.mxu0 0
    %658 = vmatprep.mubr.bf16.mxu0 0
    %659 = vmatmul.mubr.bf16.gmra.mrb[0].mxu0 %v624
    %v660 = vpop.f32.mrb[0].mxu0
    %v661 = vadd.f32 %v620, %v660
    %v662 = vpop.f32.mrb[0].mxu0
    %v663 = vadd.f32 %v622, %v662
    %v664 = vpop.f32.mrb[0].mxu0
    %v665 = vpop.f32.mrb[0].mxu0
    %666 = vdwg.mxu0
    %v667 = vmul.f32 %v107, %v661
    %v668 = vmul.f32 %v108, %v663
    %v669 = vtanh.pop %v667
    %v670 = vtanh.pop %v668
    %v671 = vmul.f32 %v107, %v669
    %v672 = vmul.f32 %v108, %v670
    %v673 = vadd.f32 %v671, %v109
    %v674 = vadd.f32 %v672, %v110
    %676 = vrot.lane.b32.xlu0 %v674, 32
    %v677 = vpop.permute.xlu0 %676
    %v679 = vsel %vm392, %v673, %v677
    %681 = vrot.lane.b32.xlu0 %v673, 96
    %v682 = vpop.permute.xlu0 %681
    %v684 = vsel %vm392, %v682, %v674
    %685 = vrot.lane.b32.xlu0 %v673, 64
    %v686 = vpop.permute.xlu0 %685
    %688 = vrot.lane.b32.xlu0 %v674, 96
    %v689 = vpop.permute.xlu0 %688
    %v691 = vsel %vm392, %v686, %v689
    %692 = vrot.lane.b32.xlu0 %v673, 32
    %v693 = vpop.permute.xlu0 %692
    %695 = vrot.lane.b32.xlu0 %v674, 64
    %v696 = vpop.permute.xlu0 %695
    %v698 = vsel %vm392, %v693, %v696
    %v699 = vmul.f32 %v684, %v612
    %v700 = vmul.f32 %v679, %v691
    %v701 = vadd.f32 %v699, %v700
    %v702 = vtanh.pop %v701
    %v703 = vmul.f32 %v698, %v702
    %s704 = scalar_lea.vmem [#allocation6], 24
    %v705 = vld [vmem:[%s704] sm:$0xff]
    %vm706 = vcmp.ne.f32.partialorder %v705, 0.0
    %v707 = vsel %vm706, %v703, %v611
    %v708 = vsel %vm706, %v701, %v612
    %v709 = vsel %vm706, %v703, 0.0
    %s710 = scalar_lea.vmem [#allocation4], 24
    %711 = vst.msk [vmem:[%s710] sm:$0xff] %vm392, %v709
    %s712 = scalar_lea.vmem [#allocation4], 32
    %713 = vst.msk [vmem:[%s712] sm:$0xff] %vm424, %v709
    %v714 = vpack.c.bf16 %v707, %v707
    %v715 = vld [vmem:[%s621] sm:$0xff]
    %v716 = vld [vmem:[%s619 + $0x8] sm:$0xff]
    %v718 = vsel %vm183, %v714, 0
    %720 = vmatprep.subr.bf16.mxu0 %v321
    %721 = vmatpush1.bf16.msra.mxu0 %v320
    %722 = vmatprep.subr.bf16.mxu0 %v323
    %723 = vmatpush1.bf16.msra.mxu0 %v322
    %724 = vmatprep.subr.bf16.mxu0 %v325
    %725 = vmatpush1.bf16.msra.mxu0 %v324
    %726 = vmatprep.subr.bf16.mxu0 %v327
    %727 = vmatpush1.bf16.msra.mxu0 %v326
    %728 = vmatprep.subr.bf16.mxu0 0
    %729 = vmatpush1.bf16.msra.mxu0 0
    %730 = vmatprep.subr.bf16.mxu0 0
    %731 = vmatpush1.bf16.msra.mxu0 0
    %732 = vmatprep.subr.bf16.mxu0 0
    %733 = vmatpush1.bf16.msra.mxu0 0
    %734 = vmatprep.subr.bf16.mxu0 0
    %735 = vmatpush1.bf16.msra.mxu0 0
    %736 = vmatprep.subr.bf16.mxu0 0
    %737 = vmatpush1.bf16.msra.mxu0 0
    %738 = vmatprep.subr.bf16.mxu0 0
    %739 = vmatpush1.bf16.msra.mxu0 0
    %740 = vmatprep.subr.bf16.mxu0 0
    %741 = vmatpush1.bf16.msra.mxu0 0
    %742 = vmatprep.subr.bf16.mxu0 0
    %743 = vmatpush1.bf16.msra.mxu0 0
    %744 = vmatprep.subr.bf16.mxu0 0
    %745 = vmatpush1.bf16.msra.mxu0 0
    %746 = vmatprep.subr.bf16.mxu0 0
    %747 = vmatpush1.bf16.msra.mxu0 0
    %748 = vmatprep.subr.bf16.mxu0 0
    %749 = vmatpush1.bf16.msra.mxu0 0
    %750 = vmatprep.subr.bf16.mxu0 0
    %751 = vmatpush1.bf16.msra.mxu0 0
    %752 = vmatprep.mubr.bf16.mxu0 0
    %753 = vmatmul.mubr.bf16.gmra.mrb[0].mxu0 %v718
    %v754 = vpop.f32.mrb[0].mxu0
    %v755 = vadd.f32 %v715, %v754
    %v756 = vpop.f32.mrb[0].mxu0
    %v757 = vadd.f32 %v716, %v756
    %v758 = vpop.f32.mrb[0].mxu0
    %v759 = vpop.f32.mrb[0].mxu0
    %760 = vdwg.mxu0
    %v761 = vmul.f32 %v107, %v755
    %v762 = vmul.f32 %v108, %v757
    %v763 = vtanh.pop %v761
    %v764 = vtanh.pop %v762
    %v765 = vmul.f32 %v107, %v763
    %v766 = vmul.f32 %v108, %v764
    %v767 = vadd.f32 %v765, %v109
    %v768 = vadd.f32 %v766, %v110
    %770 = vrot.lane.b32.xlu0 %v768, 32
    %v771 = vpop.permute.xlu0 %770
    %v773 = vsel %vm392, %v767, %v771
    %775 = vrot.lane.b32.xlu0 %v767, 96
    %v776 = vpop.permute.xlu0 %775
    %v778 = vsel %vm392, %v776, %v768
    %779 = vrot.lane.b32.xlu0 %v767, 64
    %v780 = vpop.permute.xlu0 %779
    %782 = vrot.lane.b32.xlu0 %v768, 96
    %v783 = vpop.permute.xlu0 %782
    %v785 = vsel %vm392, %v780, %v783
    %786 = vrot.lane.b32.xlu0 %v767, 32
    %v787 = vpop.permute.xlu0 %786
    %789 = vrot.lane.b32.xlu0 %v768, 64
    %v790 = vpop.permute.xlu0 %789
    %v792 = vsel %vm392, %v787, %v790
    %v793 = vmul.f32 %v778, %v708
    %v794 = vmul.f32 %v773, %v785
    %v795 = vadd.f32 %v793, %v794
    %v796 = vtanh.pop %v795
    %v797 = vmul.f32 %v792, %v796
    %s798 = scalar_lea.vmem [#allocation6], 32
    %v799 = vld [vmem:[%s798] sm:$0xff]
    %vm800 = vcmp.ne.f32.partialorder %v799, 0.0
    %v801 = vsel %vm800, %v797, %v707
    %v802 = vsel %vm800, %v795, %v708
    %v803 = vsel %vm800, %v797, 0.0
    %804 = vst.msk [vmem:[%s712] sm:$0xff] %vm392, %v803
    %805 = vst.msk [vmem:[%s710] sm:$0xff] %vm424, %v803
    %v806 = vpack.c.bf16 %v801, %v801
    %v807 = vld [vmem:[%s525] sm:$0xff]
    %v808 = vld [vmem:[%s523 + $0x8] sm:$0xff]
    %v810 = vsel %vm183, %v806, 0
    %812 = vmatprep.subr.bf16.mxu0 %v321
    %813 = vmatpush1.bf16.msra.mxu0 %v320
    %814 = vmatprep.subr.bf16.mxu0 %v323
    %815 = vmatpush1.bf16.msra.mxu0 %v322
    %816 = vmatprep.subr.bf16.mxu0 %v325
    %817 = vmatpush1.bf16.msra.mxu0 %v324
    %818 = vmatprep.subr.bf16.mxu0 %v327
    %819 = vmatpush1.bf16.msra.mxu0 %v326
    %820 = vmatprep.subr.bf16.mxu0 0
    %821 = vmatpush1.bf16.msra.mxu0 0
    %822 = vmatprep.subr.bf16.mxu0 0
    %823 = vmatpush1.bf16.msra.mxu0 0
    %824 = vmatprep.subr.bf16.mxu0 0
    %825 = vmatpush1.bf16.msra.mxu0 0
    %826 = vmatprep.subr.bf16.mxu0 0
    %827 = vmatpush1.bf16.msra.mxu0 0
    %828 = vmatprep.subr.bf16.mxu0 0
    %829 = vmatpush1.bf16.msra.mxu0 0
    %830 = vmatprep.subr.bf16.mxu0 0
    %831 = vmatpush1.bf16.msra.mxu0 0
    %832 = vmatprep.subr.bf16.mxu0 0
    %833 = vmatpush1.bf16.msra.mxu0 0
    %834 = vmatprep.subr.bf16.mxu0 0
    %835 = vmatpush1.bf16.msra.mxu0 0
    %836 = vmatprep.subr.bf16.mxu0 0
    %837 = vmatpush1.bf16.msra.mxu0 0
    %838 = vmatprep.subr.bf16.mxu0 0
    %839 = vmatpush1.bf16.msra.mxu0 0
    %840 = vmatprep.subr.bf16.mxu0 0
    %841 = vmatpush1.bf16.msra.mxu0 0
    %842 = vmatprep.subr.bf16.mxu0 0
    %843 = vmatpush1.bf16.msra.mxu0 0
    %844 = vmatprep.mubr.bf16.mxu0 0
    %845 = vmatmul.mubr.bf16.gmra.mrb[0].mxu0 %v810
    %v846 = vpop.f32.mrb[0].mxu0
    %v847 = vadd.f32 %v807, %v846
    %v848 = vpop.f32.mrb[0].mxu0
    %v849 = vadd.f32 %v808, %v848
    %v850 = vpop.f32.mrb[0].mxu0
    %v851 = vpop.f32.mrb[0].mxu0
    %852 = vdwg.mxu0
    %v853 = vmul.f32 %v107, %v847
    %v854 = vmul.f32 %v108, %v849
    %v855 = vtanh.pop %v853
    %v856 = vtanh.pop %v854
    %v857 = vmul.f32 %v107, %v855
    %v858 = vmul.f32 %v108, %v856
    %v859 = vadd.f32 %v857, %v109
    %v860 = vadd.f32 %v858, %v110
    %862 = vrot.lane.b32.xlu0 %v860, 32
    %v863 = vpop.permute.xlu0 %862
    %v865 = vsel %vm392, %v859, %v863
    %867 = vrot.lane.b32.xlu0 %v859, 96
    %v868 = vpop.permute.xlu0 %867
    %v870 = vsel %vm392, %v868, %v860
    %871 = vrot.lane.b32.xlu0 %v859, 64
    %v872 = vpop.permute.xlu0 %871
    %874 = vrot.lane.b32.xlu0 %v860, 96
    %v875 = vpop.permute.xlu0 %874
    %v877 = vsel %vm392, %v872, %v875
    %878 = vrot.lane.b32.xlu0 %v859, 32
    %v879 = vpop.permute.xlu0 %878
    %881 = vrot.lane.b32.xlu0 %v860, 64
    %v882 = vpop.permute.xlu0 %881
    %v884 = vsel %vm392, %v879, %v882
    %v885 = vmul.f32 %v870, %v802
    %v886 = vmul.f32 %v865, %v877
    %v887 = vadd.f32 %v885, %v886
    %v888 = vtanh.pop %v887
    %v889 = vmul.f32 %v884, %v888
    %s890 = scalar_lea.vmem [#allocation6], 40
    %v891 = vld [vmem:[%s890] sm:$0xff]
    %vm892 = vcmp.ne.f32.partialorder %v891, 0.0
    %v893 = vsel %vm892, %v889, %v801
    %v894 = vsel %vm892, %v887, %v802
    %v895 = vsel %vm892, %v889, 0.0
    %896 = vst.msk [vmem:[%s616] sm:$0xff] %vm392, %v895
    %897 = vst.msk [vmem:[%s614] sm:$0xff] %vm424, %v895
    %v898 = vpack.c.bf16 %v893, %v893
    %v899 = vld [vmem:[%s429] sm:$0xff]
    %v900 = vld [vmem:[%s427 + $0x8] sm:$0xff]
    %v902 = vsel %vm183, %v898, 0
    %904 = vmatprep.subr.bf16.mxu0 %v321
    %905 = vmatpush1.bf16.msra.mxu0 %v320
    %906 = vmatprep.subr.bf16.mxu0 %v323
    %907 = vmatpush1.bf16.msra.mxu0 %v322
    %908 = vmatprep.subr.bf16.mxu0 %v325
    %909 = vmatpush1.bf16.msra.mxu0 %v324
    %910 = vmatprep.subr.bf16.mxu0 %v327
    %911 = vmatpush1.bf16.msra.mxu0 %v326
    %912 = vmatprep.subr.bf16.mxu0 0
    %913 = vmatpush1.bf16.msra.mxu0 0
    %914 = vmatprep.subr.bf16.mxu0 0
    %915 = vmatpush1.bf16.msra.mxu0 0
    %916 = vmatprep.subr.bf16.mxu0 0
    %917 = vmatpush1.bf16.msra.mxu0 0
    %918 = vmatprep.subr.bf16.mxu0 0
    %919 = vmatpush1.bf16.msra.mxu0 0
    %920 = vmatprep.subr.bf16.mxu0 0
    %921 = vmatpush1.bf16.msra.mxu0 0
    %922 = vmatprep.subr.bf16.mxu0 0
    %923 = vmatpush1.bf16.msra.mxu0 0
    %924 = vmatprep.subr.bf16.mxu0 0
    %925 = vmatpush1.bf16.msra.mxu0 0
    %926 = vmatprep.subr.bf16.mxu0 0
    %927 = vmatpush1.bf16.msra.mxu0 0
    %928 = vmatprep.subr.bf16.mxu0 0
    %929 = vmatpush1.bf16.msra.mxu0 0
    %930 = vmatprep.subr.bf16.mxu0 0
    %931 = vmatpush1.bf16.msra.mxu0 0
    %932 = vmatprep.subr.bf16.mxu0 0
    %933 = vmatpush1.bf16.msra.mxu0 0
    %934 = vmatprep.subr.bf16.mxu0 0
    %935 = vmatpush1.bf16.msra.mxu0 0
    %936 = vmatprep.mubr.bf16.mxu0 0
    %937 = vmatmul.mubr.bf16.gmra.mrb[0].mxu0 %v902
    %v938 = vpop.f32.mrb[0].mxu0
    %v939 = vadd.f32 %v899, %v938
    %v940 = vpop.f32.mrb[0].mxu0
    %v941 = vadd.f32 %v900, %v940
    %v942 = vpop.f32.mrb[0].mxu0
    %v943 = vpop.f32.mrb[0].mxu0
    %944 = vdwg.mxu0
    %v945 = vmul.f32 %v107, %v939
    %v946 = vmul.f32 %v108, %v941
    %v947 = vtanh.pop %v945
    %v948 = vtanh.pop %v946
    %v949 = vmul.f32 %v107, %v947
    %v950 = vmul.f32 %v108, %v948
    %v951 = vadd.f32 %v949, %v109
    %v952 = vadd.f32 %v950, %v110
    %954 = vrot.lane.b32.xlu0 %v952, 32
    %v955 = vpop.permute.xlu0 %954
    %v957 = vsel %vm392, %v951, %v955
    %959 = vrot.lane.b32.xlu0 %v951, 96
    %v960 = vpop.permute.xlu0 %959
    %v962 = vsel %vm392, %v960, %v952
    %963 = vrot.lane.b32.xlu0 %v951, 64
    %v964 = vpop.permute.xlu0 %963
    %966 = vrot.lane.b32.xlu0 %v952, 96
    %v967 = vpop.permute.xlu0 %966
    %v969 = vsel %vm392, %v964, %v967
    %970 = vrot.lane.b32.xlu0 %v951, 32
    %v971 = vpop.permute.xlu0 %970
    %973 = vrot.lane.b32.xlu0 %v952, 64
    %v974 = vpop.permute.xlu0 %973
    %v976 = vsel %vm392, %v971, %v974
    %v977 = vmul.f32 %v962, %v894
    %v978 = vmul.f32 %v957, %v969
    %v979 = vadd.f32 %v977, %v978
    %v980 = vtanh.pop %v979
    %v981 = vmul.f32 %v976, %v980
    %s982 = scalar_lea.vmem [#allocation6], 48
    %v983 = vld [vmem:[%s982] sm:$0xff]
    %vm984 = vcmp.ne.f32.partialorder %v983, 0.0
    %v985 = vsel %vm984, %v981, %v893
    %v986 = vsel %vm984, %v979, %v894
    %v987 = vsel %vm984, %v981, 0.0
    %988 = vst.msk [vmem:[%s520] sm:$0xff] %vm392, %v987
    %989 = vst.msk [vmem:[%s518] sm:$0xff] %vm424, %v987
    %v990 = vpack.c.bf16 %v985, %v985
    %v991 = vld [vmem:[%s294] sm:$0xff]
    %v992 = vld [vmem:[#allocation2 + $0x8] sm:$0xff]
    %v994 = vsel %vm183, %v990, 0
    %996 = vmatprep.subr.bf16.mxu0 %v321
    %997 = vmatpush1.bf16.msra.mxu0 %v320
    %998 = vmatprep.subr.bf16.mxu0 %v323
    %999 = vmatpush1.bf16.msra.mxu0 %v322
    %1000 = vmatprep.subr.bf16.mxu0 %v325
    %1001 = vmatpush1.bf16.msra.mxu0 %v324
    %1002 = vmatprep.subr.bf16.mxu0 %v327
    %1003 = vmatpush1.bf16.msra.mxu0 %v326
    %1004 = vmatprep.subr.bf16.mxu0 0
    %1005 = vmatpush1.bf16.msra.mxu0 0
    %1006 = vmatprep.subr.bf16.mxu0 0
    %1007 = vmatpush1.bf16.msra.mxu0 0
    %1008 = vmatprep.subr.bf16.mxu0 0
    %1009 = vmatpush1.bf16.msra.mxu0 0
    %1010 = vmatprep.subr.bf16.mxu0 0
    %1011 = vmatpush1.bf16.msra.mxu0 0
    %1012 = vmatprep.subr.bf16.mxu0 0
    %1013 = vmatpush1.bf16.msra.mxu0 0
    %1014 = vmatprep.subr.bf16.mxu0 0
    %1015 = vmatpush1.bf16.msra.mxu0 0
    %1016 = vmatprep.subr.bf16.mxu0 0
    %1017 = vmatpush1.bf16.msra.mxu0 0
    %1018 = vmatprep.subr.bf16.mxu0 0
    %1019 = vmatpush1.bf16.msra.mxu0 0
    %1020 = vmatprep.subr.bf16.mxu0 0
    %1021 = vmatpush1.bf16.msra.mxu0 0
    %1022 = vmatprep.subr.bf16.mxu0 0
    %1023 = vmatpush1.bf16.msra.mxu0 0
    %1024 = vmatprep.subr.bf16.mxu0 0
    %1025 = vmatpush1.bf16.msra.mxu0 0
    %1026 = vmatprep.subr.bf16.mxu0 0
    %1027 = vmatpush1.bf16.msra.mxu0 0
    %1028 = vmatprep.mubr.bf16.mxu0 0
    %1029 = vmatmul.mubr.bf16.gmra.mrb[0].mxu0 %v994
    %v1030 = vpop.f32.mrb[0].mxu0
    %v1031 = vadd.f32 %v991, %v1030
    %v1032 = vpop.f32.mrb[0].mxu0
    %v1033 = vadd.f32 %v992, %v1032
    %v1034 = vpop.f32.mrb[0].mxu0
    %v1035 = vpop.f32.mrb[0].mxu0
    %1036 = vdwg.mxu0
    %v1037 = vmul.f32 %v107, %v1031
    %v1038 = vmul.f32 %v108, %v1033
    %v1039 = vtanh.pop %v1037
    %v1040 = vtanh.pop %v1038
    %v1041 = vmul.f32 %v107, %v1039
    %v1042 = vmul.f32 %v108, %v1040
    %v1043 = vadd.f32 %v1041, %v109
    %v1044 = vadd.f32 %v1042, %v110
    %1046 = vrot.lane.b32.xlu0 %v1044, 32
    %v1047 = vpop.permute.xlu0 %1046
    %v1049 = vsel %vm392, %v1043, %v1047
    %1051 = vrot.lane.b32.xlu0 %v1043, 96
    %v1052 = vpop.permute.xlu0 %1051
    %v1054 = vsel %vm392, %v1052, %v1044
    %1055 = vrot.lane.b32.xlu0 %v1043, 64
    %v1056 = vpop.permute.xlu0 %1055
    %1058 = vrot.lane.b32.xlu0 %v1044, 96
    %v1059 = vpop.permute.xlu0 %1058
    %v1061 = vsel %vm392, %v1056, %v1059
    %1062 = vrot.lane.b32.xlu0 %v1043, 32
    %v1063 = vpop.permute.xlu0 %1062
    %1065 = vrot.lane.b32.xlu0 %v1044, 64
    %v1066 = vpop.permute.xlu0 %1065
    %v1068 = vsel %vm392, %v1063, %v1066
    %v1069 = vmul.f32 %v1054, %v986
    %v1070 = vmul.f32 %v1049, %v1061
    %v1071 = vadd.f32 %v1069, %v1070
    %v1072 = vtanh.pop %v1071
    %v1073 = vmul.f32 %v1068, %v1072
    %s1074 = scalar_lea.vmem [#allocation6], 56
    %v1075 = vld [vmem:[%s1074] sm:$0xff]
    %vm1076 = vcmp.ne.f32.partialorder %v1075, 0.0
    %v1077 = vsel %vm1076, %v1073, 0.0
    %1078 = vst.msk [vmem:[%s423] sm:$0xff] %vm392, %v1077
    %1079 = vst.msk [vmem:[#allocation4] sm:$0xff] %vm424, %v1077
    %v1080 = vld [vmem:[#allocation4] sm:$0xff]
    %v1081 = vld [vmem:[#allocation4 + $0x8] sm:$0xff]
    %v1082 = vld [vmem:[#allocation4 + $0x10] sm:$0xff]
    %v1083 = vld [vmem:[#allocation4 + $0x18] sm:$0xff]
    %v1084 = vld [vmem:[#allocation4 + $0x20] sm:$0xff]
    %v1085 = vld [vmem:[#allocation4 + $0x28] sm:$0xff]
    %v1086 = vld [vmem:[#allocation4 + $0x30] sm:$0xff]
    %v1087 = vld [vmem:[#allocation4 + $0x38] sm:$0xff]
    %v1088 = vpack.c.bf16 %v1081, %v1080
    %v1089 = vpack.c.bf16 %v1083, %v1082
    %v1090 = vpack.c.bf16 %v1085, %v1084
    %v1091 = vpack.c.bf16 %v1087, %v1086
    %s1092 = scalar_lea.vmem [#allocation8], 64
    %v1093 = vld [vmem:[%s1092] sm:$0xff]
    %v1094 = vld [vmem:[%s1092 + $0x8] sm:$0xff]
    %v1095 = vld [vmem:[%s1092 + $0x10] sm:$0xff]
    %v1096 = vld [vmem:[%s1092 + $0x18] sm:$0xff]
    %v1097 = vld [vmem:[%s1092 + $0x20] sm:$0xff]
    %v1098 = vld [vmem:[%s1092 + $0x28] sm:$0xff]
    %v1099 = vld [vmem:[%s1092 + $0x30] sm:$0xff]
    %v1100 = vld [vmem:[%s1092 + $0x38] sm:$0xff]
    %s1101 = scalar_lea.vmem %s4, 2
    %v1102 = vld [vmem:[%s1101] sm:$0x3]
    %v1104 = vlaneseq
    %v1105 = vshrl.u32 %v1104, 7
    %v1106 = vsub.s32 0, %v1105
    %v1107 = vrot.slane %v1102, %v1106
    %v1108 = vlaneseq
    %v1109 = vshrl.u32 %v1108, 7
    %v1110 = vsub.s32 1, %v1109
    %v1111 = vrot.slane %v1102, %v1110
    %v1122 = vunpack.c.l.b16 %v1093
    %v1123 = vunpack.c.h.b16 %v1093
    %v1124 = vunpack.c.l.b16 %v1094
    %v1125 = vunpack.c.h.b16 %v1094
    %v1126 = vunpack.c.l.b16 %v1095
    %v1127 = vunpack.c.h.b16 %v1095
    %v1128 = vunpack.c.l.b16 %v1096
    %v1129 = vunpack.c.h.b16 %v1096
    %v1130 = vunpack.c.l.b16 %v1097
    %v1131 = vunpack.c.h.b16 %v1097
    %v1132 = vunpack.c.l.b16 %v1098
    %v1133 = vunpack.c.h.b16 %v1098
    %v1134 = vunpack.c.l.b16 %v1099
    %v1135 = vunpack.c.h.b16 %v1099
    %v1136 = vunpack.c.l.b16 %v1100
    %v1137 = vunpack.c.h.b16 %v1100
    %v1138 = vpack.c.b16 %v1124, %v1122
    %v1139 = vpack.c.b16 %v1125, %v1123
    %v1140 = vpack.c.b16 %v1128, %v1126
    %v1141 = vpack.c.b16 %v1129, %v1127
    %v1142 = vpack.c.b16 %v1132, %v1130
    %v1143 = vpack.c.b16 %v1133, %v1131
    %v1144 = vpack.c.b16 %v1136, %v1134
    %v1145 = vpack.c.b16 %v1137, %v1135
    %v1155 = vsel %vm183, %v1088, 0
    %v1158 = vsel %vm183, %v1089, 0
    %v1161 = vsel %vm183, %v1090, 0
    %v1164 = vsel %vm183, %v1091, 0
    %1166 = vmatprep.subr.bf16.mxu0 %v1139
    %1167 = vmatpush1.bf16.msra.mxu0 %v1138
    %1168 = vmatprep.subr.bf16.mxu0 %v1141
    %1169 = vmatpush1.bf16.msra.mxu0 %v1140
    %1170 = vmatprep.subr.bf16.mxu0 %v1143
    %1171 = vmatpush1.bf16.msra.mxu0 %v1142
    %1172 = vmatprep.subr.bf16.mxu0 %v1145
    %1173 = vmatpush1.bf16.msra.mxu0 %v1144
    %1174 = vmatprep.subr.bf16.mxu0 0
    %1175 = vmatpush1.bf16.msra.mxu0 0
    %1176 = vmatprep.subr.bf16.mxu0 0
    %1177 = vmatpush1.bf16.msra.mxu0 0
    %1178 = vmatprep.subr.bf16.mxu0 0
    %1179 = vmatpush1.bf16.msra.mxu0 0
    %1180 = vmatprep.subr.bf16.mxu0 0
    %1181 = vmatpush1.bf16.msra.mxu0 0
    %1182 = vmatprep.subr.bf16.mxu0 0
    %1183 = vmatpush1.bf16.msra.mxu0 0
    %1184 = vmatprep.subr.bf16.mxu0 0
    %1185 = vmatpush1.bf16.msra.mxu0 0
    %1186 = vmatprep.subr.bf16.mxu0 0
    %1187 = vmatpush1.bf16.msra.mxu0 0
    %1188 = vmatprep.subr.bf16.mxu0 0
    %1189 = vmatpush1.bf16.msra.mxu0 0
    %1190 = vmatprep.subr.bf16.mxu0 0
    %1191 = vmatpush1.bf16.msra.mxu0 0
    %1192 = vmatprep.subr.bf16.mxu0 0
    %1193 = vmatpush1.bf16.msra.mxu0 0
    %1194 = vmatprep.subr.bf16.mxu0 0
    %1195 = vmatpush1.bf16.msra.mxu0 0
    %1196 = vmatprep.subr.bf16.mxu0 0
    %1197 = vmatpush1.bf16.msra.mxu0 0
    %1198 = vmatprep.mubr.bf16.mxu0 0
    %1199 = vmatmul.mubr.bf16.gmra.mrb[0].mxu0 %v1155
    %v1200 = vpop.f32.mrb[0].mxu0
    %v1201 = vadd.f32 %v1107, %v1200
    %v1202 = vpop.f32.mrb[0].mxu0
    %v1203 = vadd.f32 %v1111, %v1202
    %v1204 = vpop.f32.mrb[0].mxu0
    %v1205 = vadd.f32 %v1107, %v1204
    %v1206 = vpop.f32.mrb[0].mxu0
    %v1207 = vadd.f32 %v1111, %v1206
    %1208 = vmatprep.mubr.bf16.mxu0 0
    %1209 = vmatmul.mubr.bf16.gmra.mrb[0].mxu0 %v1158
    %v1210 = vpop.f32.mrb[0].mxu0
    %v1211 = vadd.f32 %v1107, %v1210
    %v1212 = vpop.f32.mrb[0].mxu0
    %v1213 = vadd.f32 %v1111, %v1212
    %v1214 = vpop.f32.mrb[0].mxu0
    %v1215 = vadd.f32 %v1107, %v1214
    %v1216 = vpop.f32.mrb[0].mxu0
    %v1217 = vadd.f32 %v1111, %v1216
    %1218 = vmatprep.mubr.bf16.mxu0 0
    %1219 = vmatmul.mubr.bf16.gmra.mrb[0].mxu0 %v1161
    %v1220 = vpop.f32.mrb[0].mxu0
    %v1221 = vadd.f32 %v1107, %v1220
    %v1222 = vpop.f32.mrb[0].mxu0
    %v1223 = vadd.f32 %v1111, %v1222
    %v1224 = vpop.f32.mrb[0].mxu0
    %v1225 = vadd.f32 %v1107, %v1224
    %v1226 = vpop.f32.mrb[0].mxu0
    %v1227 = vadd.f32 %v1111, %v1226
    %1228 = vmatprep.mubr.bf16.mxu0 0
    %1229 = vmatmul.mubr.bf16.gmra.mrb[0].mxu0 %v1164
    %v1230 = vpop.f32.mrb[0].mxu0
    %v1231 = vadd.f32 %v1107, %v1230
    %v1232 = vpop.f32.mrb[0].mxu0
    %v1233 = vadd.f32 %v1111, %v1232
    %v1234 = vpop.f32.mrb[0].mxu0
    %v1235 = vadd.f32 %v1107, %v1234
    %v1236 = vpop.f32.mrb[0].mxu0
    %v1237 = vadd.f32 %v1111, %v1236
    %1238 = vdwg.mxu0
    %1239 = vst [vmem:[#allocation3] sm:$0xff] %v1201
    %1240 = vst [vmem:[#allocation3 + $0x8] sm:$0xff] %v1203
    %1241 = vst [vmem:[#allocation3 + $0x10] sm:$0xff] %v1205
    %1242 = vst [vmem:[#allocation3 + $0x18] sm:$0xff] %v1207
    %1243 = vst [vmem:[#allocation3 + $0x20] sm:$0xff] %v1211
    %1244 = vst [vmem:[#allocation3 + $0x28] sm:$0xff] %v1213
    %1245 = vst [vmem:[#allocation3 + $0x30] sm:$0xff] %v1215
    %1246 = vst [vmem:[#allocation3 + $0x38] sm:$0xff] %v1217
    %1247 = vst [vmem:[#allocation3 + $0x40] sm:$0xff] %v1221
    %1248 = vst [vmem:[#allocation3 + $0x48] sm:$0xff] %v1223
    %1249 = vst [vmem:[#allocation3 + $0x50] sm:$0xff] %v1225
    %1250 = vst [vmem:[#allocation3 + $0x58] sm:$0xff] %v1227
    %1251 = vst [vmem:[#allocation3 + $0x60] sm:$0xff] %v1231
    %1252 = vst [vmem:[#allocation3 + $0x68] sm:$0xff] %v1233
    %1253 = vst [vmem:[#allocation3 + $0x70] sm:$0xff] %v1235
    %1254 = vst [vmem:[#allocation3 + $0x78] sm:$0xff] %v1237
    %s1255 = scalar_lea.vmem [#allocation10], 64
    %v1256 = vld [vmem:[%s1255] sm:$0xff]
    %v1257 = vld [vmem:[%s1255 + $0x8] sm:$0xff]
    %v1258 = vld [vmem:[%s1255 + $0x10] sm:$0xff]
    %v1259 = vld [vmem:[%s1255 + $0x18] sm:$0xff]
    %v1260 = vld [vmem:[%s1255 + $0x20] sm:$0xff]
    %v1261 = vld [vmem:[%s1255 + $0x28] sm:$0xff]
    %v1262 = vld [vmem:[%s1255 + $0x30] sm:$0xff]
    %v1263 = vld [vmem:[%s1255 + $0x38] sm:$0xff]
    %v1264 = vld [vmem:[#allocation3] sm:$0xff]
    %s1265 = scalar_lea.vmem [#allocation3], 112
    %v1266 = vld [vmem:[%s1265 + $0x8] sm:$0xff]
    %v1275 = vunpack.c.l.b16 %v1256
    %v1276 = vunpack.c.h.b16 %v1256
    %v1277 = vunpack.c.l.b16 %v1257
    %v1278 = vunpack.c.h.b16 %v1257
    %v1279 = vunpack.c.l.b16 %v1258
    %v1280 = vunpack.c.h.b16 %v1258
    %v1281 = vunpack.c.l.b16 %v1259
    %v1282 = vunpack.c.h.b16 %v1259
    %v1283 = vunpack.c.l.b16 %v1260
    %v1284 = vunpack.c.h.b16 %v1260
    %v1285 = vunpack.c.l.b16 %v1261
    %v1286 = vunpack.c.h.b16 %v1261
    %v1287 = vunpack.c.l.b16 %v1262
    %v1288 = vunpack.c.h.b16 %v1262
    %v1289 = vunpack.c.l.b16 %v1263
    %v1290 = vunpack.c.h.b16 %v1263
    %v1291 = vpack.c.b16 %v1277, %v1275
    %v1292 = vpack.c.b16 %v1278, %v1276
    %v1293 = vpack.c.b16 %v1281, %v1279
    %v1294 = vpack.c.b16 %v1282, %v1280
    %v1295 = vpack.c.b16 %v1285, %v1283
    %v1296 = vpack.c.b16 %v1286, %v1284
    %v1297 = vpack.c.b16 %v1289, %v1287
    %v1298 = vpack.c.b16 %v1290, %v1288
    %1307 = vmatprep.subr.bf16.mxu0 %v1292
    %1308 = vmatpush1.bf16.msra.mxu0 %v1291
    %1309 = vmatprep.subr.bf16.mxu0 %v1294
    %1310 = vmatpush1.bf16.msra.mxu0 %v1293
    %1311 = vmatprep.subr.bf16.mxu0 %v1296
    %1312 = vmatpush1.bf16.msra.mxu0 %v1295
    %1313 = vmatprep.subr.bf16.mxu0 %v1298
    %1314 = vmatpush1.bf16.msra.mxu0 %v1297
    %1315 = vmatprep.subr.bf16.mxu0 0
    %1316 = vmatpush1.bf16.msra.mxu0 0
    %1317 = vmatprep.subr.bf16.mxu0 0
    %1318 = vmatpush1.bf16.msra.mxu0 0
    %1319 = vmatprep.subr.bf16.mxu0 0
    %1320 = vmatpush1.bf16.msra.mxu0 0
    %1321 = vmatprep.subr.bf16.mxu0 0
    %1322 = vmatpush1.bf16.msra.mxu0 0
    %1323 = vmatprep.subr.bf16.mxu0 0
    %1324 = vmatpush1.bf16.msra.mxu0 0
    %1325 = vmatprep.subr.bf16.mxu0 0
    %1326 = vmatpush1.bf16.msra.mxu0 0
    %1327 = vmatprep.subr.bf16.mxu0 0
    %1328 = vmatpush1.bf16.msra.mxu0 0
    %1329 = vmatprep.subr.bf16.mxu0 0
    %1330 = vmatpush1.bf16.msra.mxu0 0
    %1331 = vmatprep.subr.bf16.mxu0 0
    %1332 = vmatpush1.bf16.msra.mxu0 0
    %1333 = vmatprep.subr.bf16.mxu0 0
    %1334 = vmatpush1.bf16.msra.mxu0 0
    %1335 = vmatprep.subr.bf16.mxu0 0
    %1336 = vmatpush1.bf16.msra.mxu0 0
    %1337 = vmatprep.subr.bf16.mxu0 0
    %1338 = vmatpush1.bf16.msra.mxu0 0
    %1339 = vmatprep.mubr.bf16.mxu0 0
    %1340 = vmatmul.mubr.bf16.gmra.mrb[0].mxu0 %v337
    %v1341 = vpop.f32.mrb[0].mxu0
    %v1342 = vadd.f32 %v1264, %v1341
    %v1343 = vpop.f32.mrb[0].mxu0
    %v1344 = vadd.f32 %v1266, %v1343
    %v1345 = vpop.f32.mrb[0].mxu0
    %v1346 = vpop.f32.mrb[0].mxu0
    %1347 = vdwg.mxu0
    %v1348 = vmul.f32 %v107, %v1342
    %v1349 = vmul.f32 %v108, %v1344
    %v1350 = vtanh.pop %v1348
    %v1351 = vtanh.pop %v1349
    %v1352 = vmul.f32 %v107, %v1350
    %v1353 = vmul.f32 %v108, %v1351
    %v1354 = vadd.f32 %v1352, %v109
    %v1355 = vadd.f32 %v1353, %v110
    %1357 = vrot.lane.b32.xlu0 %v1355, 32
    %v1358 = vpop.permute.xlu0 %1357
    %v1360 = vsel %vm392, %v1354, %v1358
    %1362 = vrot.lane.b32.xlu0 %v1354, 96
    %v1363 = vpop.permute.xlu0 %1362
    %v1365 = vsel %vm392, %v1363, %v1355
    %1366 = vrot.lane.b32.xlu0 %v1354, 64
    %v1367 = vpop.permute.xlu0 %1366
    %1369 = vrot.lane.b32.xlu0 %v1355, 96
    %v1370 = vpop.permute.xlu0 %1369
    %v1372 = vsel %vm392, %v1367, %v1370
    %1373 = vrot.lane.b32.xlu0 %v1354, 32
    %v1374 = vpop.permute.xlu0 %1373
    %1376 = vrot.lane.b32.xlu0 %v1355, 64
    %v1377 = vpop.permute.xlu0 %1376
    %v1379 = vsel %vm392, %v1374, %v1377
    %v1380 = vmul.f32 %v1365, 0.0
    %v1381 = vmul.f32 %v1360, %v1372
    %v1382 = vadd.f32 %v1380, %v1381
    %v1383 = vtanh.pop %v1382
    %v1384 = vmul.f32 %v1379, %v1383
    %v1385 = vld [vmem:[#allocation6] sm:$0xff]
    %vm1386 = vcmp.ne.f32.partialorder %v1385, 0.0
    %v1387 = vsel %vm1386, %v1384, 0.0
    %v1388 = vsel %vm1386, %v1382, 0.0
    %1389 = vst.msk [vmem:[#allocation5] sm:$0xff] %vm392, %v1387
    %s1390 = scalar_lea.vmem [#allocation5], 56
    %1391 = vst.msk [vmem:[%s1390] sm:$0xff] %vm424, %v1387
    %v1392 = vpack.c.bf16 %v1387, %v1387
    %s1393 = scalar_lea.vmem [#allocation3], 16
    %v1394 = vld [vmem:[%s1393] sm:$0xff]
    %s1395 = scalar_lea.vmem [#allocation3], 96
    %v1396 = vld [vmem:[%s1395 + $0x8] sm:$0xff]
    %v1398 = vsel %vm183, %v1392, 0
    %1400 = vmatprep.subr.bf16.mxu0 %v1292
    %1401 = vmatpush1.bf16.msra.mxu0 %v1291
    %1402 = vmatprep.subr.bf16.mxu0 %v1294
    %1403 = vmatpush1.bf16.msra.mxu0 %v1293
    %1404 = vmatprep.subr.bf16.mxu0 %v1296
    %1405 = vmatpush1.bf16.msra.mxu0 %v1295
    %1406 = vmatprep.subr.bf16.mxu0 %v1298
    %1407 = vmatpush1.bf16.msra.mxu0 %v1297
    %1408 = vmatprep.subr.bf16.mxu0 0
    %1409 = vmatpush1.bf16.msra.mxu0 0
    %1410 = vmatprep.subr.bf16.mxu0 0
    %1411 = vmatpush1.bf16.msra.mxu0 0
    %1412 = vmatprep.subr.bf16.mxu0 0
    %1413 = vmatpush1.bf16.msra.mxu0 0
    %1414 = vmatprep.subr.bf16.mxu0 0
    %1415 = vmatpush1.bf16.msra.mxu0 0
    %1416 = vmatprep.subr.bf16.mxu0 0
    %1417 = vmatpush1.bf16.msra.mxu0 0
    %1418 = vmatprep.subr.bf16.mxu0 0
    %1419 = vmatpush1.bf16.msra.mxu0 0
    %1420 = vmatprep.subr.bf16.mxu0 0
    %1421 = vmatpush1.bf16.msra.mxu0 0
    %1422 = vmatprep.subr.bf16.mxu0 0
    %1423 = vmatpush1.bf16.msra.mxu0 0
    %1424 = vmatprep.subr.bf16.mxu0 0
    %1425 = vmatpush1.bf16.msra.mxu0 0
    %1426 = vmatprep.subr.bf16.mxu0 0
    %1427 = vmatpush1.bf16.msra.mxu0 0
    %1428 = vmatprep.subr.bf16.mxu0 0
    %1429 = vmatpush1.bf16.msra.mxu0 0
    %1430 = vmatprep.subr.bf16.mxu0 0
    %1431 = vmatpush1.bf16.msra.mxu0 0
    %1432 = vmatprep.mubr.bf16.mxu0 0
    %1433 = vmatmul.mubr.bf16.gmra.mrb[0].mxu0 %v1398
    %v1434 = vpop.f32.mrb[0].mxu0
    %v1435 = vadd.f32 %v1394, %v1434
    %v1436 = vpop.f32.mrb[0].mxu0
    %v1437 = vadd.f32 %v1396, %v1436
    %v1438 = vpop.f32.mrb[0].mxu0
    %v1439 = vpop.f32.mrb[0].mxu0
    %1440 = vdwg.mxu0
    %v1441 = vmul.f32 %v107, %v1435
    %v1442 = vmul.f32 %v108, %v1437
    %v1443 = vtanh.pop %v1441
    %v1444 = vtanh.pop %v1442
    %v1445 = vmul.f32 %v107, %v1443
    %v1446 = vmul.f32 %v108, %v1444
    %v1447 = vadd.f32 %v1445, %v109
    %v1448 = vadd.f32 %v1446, %v110
    %1450 = vrot.lane.b32.xlu0 %v1448, 32
    %v1451 = vpop.permute.xlu0 %1450
    %v1453 = vsel %vm392, %v1447, %v1451
    %1455 = vrot.lane.b32.xlu0 %v1447, 96
    %v1456 = vpop.permute.xlu0 %1455
    %v1458 = vsel %vm392, %v1456, %v1448
    %1459 = vrot.lane.b32.xlu0 %v1447, 64
    %v1460 = vpop.permute.xlu0 %1459
    %1462 = vrot.lane.b32.xlu0 %v1448, 96
    %v1463 = vpop.permute.xlu0 %1462
    %v1465 = vsel %vm392, %v1460, %v1463
    %1466 = vrot.lane.b32.xlu0 %v1447, 32
    %v1467 = vpop.permute.xlu0 %1466
    %1469 = vrot.lane.b32.xlu0 %v1448, 64
    %v1470 = vpop.permute.xlu0 %1469
    %v1472 = vsel %vm392, %v1467, %v1470
    %v1473 = vmul.f32 %v1458, %v1388
    %v1474 = vmul.f32 %v1453, %v1465
    %v1475 = vadd.f32 %v1473, %v1474
    %v1476 = vtanh.pop %v1475
    %v1477 = vmul.f32 %v1472, %v1476
    %v1478 = vld [vmem:[%s512] sm:$0xff]
    %vm1479 = vcmp.ne.f32.partialorder %v1478, 0.0
    %v1480 = vsel %vm1479, %v1477, %v1387
    %v1481 = vsel %vm1479, %v1475, %v1388
    %v1482 = vsel %vm1479, %v1477, 0.0
    %s1483 = scalar_lea.vmem [#allocation5], 8
    %1484 = vst.msk [vmem:[%s1483] sm:$0xff] %vm392, %v1482
    %s1485 = scalar_lea.vmem [#allocation5], 48
    %1486 = vst.msk [vmem:[%s1485] sm:$0xff] %vm424, %v1482
    %v1487 = vpack.c.bf16 %v1480, %v1480
    %s1488 = scalar_lea.vmem [#allocation3], 32
    %v1489 = vld [vmem:[%s1488] sm:$0xff]
    %s1490 = scalar_lea.vmem [#allocation3], 80
    %v1491 = vld [vmem:[%s1490 + $0x8] sm:$0xff]
    %v1493 = vsel %vm183, %v1487, 0
    %1495 = vmatprep.subr.bf16.mxu0 %v1292
    %1496 = vmatpush1.bf16.msra.mxu0 %v1291
    %1497 = vmatprep.subr.bf16.mxu0 %v1294
    %1498 = vmatpush1.bf16.msra.mxu0 %v1293
    %1499 = vmatprep.subr.bf16.mxu0 %v1296
    %1500 = vmatpush1.bf16.msra.mxu0 %v1295
    %1501 = vmatprep.subr.bf16.mxu0 %v1298
    %1502 = vmatpush1.bf16.msra.mxu0 %v1297
    %1503 = vmatprep.subr.bf16.mxu0 0
    %1504 = vmatpush1.bf16.msra.mxu0 0
    %1505 = vmatprep.subr.bf16.mxu0 0
    %1506 = vmatpush1.bf16.msra.mxu0 0
    %1507 = vmatprep.subr.bf16.mxu0 0
    %1508 = vmatpush1.bf16.msra.mxu0 0
    %1509 = vmatprep.subr.bf16.mxu0 0
    %1510 = vmatpush1.bf16.msra.mxu0 0
    %1511 = vmatprep.subr.bf16.mxu0 0
    %1512 = vmatpush1.bf16.msra.mxu0 0
    %1513 = vmatprep.subr.bf16.mxu0 0
    %1514 = vmatpush1.bf16.msra.mxu0 0
    %1515 = vmatprep.subr.bf16.mxu0 0
    %1516 = vmatpush1.bf16.msra.mxu0 0
    %1517 = vmatprep.subr.bf16.mxu0 0
    %1518 = vmatpush1.bf16.msra.mxu0 0
    %1519 = vmatprep.subr.bf16.mxu0 0
    %1520 = vmatpush1.bf16.msra.mxu0 0
    %1521 = vmatprep.subr.bf16.mxu0 0
    %1522 = vmatpush1.bf16.msra.mxu0 0
    %1523 = vmatprep.subr.bf16.mxu0 0
    %1524 = vmatpush1.bf16.msra.mxu0 0
    %1525 = vmatprep.subr.bf16.mxu0 0
    %1526 = vmatpush1.bf16.msra.mxu0 0
    %1527 = vmatprep.mubr.bf16.mxu0 0
    %1528 = vmatmul.mubr.bf16.gmra.mrb[0].mxu0 %v1493
    %v1529 = vpop.f32.mrb[0].mxu0
    %v1530 = vadd.f32 %v1489, %v1529
    %v1531 = vpop.f32.mrb[0].mxu0
    %v1532 = vadd.f32 %v1491, %v1531
    %v1533 = vpop.f32.mrb[0].mxu0
    %v1534 = vpop.f32.mrb[0].mxu0
    %1535 = vdwg.mxu0
    %v1536 = vmul.f32 %v107, %v1530
    %v1537 = vmul.f32 %v108, %v1532
    %v1538 = vtanh.pop %v1536
    %v1539 = vtanh.pop %v1537
    %v1540 = vmul.f32 %v107, %v1538
    %v1541 = vmul.f32 %v108, %v1539
    %v1542 = vadd.f32 %v1540, %v109
    %v1543 = vadd.f32 %v1541, %v110
    %1545 = vrot.lane.b32.xlu0 %v1543, 32
    %v1546 = vpop.permute.xlu0 %1545
    %v1548 = vsel %vm392, %v1542, %v1546
    %1550 = vrot.lane.b32.xlu0 %v1542, 96
    %v1551 = vpop.permute.xlu0 %1550
    %v1553 = vsel %vm392, %v1551, %v1543
    %1554 = vrot.lane.b32.xlu0 %v1542, 64
    %v1555 = vpop.permute.xlu0 %1554
    %1557 = vrot.lane.b32.xlu0 %v1543, 96
    %v1558 = vpop.permute.xlu0 %1557
    %v1560 = vsel %vm392, %v1555, %v1558
    %1561 = vrot.lane.b32.xlu0 %v1542, 32
    %v1562 = vpop.permute.xlu0 %1561
    %1564 = vrot.lane.b32.xlu0 %v1543, 64
    %v1565 = vpop.permute.xlu0 %1564
    %v1567 = vsel %vm392, %v1562, %v1565
    %v1568 = vmul.f32 %v1553, %v1481
    %v1569 = vmul.f32 %v1548, %v1560
    %v1570 = vadd.f32 %v1568, %v1569
    %v1571 = vtanh.pop %v1570
    %v1572 = vmul.f32 %v1567, %v1571
    %v1573 = vld [vmem:[%s608] sm:$0xff]
    %vm1574 = vcmp.ne.f32.partialorder %v1573, 0.0
    %v1575 = vsel %vm1574, %v1572, %v1480
    %v1576 = vsel %vm1574, %v1570, %v1481
    %v1577 = vsel %vm1574, %v1572, 0.0
    %s1578 = scalar_lea.vmem [#allocation5], 16
    %1579 = vst.msk [vmem:[%s1578] sm:$0xff] %vm392, %v1577
    %s1580 = scalar_lea.vmem [#allocation5], 40
    %1581 = vst.msk [vmem:[%s1580] sm:$0xff] %vm424, %v1577
    %v1582 = vpack.c.bf16 %v1575, %v1575
    %s1583 = scalar_lea.vmem [#allocation3], 48
    %v1584 = vld [vmem:[%s1583] sm:$0xff]
    %s1585 = scalar_lea.vmem [#allocation3], 64
    %v1586 = vld [vmem:[%s1585 + $0x8] sm:$0xff]
    %v1588 = vsel %vm183, %v1582, 0
    %1590 = vmatprep.subr.bf16.mxu0 %v1292
    %1591 = vmatpush1.bf16.msra.mxu0 %v1291
    %1592 = vmatprep.subr.bf16.mxu0 %v1294
    %1593 = vmatpush1.bf16.msra.mxu0 %v1293
    %1594 = vmatprep.subr.bf16.mxu0 %v1296
    %1595 = vmatpush1.bf16.msra.mxu0 %v1295
    %1596 = vmatprep.subr.bf16.mxu0 %v1298
    %1597 = vmatpush1.bf16.msra.mxu0 %v1297
    %1598 = vmatprep.subr.bf16.mxu0 0
    %1599 = vmatpush1.bf16.msra.mxu0 0
    %1600 = vmatprep.subr.bf16.mxu0 0
    %1601 = vmatpush1.bf16.msra.mxu0 0
    %1602 = vmatprep.subr.bf16.mxu0 0
    %1603 = vmatpush1.bf16.msra.mxu0 0
    %1604 = vmatprep.subr.bf16.mxu0 0
    %1605 = vmatpush1.bf16.msra.mxu0 0
    %1606 = vmatprep.subr.bf16.mxu0 0
    %1607 = vmatpush1.bf16.msra.mxu0 0
    %1608 = vmatprep.subr.bf16.mxu0 0
    %1609 = vmatpush1.bf16.msra.mxu0 0
    %1610 = vmatprep.subr.bf16.mxu0 0
    %1611 = vmatpush1.bf16.msra.mxu0 0
    %1612 = vmatprep.subr.bf16.mxu0 0
    %1613 = vmatpush1.bf16.msra.mxu0 0
    %1614 = vmatprep.subr.bf16.mxu0 0
    %1615 = vmatpush1.bf16.msra.mxu0 0
    %1616 = vmatprep.subr.bf16.mxu0 0
    %1617 = vmatpush1.bf16.msra.mxu0 0
    %1618 = vmatprep.subr.bf16.mxu0 0
    %1619 = vmatpush1.bf16.msra.mxu0 0
    %1620 = vmatprep.subr.bf16.mxu0 0
    %1621 = vmatpush1.bf16.msra.mxu0 0
    %1622 = vmatprep.mubr.bf16.mxu0 0
    %1623 = vmatmul.mubr.bf16.gmra.mrb[0].mxu0 %v1588
    %v1624 = vpop.f32.mrb[0].mxu0
    %v1625 = vadd.f32 %v1584, %v1624
    %v1626 = vpop.f32.mrb[0].mxu0
    %v1627 = vadd.f32 %v1586, %v1626
    %v1628 = vpop.f32.mrb[0].mxu0
    %v1629 = vpop.f32.mrb[0].mxu0
    %1630 = vdwg.mxu0
    %v1631 = vmul.f32 %v107, %v1625
    %v1632 = vmul.f32 %v108, %v1627
    %v1633 = vtanh.pop %v1631
    %v1634 = vtanh.pop %v1632
    %v1635 = vmul.f32 %v107, %v1633
    %v1636 = vmul.f32 %v108, %v1634
    %v1637 = vadd.f32 %v1635, %v109
    %v1638 = vadd.f32 %v1636, %v110
    %1640 = vrot.lane.b32.xlu0 %v1638, 32
    %v1641 = vpop.permute.xlu0 %1640
    %v1643 = vsel %vm392, %v1637, %v1641
    %1645 = vrot.lane.b32.xlu0 %v1637, 96
    %v1646 = vpop.permute.xlu0 %1645
    %v1648 = vsel %vm392, %v1646, %v1638
    %1649 = vrot.lane.b32.xlu0 %v1637, 64
    %v1650 = vpop.permute.xlu0 %1649
    %1652 = vrot.lane.b32.xlu0 %v1638, 96
    %v1653 = vpop.permute.xlu0 %1652
    %v1655 = vsel %vm392, %v1650, %v1653
    %1656 = vrot.lane.b32.xlu0 %v1637, 32
    %v1657 = vpop.permute.xlu0 %1656
    %1659 = vrot.lane.b32.xlu0 %v1638, 64
    %v1660 = vpop.permute.xlu0 %1659
    %v1662 = vsel %vm392, %v1657, %v1660
    %v1663 = vmul.f32 %v1648, %v1576
    %v1664 = vmul.f32 %v1643, %v1655
    %v1665 = vadd.f32 %v1663, %v1664
    %v1666 = vtanh.pop %v1665
    %v1667 = vmul.f32 %v1662, %v1666
    %v1668 = vld [vmem:[%s704] sm:$0xff]
    %vm1669 = vcmp.ne.f32.partialorder %v1668, 0.0
    %v1670 = vsel %vm1669, %v1667, %v1575
    %v1671 = vsel %vm1669, %v1665, %v1576
    %v1672 = vsel %vm1669, %v1667, 0.0
    %s1673 = scalar_lea.vmem [#allocation5], 24
    %1674 = vst.msk [vmem:[%s1673] sm:$0xff] %vm392, %v1672
    %s1675 = scalar_lea.vmem [#allocation5], 32
    %1676 = vst.msk [vmem:[%s1675] sm:$0xff] %vm424, %v1672
    %v1677 = vpack.c.bf16 %v1670, %v1670
    %v1678 = vld [vmem:[%s1585] sm:$0xff]
    %v1679 = vld [vmem:[%s1583 + $0x8] sm:$0xff]
    %v1681 = vsel %vm183, %v1677, 0
    %1683 = vmatprep.subr.bf16.mxu0 %v1292
    %1684 = vmatpush1.bf16.msra.mxu0 %v1291
    %1685 = vmatprep.subr.bf16.mxu0 %v1294
    %1686 = vmatpush1.bf16.msra.mxu0 %v1293
    %1687 = vmatprep.subr.bf16.mxu0 %v1296
    %1688 = vmatpush1.bf16.msra.mxu0 %v1295
    %1689 = vmatprep.subr.bf16.mxu0 %v1298
    %1690 = vmatpush1.bf16.msra.mxu0 %v1297
    %1691 = vmatprep.subr.bf16.mxu0 0
    %1692 = vmatpush1.bf16.msra.mxu0 0
    %1693 = vmatprep.subr.bf16.mxu0 0
    %1694 = vmatpush1.bf16.msra.mxu0 0
    %1695 = vmatprep.subr.bf16.mxu0 0
    %1696 = vmatpush1.bf16.msra.mxu0 0
    %1697 = vmatprep.subr.bf16.mxu0 0
    %1698 = vmatpush1.bf16.msra.mxu0 0
    %1699 = vmatprep.subr.bf16.mxu0 0
    %1700 = vmatpush1.bf16.msra.mxu0 0
    %1701 = vmatprep.subr.bf16.mxu0 0
    %1702 = vmatpush1.bf16.msra.mxu0 0
    %1703 = vmatprep.subr.bf16.mxu0 0
    %1704 = vmatpush1.bf16.msra.mxu0 0
    %1705 = vmatprep.subr.bf16.mxu0 0
    %1706 = vmatpush1.bf16.msra.mxu0 0
    %1707 = vmatprep.subr.bf16.mxu0 0
    %1708 = vmatpush1.bf16.msra.mxu0 0
    %1709 = vmatprep.subr.bf16.mxu0 0
    %1710 = vmatpush1.bf16.msra.mxu0 0
    %1711 = vmatprep.subr.bf16.mxu0 0
    %1712 = vmatpush1.bf16.msra.mxu0 0
    %1713 = vmatprep.subr.bf16.mxu0 0
    %1714 = vmatpush1.bf16.msra.mxu0 0
    %1715 = vmatprep.mubr.bf16.mxu0 0
    %1716 = vmatmul.mubr.bf16.gmra.mrb[0].mxu0 %v1681
    %v1717 = vpop.f32.mrb[0].mxu0
    %v1718 = vadd.f32 %v1678, %v1717
    %v1719 = vpop.f32.mrb[0].mxu0
    %v1720 = vadd.f32 %v1679, %v1719
    %v1721 = vpop.f32.mrb[0].mxu0
    %v1722 = vpop.f32.mrb[0].mxu0
    %1723 = vdwg.mxu0
    %v1724 = vmul.f32 %v107, %v1718
    %v1725 = vmul.f32 %v108, %v1720
    %v1726 = vtanh.pop %v1724
    %v1727 = vtanh.pop %v1725
    %v1728 = vmul.f32 %v107, %v1726
    %v1729 = vmul.f32 %v108, %v1727
    %v1730 = vadd.f32 %v1728, %v109
    %v1731 = vadd.f32 %v1729, %v110
    %1733 = vrot.lane.b32.xlu0 %v1731, 32
    %v1734 = vpop.permute.xlu0 %1733
    %v1736 = vsel %vm392, %v1730, %v1734
    %1738 = vrot.lane.b32.xlu0 %v1730, 96
    %v1739 = vpop.permute.xlu0 %1738
    %v1741 = vsel %vm392, %v1739, %v1731
    %1742 = vrot.lane.b32.xlu0 %v1730, 64
    %v1743 = vpop.permute.xlu0 %1742
    %1745 = vrot.lane.b32.xlu0 %v1731, 96
    %v1746 = vpop.permute.xlu0 %1745
    %v1748 = vsel %vm392, %v1743, %v1746
    %1749 = vrot.lane.b32.xlu0 %v1730, 32
    %v1750 = vpop.permute.xlu0 %1749
    %1752 = vrot.lane.b32.xlu0 %v1731, 64
    %v1753 = vpop.permute.xlu0 %1752
    %v1755 = vsel %vm392, %v1750, %v1753
    %v1756 = vmul.f32 %v1741, %v1671
    %v1757 = vmul.f32 %v1736, %v1748
    %v1758 = vadd.f32 %v1756, %v1757
    %v1759 = vtanh.pop %v1758
    %v1760 = vmul.f32 %v1755, %v1759
    %v1761 = vld [vmem:[%s798] sm:$0xff]
    %vm1762 = vcmp.ne.f32.partialorder %v1761, 0.0
    %v1763 = vsel %vm1762, %v1760, %v1670
    %v1764 = vsel %vm1762, %v1758, %v1671
    %v1765 = vsel %vm1762, %v1760, 0.0
    %1766 = vst.msk [vmem:[%s1675] sm:$0xff] %vm392, %v1765
    %1767 = vst.msk [vmem:[%s1673] sm:$0xff] %vm424, %v1765
    %v1768 = vpack.c.bf16 %v1763, %v1763
    %v1769 = vld [vmem:[%s1490] sm:$0xff]
    %v1770 = vld [vmem:[%s1488 + $0x8] sm:$0xff]
    %v1772 = vsel %vm183, %v1768, 0
    %1774 = vmatprep.subr.bf16.mxu0 %v1292
    %1775 = vmatpush1.bf16.msra.mxu0 %v1291
    %1776 = vmatprep.subr.bf16.mxu0 %v1294
    %1777 = vmatpush1.bf16.msra.mxu0 %v1293
    %1778 = vmatprep.subr.bf16.mxu0 %v1296
    %1779 = vmatpush1.bf16.msra.mxu0 %v1295
    %1780 = vmatprep.subr.bf16.mxu0 %v1298
    %1781 = vmatpush1.bf16.msra.mxu0 %v1297
    %1782 = vmatprep.subr.bf16.mxu0 0
    %1783 = vmatpush1.bf16.msra.mxu0 0
    %1784 = vmatprep.subr.bf16.mxu0 0
    %1785 = vmatpush1.bf16.msra.mxu0 0
    %1786 = vmatprep.subr.bf16.mxu0 0
    %1787 = vmatpush1.bf16.msra.mxu0 0
    %1788 = vmatprep.subr.bf16.mxu0 0
    %1789 = vmatpush1.bf16.msra.mxu0 0
    %1790 = vmatprep.subr.bf16.mxu0 0
    %1791 = vmatpush1.bf16.msra.mxu0 0
    %1792 = vmatprep.subr.bf16.mxu0 0
    %1793 = vmatpush1.bf16.msra.mxu0 0
    %1794 = vmatprep.subr.bf16.mxu0 0
    %1795 = vmatpush1.bf16.msra.mxu0 0
    %1796 = vmatprep.subr.bf16.mxu0 0
    %1797 = vmatpush1.bf16.msra.mxu0 0
    %1798 = vmatprep.subr.bf16.mxu0 0
    %1799 = vmatpush1.bf16.msra.mxu0 0
    %1800 = vmatprep.subr.bf16.mxu0 0
    %1801 = vmatpush1.bf16.msra.mxu0 0
    %1802 = vmatprep.subr.bf16.mxu0 0
    %1803 = vmatpush1.bf16.msra.mxu0 0
    %1804 = vmatprep.subr.bf16.mxu0 0
    %1805 = vmatpush1.bf16.msra.mxu0 0
    %1806 = vmatprep.mubr.bf16.mxu0 0
    %1807 = vmatmul.mubr.bf16.gmra.mrb[0].mxu0 %v1772
    %v1808 = vpop.f32.mrb[0].mxu0
    %v1809 = vadd.f32 %v1769, %v1808
    %v1810 = vpop.f32.mrb[0].mxu0
    %v1811 = vadd.f32 %v1770, %v1810
    %v1812 = vpop.f32.mrb[0].mxu0
    %v1813 = vpop.f32.mrb[0].mxu0
    %1814 = vdwg.mxu0
    %v1815 = vmul.f32 %v107, %v1809
    %v1816 = vmul.f32 %v108, %v1811
    %v1817 = vtanh.pop %v1815
    %v1818 = vtanh.pop %v1816
    %v1819 = vmul.f32 %v107, %v1817
    %v1820 = vmul.f32 %v108, %v1818
    %v1821 = vadd.f32 %v1819, %v109
    %v1822 = vadd.f32 %v1820, %v110
    %1824 = vrot.lane.b32.xlu0 %v1822, 32
    %v1825 = vpop.permute.xlu0 %1824
    %v1827 = vsel %vm392, %v1821, %v1825
    %1829 = vrot.lane.b32.xlu0 %v1821, 96
    %v1830 = vpop.permute.xlu0 %1829
    %v1832 = vsel %vm392, %v1830, %v1822
    %1833 = vrot.lane.b32.xlu0 %v1821, 64
    %v1834 = vpop.permute.xlu0 %1833
    %1836 = vrot.lane.b32.xlu0 %v1822, 96
    %v1837 = vpop.permute.xlu0 %1836
    %v1839 = vsel %vm392, %v1834, %v1837
    %1840 = vrot.lane.b32.xlu0 %v1821, 32
    %v1841 = vpop.permute.xlu0 %1840
    %1843 = vrot.lane.b32.xlu0 %v1822, 64
    %v1844 = vpop.permute.xlu0 %1843
    %v1846 = vsel %vm392, %v1841, %v1844
    %v1847 = vmul.f32 %v1832, %v1764
    %v1848 = vmul.f32 %v1827, %v1839
    %v1849 = vadd.f32 %v1847, %v1848
    %v1850 = vtanh.pop %v1849
    %v1851 = vmul.f32 %v1846, %v1850
    %v1852 = vld [vmem:[%s890] sm:$0xff]
    %vm1853 = vcmp.ne.f32.partialorder %v1852, 0.0
    %v1854 = vsel %vm1853, %v1851, %v1763
    %v1855 = vsel %vm1853, %v1849, %v1764
    %v1856 = vsel %vm1853, %v1851, 0.0
    %1857 = vst.msk [vmem:[%s1580] sm:$0xff] %vm392, %v1856
    %1858 = vst.msk [vmem:[%s1578] sm:$0xff] %vm424, %v1856
    %v1859 = vpack.c.bf16 %v1854, %v1854
    %v1860 = vld [vmem:[%s1395] sm:$0xff]
    %v1861 = vld [vmem:[%s1393 + $0x8] sm:$0xff]
    %v1863 = vsel %vm183, %v1859, 0
    %1865 = vmatprep.subr.bf16.mxu0 %v1292
    %1866 = vmatpush1.bf16.msra.mxu0 %v1291
    %1867 = vmatprep.subr.bf16.mxu0 %v1294
    %1868 = vmatpush1.bf16.msra.mxu0 %v1293
    %1869 = vmatprep.subr.bf16.mxu0 %v1296
    %1870 = vmatpush1.bf16.msra.mxu0 %v1295
    %1871 = vmatprep.subr.bf16.mxu0 %v1298
    %1872 = vmatpush1.bf16.msra.mxu0 %v1297
    %1873 = vmatprep.subr.bf16.mxu0 0
    %1874 = vmatpush1.bf16.msra.mxu0 0
    %1875 = vmatprep.subr.bf16.mxu0 0
    %1876 = vmatpush1.bf16.msra.mxu0 0
    %1877 = vmatprep.subr.bf16.mxu0 0
    %1878 = vmatpush1.bf16.msra.mxu0 0
    %1879 = vmatprep.subr.bf16.mxu0 0
    %1880 = vmatpush1.bf16.msra.mxu0 0
    %1881 = vmatprep.subr.bf16.mxu0 0
    %1882 = vmatpush1.bf16.msra.mxu0 0
    %1883 = vmatprep.subr.bf16.mxu0 0
    %1884 = vmatpush1.bf16.msra.mxu0 0
    %1885 = vmatprep.subr.bf16.mxu0 0
    %1886 = vmatpush1.bf16.msra.mxu0 0
    %1887 = vmatprep.subr.bf16.mxu0 0
    %1888 = vmatpush1.bf16.msra.mxu0 0
    %1889 = vmatprep.subr.bf16.mxu0 0
    %1890 = vmatpush1.bf16.msra.mxu0 0
    %1891 = vmatprep.subr.bf16.mxu0 0
    %1892 = vmatpush1.bf16.msra.mxu0 0
    %1893 = vmatprep.subr.bf16.mxu0 0
    %1894 = vmatpush1.bf16.msra.mxu0 0
    %1895 = vmatprep.subr.bf16.mxu0 0
    %1896 = vmatpush1.bf16.msra.mxu0 0
    %1897 = vmatprep.mubr.bf16.mxu0 0
    %1898 = vmatmul.mubr.bf16.gmra.mrb[0].mxu0 %v1863
    %v1899 = vpop.f32.mrb[0].mxu0
    %v1900 = vadd.f32 %v1860, %v1899
    %v1901 = vpop.f32.mrb[0].mxu0
    %v1902 = vadd.f32 %v1861, %v1901
    %v1903 = vpop.f32.mrb[0].mxu0
    %v1904 = vpop.f32.mrb[0].mxu0
    %1905 = vdwg.mxu0
    %v1906 = vmul.f32 %v107, %v1900
    %v1907 = vmul.f32 %v108, %v1902
    %v1908 = vtanh.pop %v1906
    %v1909 = vtanh.pop %v1907
    %v1910 = vmul.f32 %v107, %v1908
    %v1911 = vmul.f32 %v108, %v1909
    %v1912 = vadd.f32 %v1910, %v109
    %v1913 = vadd.f32 %v1911, %v110
    %1915 = vrot.lane.b32.xlu0 %v1913, 32
    %v1916 = vpop.permute.xlu0 %1915
    %v1918 = vsel %vm392, %v1912, %v1916
    %1920 = vrot.lane.b32.xlu0 %v1912, 96
    %v1921 = vpop.permute.xlu0 %1920
    %v1923 = vsel %vm392, %v1921, %v1913
    %1924 = vrot.lane.b32.xlu0 %v1912, 64
    %v1925 = vpop.permute.xlu0 %1924
    %1927 = vrot.lane.b32.xlu0 %v1913, 96
    %v1928 = vpop.permute.xlu0 %1927
    %v1930 = vsel %vm392, %v1925, %v1928
    %1931 = vrot.lane.b32.xlu0 %v1912, 32
    %v1932 = vpop.permute.xlu0 %1931
    %1934 = vrot.lane.b32.xlu0 %v1913, 64
    %v1935 = vpop.permute.xlu0 %1934
    %v1937 = vsel %vm392, %v1932, %v1935
    %v1938 = vmul.f32 %v1923, %v1855
    %v1939 = vmul.f32 %v1918, %v1930
    %v1940 = vadd.f32 %v1938, %v1939
    %v1941 = vtanh.pop %v1940
    %v1942 = vmul.f32 %v1937, %v1941
    %v1943 = vld [vmem:[%s982] sm:$0xff]
    %vm1944 = vcmp.ne.f32.partialorder %v1943, 0.0
    %v1945 = vsel %vm1944, %v1942, %v1854
    %v1946 = vsel %vm1944, %v1940, %v1855
    %v1947 = vsel %vm1944, %v1942, 0.0
    %1948 = vst.msk [vmem:[%s1485] sm:$0xff] %vm392, %v1947
    %1949 = vst.msk [vmem:[%s1483] sm:$0xff] %vm424, %v1947
    %v1950 = vpack.c.bf16 %v1945, %v1945
    %v1951 = vld [vmem:[%s1265] sm:$0xff]
    %v1952 = vld [vmem:[#allocation3 + $0x8] sm:$0xff]
    %v1954 = vsel %vm183, %v1950, 0
    %1956 = vmatprep.subr.bf16.mxu0 %v1292
    %1957 = vmatpush1.bf16.msra.mxu0 %v1291
    %1958 = vmatprep.subr.bf16.mxu0 %v1294
    %1959 = vmatpush1.bf16.msra.mxu0 %v1293
    %1960 = vmatprep.subr.bf16.mxu0 %v1296
    %1961 = vmatpush1.bf16.msra.mxu0 %v1295
    %1962 = vmatprep.subr.bf16.mxu0 %v1298
    %1963 = vmatpush1.bf16.msra.mxu0 %v1297
    %1964 = vmatprep.subr.bf16.mxu0 0
    %1965 = vmatpush1.bf16.msra.mxu0 0
    %1966 = vmatprep.subr.bf16.mxu0 0
    %1967 = vmatpush1.bf16.msra.mxu0 0
    %1968 = vmatprep.subr.bf16.mxu0 0
    %1969 = vmatpush1.bf16.msra.mxu0 0
    %1970 = vmatprep.subr.bf16.mxu0 0
    %1971 = vmatpush1.bf16.msra.mxu0 0
    %1972 = vmatprep.subr.bf16.mxu0 0
    %1973 = vmatpush1.bf16.msra.mxu0 0
    %1974 = vmatprep.subr.bf16.mxu0 0
    %1975 = vmatpush1.bf16.msra.mxu0 0
    %1976 = vmatprep.subr.bf16.mxu0 0
    %1977 = vmatpush1.bf16.msra.mxu0 0
    %1978 = vmatprep.subr.bf16.mxu0 0
    %1979 = vmatpush1.bf16.msra.mxu0 0
    %1980 = vmatprep.subr.bf16.mxu0 0
    %1981 = vmatpush1.bf16.msra.mxu0 0
    %1982 = vmatprep.subr.bf16.mxu0 0
    %1983 = vmatpush1.bf16.msra.mxu0 0
    %1984 = vmatprep.subr.bf16.mxu0 0
    %1985 = vmatpush1.bf16.msra.mxu0 0
    %1986 = vmatprep.subr.bf16.mxu0 0
    %1987 = vmatpush1.bf16.msra.mxu0 0
    %1988 = vmatprep.mubr.bf16.mxu0 0
    %1989 = vmatmul.mubr.bf16.gmra.mrb[0].mxu0 %v1954
    %v1990 = vpop.f32.mrb[0].mxu0
    %v1991 = vadd.f32 %v1951, %v1990
    %v1992 = vpop.f32.mrb[0].mxu0
    %v1993 = vadd.f32 %v1952, %v1992
    %v1994 = vpop.f32.mrb[0].mxu0
    %v1995 = vpop.f32.mrb[0].mxu0
    %1996 = vdwg.mxu0
    %v1997 = vmul.f32 %v107, %v1991
    %v1998 = vmul.f32 %v108, %v1993
    %v1999 = vtanh.pop %v1997
    %v2000 = vtanh.pop %v1998
    %v2001 = vmul.f32 %v107, %v1999
    %v2002 = vmul.f32 %v108, %v2000
    %v2003 = vadd.f32 %v2001, %v109
    %v2004 = vadd.f32 %v2002, %v110
    %2006 = vrot.lane.b32.xlu0 %v2004, 32
    %v2007 = vpop.permute.xlu0 %2006
    %v2009 = vsel %vm392, %v2003, %v2007
    %2011 = vrot.lane.b32.xlu0 %v2003, 96
    %v2012 = vpop.permute.xlu0 %2011
    %v2014 = vsel %vm392, %v2012, %v2004
    %2015 = vrot.lane.b32.xlu0 %v2003, 64
    %v2016 = vpop.permute.xlu0 %2015
    %2018 = vrot.lane.b32.xlu0 %v2004, 96
    %v2019 = vpop.permute.xlu0 %2018
    %v2021 = vsel %vm392, %v2016, %v2019
    %2022 = vrot.lane.b32.xlu0 %v2003, 32
    %v2023 = vpop.permute.xlu0 %2022
    %2025 = vrot.lane.b32.xlu0 %v2004, 64
    %v2026 = vpop.permute.xlu0 %2025
    %v2028 = vsel %vm392, %v2023, %v2026
    %v2029 = vmul.f32 %v2014, %v1946
    %v2030 = vmul.f32 %v2009, %v2021
    %v2031 = vadd.f32 %v2029, %v2030
    %v2032 = vtanh.pop %v2031
    %v2033 = vmul.f32 %v2028, %v2032
    %v2034 = vld [vmem:[%s1074] sm:$0xff]
    %vm2035 = vcmp.ne.f32.partialorder %v2034, 0.0
    %v2036 = vsel %vm2035, %v2033, 0.0
    %2037 = vst.msk [vmem:[%s1390] sm:$0xff] %vm392, %v2036
    %2038 = vst.msk [vmem:[#allocation5] sm:$0xff] %vm424, %v2036
    %v2039 = vld [vmem:[%s1390] sm:$0xff]
    %v2040 = vmax.f32 %v2039, 0.0
    %v2041 = vld [vmem:[%s5] sm:$0xff]
    %v2042 = vld [vmem:[%s5 + $0x8] sm:$0xff]
    %v2043 = vld [vmem:[%s5 + $0x10] sm:$0xff]
    %v2044 = vld [vmem:[%s5 + $0x18] sm:$0xff]
    %v2045 = vld [vmem:[%s5 + $0x20] sm:$0xff]
    %v2046 = vld [vmem:[%s5 + $0x28] sm:$0xff]
    %v2047 = vld [vmem:[%s5 + $0x30] sm:$0xff]
    %v2048 = vld [vmem:[%s5 + $0x38] sm:$0xff]
    %v2049 = vld [vmem:[%s6] sm:$0x1]
    %v2051 = vlaneseq
    %v2052 = vshrl.u32 %v2051, 7
    %v2053 = vsub.s32 0, %v2052
    %v2054 = vrot.slane %v2049, %v2053
    %v2057 = vsel %vm183, %v2040, 0
    %2059 = vmatprep.subr.mxu0 0.0
    %2060 = vmatpush1.msra.mxu0 %v2041
    %2061 = vmatprep.subr.mxu0 0.0
    %2062 = vmatpush1.msra.mxu0 %v2042
    %2063 = vmatprep.subr.mxu0 0.0
    %2064 = vmatpush1.msra.mxu0 %v2043
    %2065 = vmatprep.subr.mxu0 0.0
    %2066 = vmatpush1.msra.mxu0 %v2044
    %2067 = vmatprep.subr.mxu0 0.0
    %2068 = vmatpush1.msra.mxu0 %v2045
    %2069 = vmatprep.subr.mxu0 0.0
    %2070 = vmatpush1.msra.mxu0 %v2046
    %2071 = vmatprep.subr.mxu0 0.0
    %2072 = vmatpush1.msra.mxu0 %v2047
    %2073 = vmatprep.subr.mxu0 0.0
    %2074 = vmatpush1.msra.mxu0 %v2048
    %2075 = vmatprep.subr.mxu0 0.0
    %2076 = vmatpush1.msra.mxu0 0.0
    %2077 = vmatprep.subr.mxu0 0.0
    %2078 = vmatpush1.msra.mxu0 0.0
    %2079 = vmatprep.subr.mxu0 0.0
    %2080 = vmatpush1.msra.mxu0 0.0
    %2081 = vmatprep.subr.mxu0 0.0
    %2082 = vmatpush1.msra.mxu0 0.0
    %2083 = vmatprep.subr.mxu0 0.0
    %2084 = vmatpush1.msra.mxu0 0.0
    %2085 = vmatprep.subr.mxu0 0.0
    %2086 = vmatpush1.msra.mxu0 0.0
    %2087 = vmatprep.subr.mxu0 0.0
    %2088 = vmatpush1.msra.mxu0 0.0
    %2089 = vmatprep.subr.mxu0 0.0
    %2090 = vmatpush1.msra.mxu0 0.0
    %2091 = vmatprep.subr.mxu0 0.0
    %2092 = vmatpush1.msra.mxu0 0.0
    %2093 = vmatprep.subr.mxu0 0.0
    %2094 = vmatpush1.msra.mxu0 0.0
    %2095 = vmatprep.subr.mxu0 0.0
    %2096 = vmatpush1.msra.mxu0 0.0
    %2097 = vmatprep.subr.mxu0 0.0
    %2098 = vmatpush1.msra.mxu0 0.0
    %2099 = vmatprep.subr.mxu0 0.0
    %2100 = vmatpush1.msra.mxu0 0.0
    %2101 = vmatprep.subr.mxu0 0.0
    %2102 = vmatpush1.msra.mxu0 0.0
    %2103 = vmatprep.subr.mxu0 0.0
    %2104 = vmatpush1.msra.mxu0 0.0
    %2105 = vmatprep.subr.mxu0 0.0
    %2106 = vmatpush1.msra.mxu0 0.0
    %2107 = vmatprep.subr.mxu0 0.0
    %2108 = vmatpush1.msra.mxu0 0.0
    %2109 = vmatprep.subr.mxu0 0.0
    %2110 = vmatpush1.msra.mxu0 0.0
    %2111 = vmatprep.subr.mxu0 0.0
    %2112 = vmatpush1.msra.mxu0 0.0
    %2113 = vmatprep.subr.mxu0 0.0
    %2114 = vmatpush1.msra.mxu0 0.0
    %2115 = vmatprep.subr.mxu0 0.0
    %2116 = vmatpush1.msra.mxu0 0.0
    %2117 = vmatprep.subr.mxu0 0.0
    %2118 = vmatpush1.msra.mxu0 0.0
    %2119 = vmatprep.subr.mxu0 0.0
    %2120 = vmatpush1.msra.mxu0 0.0
    %2121 = vmatprep.subr.mxu0 0.0
    %2122 = vmatpush1.msra.mxu0 0.0
    %2123 = vmatprep.mubr.f32.mxu0 0.0
    %2124 = vmatmul.mubr.f32.gmra.mrb[0].mxu0 %v2057
    %v2125 = vpop.f32.mrb[0].mxu0
    %v2126 = vadd.f32 %v2054, %v2125
    %v2127 = vpop.f32.mrb[0].mxu0
    %2128 = vdwg.mxu0
    %v2129 = vld [vmem:[%s7] sm:$0xff]
    %v2130 = vld [vmem:[%s7 + $0x8] sm:$0xff]
    %v2131 = vld [vmem:[%s7 + $0x10] sm:$0xff]
    %v2132 = vld [vmem:[%s7 + $0x18] sm:$0xff]
    %v2133 = vld [vmem:[%s8] sm:$0x1]
    %v2135 = vlaneseq
    %v2136 = vshrl.u32 %v2135, 7
    %v2137 = vsub.s32 0, %v2136
    %v2138 = vrot.slane %v2133, %v2137
    %v2141 = vsel %vm392, %v2126, 0
    %2143 = vmatprep.subr.mxu0 0.0
    %2144 = vmatpush1.msra.mxu0 %v2129
    %2145 = vmatprep.subr.mxu0 0.0
    %2146 = vmatpush1.msra.mxu0 %v2130
    %2147 = vmatprep.subr.mxu0 0.0
    %2148 = vmatpush1.msra.mxu0 %v2131
    %2149 = vmatprep.subr.mxu0 0.0
    %2150 = vmatpush1.msra.mxu0 %v2132
    %2151 = vmatprep.subr.mxu0 0.0
    %2152 = vmatpush1.msra.mxu0 0.0
    %2153 = vmatprep.subr.mxu0 0.0
    %2154 = vmatpush1.msra.mxu0 0.0
    %2155 = vmatprep.subr.mxu0 0.0
    %2156 = vmatpush1.msra.mxu0 0.0
    %2157 = vmatprep.subr.mxu0 0.0
    %2158 = vmatpush1.msra.mxu0 0.0
    %2159 = vmatprep.subr.mxu0 0.0
    %2160 = vmatpush1.msra.mxu0 0.0
    %2161 = vmatprep.subr.mxu0 0.0
    %2162 = vmatpush1.msra.mxu0 0.0
    %2163 = vmatprep.subr.mxu0 0.0
    %2164 = vmatpush1.msra.mxu0 0.0
    %2165 = vmatprep.subr.mxu0 0.0
    %2166 = vmatpush1.msra.mxu0 0.0
    %2167 = vmatprep.subr.mxu0 0.0
    %2168 = vmatpush1.msra.mxu0 0.0
    %2169 = vmatprep.subr.mxu0 0.0
    %2170 = vmatpush1.msra.mxu0 0.0
    %2171 = vmatprep.subr.mxu0 0.0
    %2172 = vmatpush1.msra.mxu0 0.0
    %2173 = vmatprep.subr.mxu0 0.0
    %2174 = vmatpush1.msra.mxu0 0.0
    %2175 = vmatprep.subr.mxu0 0.0
    %2176 = vmatpush1.msra.mxu0 0.0
    %2177 = vmatprep.subr.mxu0 0.0
    %2178 = vmatpush1.msra.mxu0 0.0
    %2179 = vmatprep.subr.mxu0 0.0
    %2180 = vmatpush1.msra.mxu0 0.0
    %2181 = vmatprep.subr.mxu0 0.0
    %2182 = vmatpush1.msra.mxu0 0.0
    %2183 = vmatprep.subr.mxu0 0.0
    %2184 = vmatpush1.msra.mxu0 0.0
    %2185 = vmatprep.subr.mxu0 0.0
    %2186 = vmatpush1.msra.mxu0 0.0
    %2187 = vmatprep.subr.mxu0 0.0
    %2188 = vmatpush1.msra.mxu0 0.0
    %2189 = vmatprep.subr.mxu0 0.0
    %2190 = vmatpush1.msra.mxu0 0.0
    %2191 = vmatprep.subr.mxu0 0.0
    %2192 = vmatpush1.msra.mxu0 0.0
    %2193 = vmatprep.subr.mxu0 0.0
    %2194 = vmatpush1.msra.mxu0 0.0
    %2195 = vmatprep.subr.mxu0 0.0
    %2196 = vmatpush1.msra.mxu0 0.0
    %2197 = vmatprep.subr.mxu0 0.0
    %2198 = vmatpush1.msra.mxu0 0.0
    %2199 = vmatprep.subr.mxu0 0.0
    %2200 = vmatpush1.msra.mxu0 0.0
    %2201 = vmatprep.subr.mxu0 0.0
    %2202 = vmatpush1.msra.mxu0 0.0
    %2203 = vmatprep.subr.mxu0 0.0
    %2204 = vmatpush1.msra.mxu0 0.0
    %2205 = vmatprep.subr.mxu0 0.0
    %2206 = vmatpush1.msra.mxu0 0.0
    %2207 = vmatprep.mubr.f32.mxu0 0.0
    %2208 = vmatmul.mubr.f32.gmra.mrb[0].mxu0 %v2141
    %v2209 = vpop.f32.mrb[0].mxu0
    %v2210 = vadd.f32 %v2138, %v2209
    %v2211 = vpop.f32.mrb[0].mxu0
    %2212 = vdwg.mxu0
    %2213 = vst [vmem:[%s9] sm:$0xff] %v2210
    // Predicated region
    $region50: #{bilstm_forward.1} parent=1 // pred_check
      _
    $region51: #{bilstm_forward.1} parent=1 // pred_check_branch
      %2215 = sbr.rel (0) target = $region53
    $region52: #{bilstm_forward.1} parent=1 // pred_region
      _
    $region53: #{bilstm_forward.1} parent=1 // pred_fallthru
      _
    // Predicated region
    $region54: #{bilstm_forward.1} parent=1 // pred_check
      _
    $region55: #{bilstm_forward.1} parent=1 // pred_check_branch
      %2217 = sbr.rel (0) target = $region57
    $region56: #{bilstm_forward.1} parent=1 // pred_region
      _
    $region57: #{bilstm_forward.1} parent=1 // pred_fallthru
      _
    %2218 = vsyncpa [#allocation7], 1
    %2219 = vsyncpa [#allocation9], 1

</llo_original>
